<compile_context>
chip_gen: v7x
topology: tpu7x:2x2x1
jax: 0.10.0
libtpu: 0.0.40
codegen_flags: <defaults>
</compile_context>

<pallas_src>
import functools
import math

import jax
import jax.numpy as jnp
from jax import lax
from jax.experimental import pallas as pl
from jax.experimental.pallas import tpu as pltpu


# ----------------------------------------------------------------------------
# Pallas kernel
# ----------------------------------------------------------------------------
def _gate_update(gates, c_prev, H):
    """PyTorch LSTM cell update from pre-activation gates (order i, f, g, o)."""
    sig = jax.nn.sigmoid(gates)          # full 4H-wide (128-lane) EUP pass
    tnh = jnp.tanh(gates)                # full 4H-wide (128-lane) EUP pass
    i_g = sig[:, 0 * H:1 * H]
    f_g = sig[:, 1 * H:2 * H]
    g_g = tnh[:, 2 * H:3 * H]
    o_g = sig[:, 3 * H:4 * H]
    c_new = f_g * c_prev + i_g * g_g
    h_new = o_g * jnp.tanh(c_new)
    return h_new, c_new


def _make_fused_bilstm_kernel(num_layers, S, B, H):
    """Build the fused kernel for a fixed (num_layers, S, B, H) configuration.

    Kernel ref layout (positional):
      x_ref                                   (S*B, H)
      per layer l (4 refs each):
        wih_cat_l : (Din, 8H)   [W_ih_fwd^T | W_ih_bwd^T],  Din = H or 2H
        b_cat_l   : (1, 8H)     [b_fwd | b_bwd], each b = b_ih + b_hh
        whh_f_l   : (H, 4H)     W_hh_fwd^T
        whh_b_l   : (H, 4H)     W_hh_bwd^T
      outputs: out_ref (S*B,H), hn_ref (2L*B,H), cn_ref (2L*B,H)
      scratch: xg_f (S*B,4H), xg_b (S*B,4H), f_buf (S*B,H), b_buf (S*B,H)
    """
    n_w = 4 * num_layers

    def kernel(*refs):
        x_ref = refs[0]
        w_refs = refs[1:1 + n_w]
        out_ref, hn_ref, cn_ref = refs[1 + n_w:1 + n_w + 3]
        xg_f, xg_b, f_buf, b_buf = refs[1 + n_w + 3:]

        for layer in range(num_layers):
            wih_cat_ref = w_refs[4 * layer + 0]
            b_cat_ref = w_refs[4 * layer + 1]
            whh_f = w_refs[4 * layer + 2][...]        # (H, 4H), loaded once
            whh_b = w_refs[4 * layer + 3][...]        # (H, 4H), loaded once

            # ------------------------------------------------------------
            # Hoisted input projection: one batched MXU matmul covering every
            # timestep and BOTH directions of this layer.
            # ------------------------------------------------------------
            b_cat = b_cat_ref[...]                    # (1, 8H)
            if layer == 0:
                x2d = x_ref[...]                      # (S*B, H)
            else:
                # Previous layer fwd/bwd outputs, lane-concatenated (S*B, 2H).
                x2d = jnp.concatenate([f_buf[...], b_buf[...]], axis=1)
            xg_both = (jnp.dot(x2d, wih_cat_ref[...],
                               preferred_element_type=jnp.float32)
                       + b_cat)                       # (S*B, 8H)

            xg_f[...] = xg_both[:, :4 * H]            # 128-aligned lane slice
            xg_b[...] = xg_both[:, 4 * H:]

            # ------------------------------------------------------------
            # Both recurrences in one statically-unrolled loop: forward
            # processes step t, backward processes step S-1-t (in-kernel
            # reversal).  The two chains are independent -> the scheduler
            # interleaves them.  All indices are Python ints -> static
            # slices, no dynamic-index arithmetic on the critical path.
            # ------------------------------------------------------------
            zeros = jnp.zeros((B, H), jnp.float32)
            h_f, c_f, h_b, c_b = zeros, zeros, zeros, zeros
            for t in range(S):
                rt = S - 1 - t
                g_fw = (xg_f[t * B:(t + 1) * B, :]
                        + jnp.dot(h_f, whh_f,
                                  preferred_element_type=jnp.float32))
                g_bw = (xg_b[rt * B:(rt + 1) * B, :]
                        + jnp.dot(h_b, whh_b,
                                  preferred_element_type=jnp.float32))

                h_f, c_f = _gate_update(g_fw, c_f, H)
                h_b, c_b = _gate_update(g_bw, c_b, H)

                f_buf[t * B:(t + 1) * B, :] = h_f
                b_buf[rt * B:(rt + 1) * B, :] = h_b

            hn_ref[(2 * layer + 0) * B:(2 * layer + 1) * B, :] = h_f
            hn_ref[(2 * layer + 1) * B:(2 * layer + 2) * B, :] = h_b
            cn_ref[(2 * layer + 0) * B:(2 * layer + 1) * B, :] = c_f
            cn_ref[(2 * layer + 1) * B:(2 * layer + 2) * B, :] = c_b

        # Skip connection: fwd_out + bwd_out + inputs, fused in-kernel.
        out_ref[...] = f_buf[...] + b_buf[...] + x_ref[...]

    return kernel


# ----------------------------------------------------------------------------
# Wrapper
# ----------------------------------------------------------------------------
def bidirectional_lstm_forward(inputs, params, num_layers, size):
    """Pallas implementation of BidrectionalLSTM.forward.

    inputs: (S, B, size) float32.
    Returns (output, hn, cn) with output (S, B, size),
    hn/cn (num_layers*2, B, size).
    """
    S, B, H = inputs.shape
    assert H == size

    # Weight prep (done once per call, outside the kernel): transpose for
    # right-multiplication, fuse biases, and pack both directions' W_ih / bias
    # side by side so the hoisted projection is a single wide matmul.
    weight_args = []
    for layer in range(num_layers):
        wih_f = params[f"w_ih_l{layer}"]                 # (4H, Din)
        wih_b = params[f"w_ih_l{layer}_reverse"]
        whh_f = params[f"w_hh_l{layer}"]                 # (4H, H)
        whh_b = params[f"w_hh_l{layer}_reverse"]
        b_f = params[f"b_ih_l{layer}"] + params[f"b_hh_l{layer}"]
        b_b = (params[f"b_ih_l{layer}_reverse"]
               + params[f"b_hh_l{layer}_reverse"])

        wih_cat = jnp.concatenate([wih_f.T, wih_b.T], axis=1)   # (Din, 8H)
        b_cat = jnp.concatenate([b_f, b_b]).reshape(1, 8 * H)   # (1, 8H)
        weight_args += [wih_cat, b_cat, whh_f.T, whh_b.T]

    vmem = pl.BlockSpec(memory_space=pltpu.MemorySpace.VMEM)
    kernel = _make_fused_bilstm_kernel(num_layers, S, B, H)

    # Flatten (S, B, H) -> (S*B, H): contiguity-preserving (free in XLA), and
    # gives the kernel lane-dense 2-D slabs with no in-kernel relayouts.
    x2d = inputs.reshape(S * B, H)

    out2d, hn2d, cn2d = pl.pallas_call(
        kernel,
        out_shape=(jax.ShapeDtypeStruct((S * B, H), jnp.float32),
                   jax.ShapeDtypeStruct((2 * num_layers * B, H), jnp.float32),
                   jax.ShapeDtypeStruct((2 * num_layers * B, H), jnp.float32)),
        in_specs=[vmem] * (1 + 4 * num_layers),
        out_specs=(vmem, vmem, vmem),
        scratch_shapes=[pltpu.VMEM((S * B, 4 * H), jnp.float32),   # xg_f
                        pltpu.VMEM((S * B, 4 * H), jnp.float32),   # xg_b
                        pltpu.VMEM((S * B, H), jnp.float32),       # f_buf
                        pltpu.VMEM((S * B, H), jnp.float32)],      # b_buf
    )(x2d, *weight_args)

    output = out2d.reshape(S, B, H)
    hn = hn2d.reshape(2 * num_layers, B, H)
    cn = cn2d.reshape(2 * num_layers, B, H)
    return output, hn, cn


# ----------------------------------------------------------------------------
# Deterministic parameter init (same shapes as nn.LSTM(size, size, layers,
# bidirectional=True)); PyTorch-style U(-1/sqrt(H), 1/sqrt(H)).
# ----------------------------------------------------------------------------
def init_lstm_params(key, size, num_layers):
    params = {}
    k = 1.0 / math.sqrt(size)
    for layer in range(num_layers):
        in_size = size if layer == 0 else 2 * size
        for suffix in ("", "_reverse"):
            for name, shape in (("w_ih", (4 * size, in_size)),
                                ("w_hh", (4 * size, size)),
                                ("b_ih", (4 * size,)),
                                ("b_hh", (4 * size,))):
                key, sub = jax.random.split(key)
                params[f"{name}_l{layer}{suffix}"] = jax.random.uniform(
                    sub, shape, jnp.float32, minval=-k, maxval=k)
    return params


# ----------------------------------------------------------------------------
# Pure-JAX reference (mirrors PyTorch nn.LSTM semantics) for validation.
# ----------------------------------------------------------------------------
def _ref_cell(x_t, h, c, w_ih, w_hh, b_ih, b_hh):
    gates = x_t @ w_ih.T + b_ih + h @ w_hh.T + b_hh
    i_g, f_g, g_g, o_g = jnp.split(gates, 4, axis=-1)
    i_g = jax.nn.sigmoid(i_g)
    f_g = jax.nn.sigmoid(f_g)
    g_g = jnp.tanh(g_g)
    o_g = jax.nn.sigmoid(o_g)
    c_new = f_g * c + i_g * g_g
    h_new = o_g * jnp.tanh(c_new)
    return h_new, c_new


def reference_forward(inputs, params, num_layers, size):
    S, B, _ = inputs.shape
    x = inputs
    hn_list, cn_list = [], []
    for layer in range(num_layers):
        outs = []
        for suffix in ("", "_reverse"):
            seq = x if suffix == "" else x[::-1]
            w_ih = params[f"w_ih_l{layer}{suffix}"]
            w_hh = params[f"w_hh_l{layer}{suffix}"]
            b_ih = params[f"b_ih_l{layer}{suffix}"]
            b_hh = params[f"b_hh_l{layer}{suffix}"]

            def step(carry, x_t):
                h, c = carry
                h, c = _ref_cell(x_t, h, c, w_ih, w_hh, b_ih, b_hh)
                return (h, c), h

            h0 = jnp.zeros((B, size), jnp.float32)
            c0 = jnp.zeros((B, size), jnp.float32)
            (h, c), out = lax.scan(step, (h0, c0), seq)
            if suffix == "_reverse":
                out = out[::-1]
            outs.append(out)
            hn_list.append(h)
            cn_list.append(c)
        x = jnp.concatenate(outs, axis=-1)
    output = x[:, :, :size] + x[:, :, size:] + inputs
    return output, jnp.stack(hn_list), jnp.stack(cn_list)


# ----------------------------------------------------------------------------
if __name__ == "__main__":
    SIZE = 32         # input == hidden size (required by the module)
    LAYERS = 2
    SEQ = 8
    BATCH = 1         # module hard-codes batch_size = 1

    key = jax.random.PRNGKey(0)
    key, pkey, xkey = jax.random.split(key, 3)

    params = init_lstm_params(pkey, SIZE, LAYERS)
    inputs = jax.random.normal(xkey, (SEQ, BATCH, SIZE), jnp.float32)

    fwd = jax.jit(functools.partial(bidirectional_lstm_forward,
                                    num_layers=LAYERS, size=SIZE))
    out, hn, cn = fwd(inputs, params)
    out, hn, cn = jax.block_until_ready((out, hn, cn))

    ref_out, ref_hn, ref_cn = reference_forward(inputs, params, LAYERS, SIZE)

    assert out.shape == (SEQ, BATCH, SIZE)
    assert hn.shape == (2 * LAYERS, BATCH, SIZE)
    assert cn.shape == (2 * LAYERS, BATCH, SIZE)
    assert jnp.allclose(out, ref_out, rtol=1e-5, atol=1e-5)
    assert jnp.allclose(hn, ref_hn, rtol=1e-5, atol=1e-5)
    assert jnp.allclose(cn, ref_cn, rtol=1e-5, atol=1e-5)

    print("KERNEL_OK")
</pallas_src>

<mosaic_0001>
module attributes {stable_mosaic.version = 11 : i64} {
  func.func @kernel(%arg0: memref<8x32xf32, #tpu.memory_space<vmem>>, %arg1: memref<32x256xf32, #tpu.memory_space<vmem>>, %arg2: memref<1x256xf32, #tpu.memory_space<vmem>>, %arg3: memref<32x128xf32, #tpu.memory_space<vmem>>, %arg4: memref<32x128xf32, #tpu.memory_space<vmem>>, %arg5: memref<64x256xf32, #tpu.memory_space<vmem>>, %arg6: memref<1x256xf32, #tpu.memory_space<vmem>>, %arg7: memref<32x128xf32, #tpu.memory_space<vmem>>, %arg8: memref<32x128xf32, #tpu.memory_space<vmem>>, %arg9: memref<8x32xf32, #tpu.memory_space<vmem>>, %arg10: memref<4x32xf32, #tpu.memory_space<vmem>>, %arg11: memref<4x32xf32, #tpu.memory_space<vmem>>, %arg12: memref<8x128xf32, #tpu.memory_space<vmem>>, %arg13: memref<8x128xf32, #tpu.memory_space<vmem>>, %arg14: memref<8x32xf32, #tpu.memory_space<vmem>>, %arg15: memref<8x32xf32, #tpu.memory_space<vmem>>) attributes {dimension_semantics = [], scalar_prefetch = 0 : i64, scratch_operands = 4 : i64, tpu.core_type = #tpu.core_type<tc>} {
    %c0 = arith.constant 0 : index
    %c0_0 = arith.constant 0 : index
    %0 = vector.load %arg3[%c0, %c0_0] : memref<32x128xf32, #tpu.memory_space<vmem>>, vector<32x128xf32>
    %c0_1 = arith.constant 0 : index
    %c0_2 = arith.constant 0 : index
    %1 = vector.load %arg4[%c0_1, %c0_2] : memref<32x128xf32, #tpu.memory_space<vmem>>, vector<32x128xf32>
    %c0_3 = arith.constant 0 : index
    %c0_4 = arith.constant 0 : index
    %2 = vector.load %arg2[%c0_3, %c0_4] : memref<1x256xf32, #tpu.memory_space<vmem>>, vector<1x256xf32>
    %c0_5 = arith.constant 0 : index
    %c0_6 = arith.constant 0 : index
    %3 = vector.load %arg0[%c0_5, %c0_6] : memref<8x32xf32, #tpu.memory_space<vmem>>, vector<8x32xf32>
    %c0_7 = arith.constant 0 : index
    %c0_8 = arith.constant 0 : index
    %4 = vector.load %arg1[%c0_7, %c0_8] : memref<32x256xf32, #tpu.memory_space<vmem>>, vector<32x256xf32>
    %cst = arith.constant dense<0.000000e+00> : vector<8x256xf32>
    %5 = tpu.matmul %3, %4, %cst {dimension_numbers = #tpu.dot_dimension_numbers<[1], [0], [0], [1], [0, 0, 1, 1], [], []>} : vector<8x32xf32>, vector<32x256xf32>, vector<8x256xf32> -> vector<8x256xf32>
    %6 = vector.broadcast %2 : vector<1x256xf32> to vector<8x256xf32>
    %7 = arith.addf %5, %6 : vector<8x256xf32>
    %8 = vector.extract_strided_slice %7 {offsets = [0, 0], sizes = [8, 128], strides = [1, 1]} : vector<8x256xf32> to vector<8x128xf32>
    %c0_9 = arith.constant 0 : index
    %c0_10 = arith.constant 0 : index
    %9 = vector.load %arg12[%c0_9, %c0_10] : memref<8x128xf32, #tpu.memory_space<vmem>>, vector<8x128xf32>
    tpu.vector_store %arg12[%c0_9, %c0_10], %8 {strides = array<i32>} : memref<8x128xf32, #tpu.memory_space<vmem>>, vector<8x128xf32>,
    %10 = vector.extract_strided_slice %7 {offsets = [0, 128], sizes = [8, 128], strides = [1, 1]} : vector<8x256xf32> to vector<8x128xf32>
    %c0_11 = arith.constant 0 : index
    %c0_12 = arith.constant 0 : index
    %11 = vector.load %arg13[%c0_11, %c0_12] : memref<8x128xf32, #tpu.memory_space<vmem>>, vector<8x128xf32>
    tpu.vector_store %arg13[%c0_11, %c0_12], %10 {strides = array<i32>} : memref<8x128xf32, #tpu.memory_space<vmem>>, vector<8x128xf32>,
    %cst_13 = arith.constant 0.000000e+00 : f32
    %12 = vector.broadcast %cst_13 : f32 to vector<1x32xf32>
    %c0_14 = arith.constant 0 : index
    %c0_15 = arith.constant 0 : index
    %13 = vector.load %arg12[%c0_14, %c0_15] : memref<8x128xf32, #tpu.memory_space<vmem>>, vector<1x128xf32>
    %cst_16 = arith.constant dense<0.000000e+00> : vector<1x128xf32>
    %14 = tpu.matmul %12, %0, %cst_16 {dimension_numbers = #tpu.dot_dimension_numbers<[1], [0], [0], [1], [0, 0, 1, 1], [], []>} : vector<1x32xf32>, vector<32x128xf32>, vector<1x128xf32> -> vector<1x128xf32>
    %15 = arith.addf %13, %14 : vector<1x128xf32>
    %c7 = arith.constant 7 : index
    %c0_17 = arith.constant 0 : index
    %16 = vector.load %arg13[%c7, %c0_17] : memref<8x128xf32, #tpu.memory_space<vmem>>, vector<1x128xf32>
    %cst_18 = arith.constant dense<0.000000e+00> : vector<1x128xf32>
    %17 = tpu.matmul %12, %1, %cst_18 {dimension_numbers = #tpu.dot_dimension_numbers<[1], [0], [0], [1], [0, 0, 1, 1], [], []>} : vector<1x32xf32>, vector<32x128xf32>, vector<1x128xf32> -> vector<1x128xf32>
    %18 = arith.addf %16, %17 : vector<1x128xf32>
    %19 = arith.negf %15 : vector<1x128xf32>
    %20 = math.exp %19 : vector<1x128xf32>
    %cst_19 = arith.constant 1.000000e+00 : f32
    %21 = vector.broadcast %cst_19 : f32 to vector<1x128xf32>
    %22 = arith.addf %21, %20 : vector<1x128xf32>
    %23 = arith.divf %21, %22 : vector<1x128xf32>
    %24 = math.tanh %15 : vector<1x128xf32>
    %25 = vector.extract_strided_slice %23 {offsets = [0, 0], sizes = [1, 32], strides = [1, 1]} : vector<1x128xf32> to vector<1x32xf32>
    %26 = vector.extract_strided_slice %23 {offsets = [0, 32], sizes = [1, 32], strides = [1, 1]} : vector<1x128xf32> to vector<1x32xf32>
    %27 = vector.extract_strided_slice %24 {offsets = [0, 64], sizes = [1, 32], strides = [1, 1]} : vector<1x128xf32> to vector<1x32xf32>
    %28 = vector.extract_strided_slice %23 {offsets = [0, 96], sizes = [1, 32], strides = [1, 1]} : vector<1x128xf32> to vector<1x32xf32>
    %29 = arith.mulf %26, %12 : vector<1x32xf32>
    %30 = arith.mulf %25, %27 : vector<1x32xf32>
    %31 = arith.addf %29, %30 : vector<1x32xf32>
    %32 = math.tanh %31 : vector<1x32xf32>
    %33 = arith.mulf %28, %32 : vector<1x32xf32>
    %34 = arith.negf %18 : vector<1x128xf32>
    %35 = math.exp %34 : vector<1x128xf32>
    %cst_20 = arith.constant 1.000000e+00 : f32
    %36 = vector.broadcast %cst_20 : f32 to vector<1x128xf32>
    %37 = arith.addf %36, %35 : vector<1x128xf32>
    %38 = arith.divf %36, %37 : vector<1x128xf32>
    %39 = math.tanh %18 : vector<1x128xf32>
    %40 = vector.extract_strided_slice %38 {offsets = [0, 0], sizes = [1, 32], strides = [1, 1]} : vector<1x128xf32> to vector<1x32xf32>
    %41 = vector.extract_strided_slice %38 {offsets = [0, 32], sizes = [1, 32], strides = [1, 1]} : vector<1x128xf32> to vector<1x32xf32>
    %42 = vector.extract_strided_slice %39 {offsets = [0, 64], sizes = [1, 32], strides = [1, 1]} : vector<1x128xf32> to vector<1x32xf32>
    %43 = vector.extract_strided_slice %38 {offsets = [0, 96], sizes = [1, 32], strides = [1, 1]} : vector<1x128xf32> to vector<1x32xf32>
    %44 = arith.mulf %41, %12 : vector<1x32xf32>
    %45 = arith.mulf %40, %42 : vector<1x32xf32>
    %46 = arith.addf %44, %45 : vector<1x32xf32>
    %47 = math.tanh %46 : vector<1x32xf32>
    %48 = arith.mulf %43, %47 : vector<1x32xf32>
    %c0_21 = arith.constant 0 : index
    %c0_22 = arith.constant 0 : index
    %49 = vector.load %arg14[%c0_21, %c0_22] : memref<8x32xf32, #tpu.memory_space<vmem>>, vector<1x32xf32>
    tpu.vector_store %arg14[%c0_21, %c0_22], %33 {strides = array<i32>} : memref<8x32xf32, #tpu.memory_space<vmem>>, vector<1x32xf32>,
    %c7_23 = arith.constant 7 : index
    %c0_24 = arith.constant 0 : index
    %50 = vector.load %arg15[%c7_23, %c0_24] : memref<8x32xf32, #tpu.memory_space<vmem>>, vector<1x32xf32>
    tpu.vector_store %arg15[%c7_23, %c0_24], %48 {strides = array<i32>} : memref<8x32xf32, #tpu.memory_space<vmem>>, vector<1x32xf32>,
    %c1 = arith.constant 1 : index
    %c0_25 = arith.constant 0 : index
    %51 = vector.load %arg12[%c1, %c0_25] : memref<8x128xf32, #tpu.memory_space<vmem>>, vector<1x128xf32>
    %cst_26 = arith.constant dense<0.000000e+00> : vector<1x128xf32>
    %52 = tpu.matmul %33, %0, %cst_26 {dimension_numbers = #tpu.dot_dimension_numbers<[1], [0], [0], [1], [0, 0, 1, 1], [], []>} : vector<1x32xf32>, vector<32x128xf32>, vector<1x128xf32> -> vector<1x128xf32>
    %53 = arith.addf %51, %52 : vector<1x128xf32>
    %c6 = arith.constant 6 : index
    %c0_27 = arith.constant 0 : index
    %54 = vector.load %arg13[%c6, %c0_27] : memref<8x128xf32, #tpu.memory_space<vmem>>, vector<1x128xf32>
    %cst_28 = arith.constant dense<0.000000e+00> : vector<1x128xf32>
    %55 = tpu.matmul %48, %1, %cst_28 {dimension_numbers = #tpu.dot_dimension_numbers<[1], [0], [0], [1], [0, 0, 1, 1], [], []>} : vector<1x32xf32>, vector<32x128xf32>, vector<1x128xf32> -> vector<1x128xf32>
    %56 = arith.addf %54, %55 : vector<1x128xf32>
    %57 = arith.negf %53 : vector<1x128xf32>
    %58 = math.exp %57 : vector<1x128xf32>
    %cst_29 = arith.constant 1.000000e+00 : f32
    %59 = vector.broadcast %cst_29 : f32 to vector<1x128xf32>
    %60 = arith.addf %59, %58 : vector<1x128xf32>
    %61 = arith.divf %59, %60 : vector<1x128xf32>
    %62 = math.tanh %53 : vector<1x128xf32>
    %63 = vector.extract_strided_slice %61 {offsets = [0, 0], sizes = [1, 32], strides = [1, 1]} : vector<1x128xf32> to vector<1x32xf32>
    %64 = vector.extract_strided_slice %61 {offsets = [0, 32], sizes = [1, 32], strides = [1, 1]} : vector<1x128xf32> to vector<1x32xf32>
    %65 = vector.extract_strided_slice %62 {offsets = [0, 64], sizes = [1, 32], strides = [1, 1]} : vector<1x128xf32> to vector<1x32xf32>
    %66 = vector.extract_strided_slice %61 {offsets = [0, 96], sizes = [1, 32], strides = [1, 1]} : vector<1x128xf32> to vector<1x32xf32>
    %67 = arith.mulf %64, %31 : vector<1x32xf32>
    %68 = arith.mulf %63, %65 : vector<1x32xf32>
    %69 = arith.addf %67, %68 : vector<1x32xf32>
    %70 = math.tanh %69 : vector<1x32xf32>
    %71 = arith.mulf %66, %70 : vector<1x32xf32>
    %72 = arith.negf %56 : vector<1x128xf32>
    %73 = math.exp %72 : vector<1x128xf32>
    %cst_30 = arith.constant 1.000000e+00 : f32
    %74 = vector.broadcast %cst_30 : f32 to vector<1x128xf32>
    %75 = arith.addf %74, %73 : vector<1x128xf32>
    %76 = arith.divf %74, %75 : vector<1x128xf32>
    %77 = math.tanh %56 : vector<1x128xf32>
    %78 = vector.extract_strided_slice %76 {offsets = [0, 0], sizes = [1, 32], strides = [1, 1]} : vector<1x128xf32> to vector<1x32xf32>
    %79 = vector.extract_strided_slice %76 {offsets = [0, 32], sizes = [1, 32], strides = [1, 1]} : vector<1x128xf32> to vector<1x32xf32>
    %80 = vector.extract_strided_slice %77 {offsets = [0, 64], sizes = [1, 32], strides = [1, 1]} : vector<1x128xf32> to vector<1x32xf32>
    %81 = vector.extract_strided_slice %76 {offsets = [0, 96], sizes = [1, 32], strides = [1, 1]} : vector<1x128xf32> to vector<1x32xf32>
    %82 = arith.mulf %79, %46 : vector<1x32xf32>
    %83 = arith.mulf %78, %80 : vector<1x32xf32>
    %84 = arith.addf %82, %83 : vector<1x32xf32>
    %85 = math.tanh %84 : vector<1x32xf32>
    %86 = arith.mulf %81, %85 : vector<1x32xf32>
    %c1_31 = arith.constant 1 : index
    %c0_32 = arith.constant 0 : index
    %87 = vector.load %arg14[%c1_31, %c0_32] : memref<8x32xf32, #tpu.memory_space<vmem>>, vector<1x32xf32>
    tpu.vector_store %arg14[%c1_31, %c0_32], %71 {strides = array<i32>} : memref<8x32xf32, #tpu.memory_space<vmem>>, vector<1x32xf32>,
    %c6_33 = arith.constant 6 : index
    %c0_34 = arith.constant 0 : index
    %88 = vector.load %arg15[%c6_33, %c0_34] : memref<8x32xf32, #tpu.memory_space<vmem>>, vector<1x32xf32>
    tpu.vector_store %arg15[%c6_33, %c0_34], %86 {strides = array<i32>} : memref<8x32xf32, #tpu.memory_space<vmem>>, vector<1x32xf32>,
    %c2 = arith.constant 2 : index
    %c0_35 = arith.constant 0 : index
    %89 = vector.load %arg12[%c2, %c0_35] : memref<8x128xf32, #tpu.memory_space<vmem>>, vector<1x128xf32>
    %cst_36 = arith.constant dense<0.000000e+00> : vector<1x128xf32>
    %90 = tpu.matmul %71, %0, %cst_36 {dimension_numbers = #tpu.dot_dimension_numbers<[1], [0], [0], [1], [0, 0, 1, 1], [], []>} : vector<1x32xf32>, vector<32x128xf32>, vector<1x128xf32> -> vector<1x128xf32>
    %91 = arith.addf %89, %90 : vector<1x128xf32>
    %c5 = arith.constant 5 : index
    %c0_37 = arith.constant 0 : index
    %92 = vector.load %arg13[%c5, %c0_37] : memref<8x128xf32, #tpu.memory_space<vmem>>, vector<1x128xf32>
    %cst_38 = arith.constant dense<0.000000e+00> : vector<1x128xf32>
    %93 = tpu.matmul %86, %1, %cst_38 {dimension_numbers = #tpu.dot_dimension_numbers<[1], [0], [0], [1], [0, 0, 1, 1], [], []>} : vector<1x32xf32>, vector<32x128xf32>, vector<1x128xf32> -> vector<1x128xf32>
    %94 = arith.addf %92, %93 : vector<1x128xf32>
    %95 = arith.negf %91 : vector<1x128xf32>
    %96 = math.exp %95 : vector<1x128xf32>
    %cst_39 = arith.constant 1.000000e+00 : f32
    %97 = vector.broadcast %cst_39 : f32 to vector<1x128xf32>
    %98 = arith.addf %97, %96 : vector<1x128xf32>
    %99 = arith.divf %97, %98 : vector<1x128xf32>
    %100 = math.tanh %91 : vector<1x128xf32>
    %101 = vector.extract_strided_slice %99 {offsets = [0, 0], sizes = [1, 32], strides = [1, 1]} : vector<1x128xf32> to vector<1x32xf32>
    %102 = vector.extract_strided_slice %99 {offsets = [0, 32], sizes = [1, 32], strides = [1, 1]} : vector<1x128xf32> to vector<1x32xf32>
    %103 = vector.extract_strided_slice %100 {offsets = [0, 64], sizes = [1, 32], strides = [1, 1]} : vector<1x128xf32> to vector<1x32xf32>
    %104 = vector.extract_strided_slice %99 {offsets = [0, 96], sizes = [1, 32], strides = [1, 1]} : vector<1x128xf32> to vector<1x32xf32>
    %105 = arith.mulf %102, %69 : vector<1x32xf32>
    %106 = arith.mulf %101, %103 : vector<1x32xf32>
    %107 = arith.addf %105, %106 : vector<1x32xf32>
    %108 = math.tanh %107 : vector<1x32xf32>
    %109 = arith.mulf %104, %108 : vector<1x32xf32>
    %110 = arith.negf %94 : vector<1x128xf32>
    %111 = math.exp %110 : vector<1x128xf32>
    %cst_40 = arith.constant 1.000000e+00 : f32
    %112 = vector.broadcast %cst_40 : f32 to vector<1x128xf32>
    %113 = arith.addf %112, %111 : vector<1x128xf32>
    %114 = arith.divf %112, %113 : vector<1x128xf32>
    %115 = math.tanh %94 : vector<1x128xf32>
    %116 = vector.extract_strided_slice %114 {offsets = [0, 0], sizes = [1, 32], strides = [1, 1]} : vector<1x128xf32> to vector<1x32xf32>
    %117 = vector.extract_strided_slice %114 {offsets = [0, 32], sizes = [1, 32], strides = [1, 1]} : vector<1x128xf32> to vector<1x32xf32>
    %118 = vector.extract_strided_slice %115 {offsets = [0, 64], sizes = [1, 32], strides = [1, 1]} : vector<1x128xf32> to vector<1x32xf32>
    %119 = vector.extract_strided_slice %114 {offsets = [0, 96], sizes = [1, 32], strides = [1, 1]} : vector<1x128xf32> to vector<1x32xf32>
    %120 = arith.mulf %117, %84 : vector<1x32xf32>
    %121 = arith.mulf %116, %118 : vector<1x32xf32>
    %122 = arith.addf %120, %121 : vector<1x32xf32>
    %123 = math.tanh %122 : vector<1x32xf32>
    %124 = arith.mulf %119, %123 : vector<1x32xf32>
    %c2_41 = arith.constant 2 : index
    %c0_42 = arith.constant 0 : index
    %125 = vector.load %arg14[%c2_41, %c0_42] : memref<8x32xf32, #tpu.memory_space<vmem>>, vector<1x32xf32>
    tpu.vector_store %arg14[%c2_41, %c0_42], %109 {strides = array<i32>} : memref<8x32xf32, #tpu.memory_space<vmem>>, vector<1x32xf32>,
    %c5_43 = arith.constant 5 : index
    %c0_44 = arith.constant 0 : index
    %126 = vector.load %arg15[%c5_43, %c0_44] : memref<8x32xf32, #tpu.memory_space<vmem>>, vector<1x32xf32>
    tpu.vector_store %arg15[%c5_43, %c0_44], %124 {strides = array<i32>} : memref<8x32xf32, #tpu.memory_space<vmem>>, vector<1x32xf32>,
    %c3 = arith.constant 3 : index
    %c0_45 = arith.constant 0 : index
    %127 = vector.load %arg12[%c3, %c0_45] : memref<8x128xf32, #tpu.memory_space<vmem>>, vector<1x128xf32>
    %cst_46 = arith.constant dense<0.000000e+00> : vector<1x128xf32>
    %128 = tpu.matmul %109, %0, %cst_46 {dimension_numbers = #tpu.dot_dimension_numbers<[1], [0], [0], [1], [0, 0, 1, 1], [], []>} : vector<1x32xf32>, vector<32x128xf32>, vector<1x128xf32> -> vector<1x128xf32>
    %129 = arith.addf %127, %128 : vector<1x128xf32>
    %c4 = arith.constant 4 : index
    %c0_47 = arith.constant 0 : index
    %130 = vector.load %arg13[%c4, %c0_47] : memref<8x128xf32, #tpu.memory_space<vmem>>, vector<1x128xf32>
    %cst_48 = arith.constant dense<0.000000e+00> : vector<1x128xf32>
    %131 = tpu.matmul %124, %1, %cst_48 {dimension_numbers = #tpu.dot_dimension_numbers<[1], [0], [0], [1], [0, 0, 1, 1], [], []>} : vector<1x32xf32>, vector<32x128xf32>, vector<1x128xf32> -> vector<1x128xf32>
    %132 = arith.addf %130, %131 : vector<1x128xf32>
    %133 = arith.negf %129 : vector<1x128xf32>
    %134 = math.exp %133 : vector<1x128xf32>
    %cst_49 = arith.constant 1.000000e+00 : f32
    %135 = vector.broadcast %cst_49 : f32 to vector<1x128xf32>
    %136 = arith.addf %135, %134 : vector<1x128xf32>
    %137 = arith.divf %135, %136 : vector<1x128xf32>
    %138 = math.tanh %129 : vector<1x128xf32>
    %139 = vector.extract_strided_slice %137 {offsets = [0, 0], sizes = [1, 32], strides = [1, 1]} : vector<1x128xf32> to vector<1x32xf32>
    %140 = vector.extract_strided_slice %137 {offsets = [0, 32], sizes = [1, 32], strides = [1, 1]} : vector<1x128xf32> to vector<1x32xf32>
    %141 = vector.extract_strided_slice %138 {offsets = [0, 64], sizes = [1, 32], strides = [1, 1]} : vector<1x128xf32> to vector<1x32xf32>
    %142 = vector.extract_strided_slice %137 {offsets = [0, 96], sizes = [1, 32], strides = [1, 1]} : vector<1x128xf32> to vector<1x32xf32>
    %143 = arith.mulf %140, %107 : vector<1x32xf32>
    %144 = arith.mulf %139, %141 : vector<1x32xf32>
    %145 = arith.addf %143, %144 : vector<1x32xf32>
    %146 = math.tanh %145 : vector<1x32xf32>
    %147 = arith.mulf %142, %146 : vector<1x32xf32>
    %148 = arith.negf %132 : vector<1x128xf32>
    %149 = math.exp %148 : vector<1x128xf32>
    %cst_50 = arith.constant 1.000000e+00 : f32
    %150 = vector.broadcast %cst_50 : f32 to vector<1x128xf32>
    %151 = arith.addf %150, %149 : vector<1x128xf32>
    %152 = arith.divf %150, %151 : vector<1x128xf32>
    %153 = math.tanh %132 : vector<1x128xf32>
    %154 = vector.extract_strided_slice %152 {offsets = [0, 0], sizes = [1, 32], strides = [1, 1]} : vector<1x128xf32> to vector<1x32xf32>
    %155 = vector.extract_strided_slice %152 {offsets = [0, 32], sizes = [1, 32], strides = [1, 1]} : vector<1x128xf32> to vector<1x32xf32>
    %156 = vector.extract_strided_slice %153 {offsets = [0, 64], sizes = [1, 32], strides = [1, 1]} : vector<1x128xf32> to vector<1x32xf32>
    %157 = vector.extract_strided_slice %152 {offsets = [0, 96], sizes = [1, 32], strides = [1, 1]} : vector<1x128xf32> to vector<1x32xf32>
    %158 = arith.mulf %155, %122 : vector<1x32xf32>
    %159 = arith.mulf %154, %156 : vector<1x32xf32>
    %160 = arith.addf %158, %159 : vector<1x32xf32>
    %161 = math.tanh %160 : vector<1x32xf32>
    %162 = arith.mulf %157, %161 : vector<1x32xf32>
    %c3_51 = arith.constant 3 : index
    %c0_52 = arith.constant 0 : index
    %163 = vector.load %arg14[%c3_51, %c0_52] : memref<8x32xf32, #tpu.memory_space<vmem>>, vector<1x32xf32>
    tpu.vector_store %arg14[%c3_51, %c0_52], %147 {strides = array<i32>} : memref<8x32xf32, #tpu.memory_space<vmem>>, vector<1x32xf32>,
    %c4_53 = arith.constant 4 : index
    %c0_54 = arith.constant 0 : index
    %164 = vector.load %arg15[%c4_53, %c0_54] : memref<8x32xf32, #tpu.memory_space<vmem>>, vector<1x32xf32>
    tpu.vector_store %arg15[%c4_53, %c0_54], %162 {strides = array<i32>} : memref<8x32xf32, #tpu.memory_space<vmem>>, vector<1x32xf32>,
    %c4_55 = arith.constant 4 : index
    %c0_56 = arith.constant 0 : index
    %165 = vector.load %arg12[%c4_55, %c0_56] : memref<8x128xf32, #tpu.memory_space<vmem>>, vector<1x128xf32>
    %cst_57 = arith.constant dense<0.000000e+00> : vector<1x128xf32>
    %166 = tpu.matmul %147, %0, %cst_57 {dimension_numbers = #tpu.dot_dimension_numbers<[1], [0], [0], [1], [0, 0, 1, 1], [], []>} : vector<1x32xf32>, vector<32x128xf32>, vector<1x128xf32> -> vector<1x128xf32>
    %167 = arith.addf %165, %166 : vector<1x128xf32>
    %c3_58 = arith.constant 3 : index
    %c0_59 = arith.constant 0 : index
    %168 = vector.load %arg13[%c3_58, %c0_59] : memref<8x128xf32, #tpu.memory_space<vmem>>, vector<1x128xf32>
    %cst_60 = arith.constant dense<0.000000e+00> : vector<1x128xf32>
    %169 = tpu.matmul %162, %1, %cst_60 {dimension_numbers = #tpu.dot_dimension_numbers<[1], [0], [0], [1], [0, 0, 1, 1], [], []>} : vector<1x32xf32>, vector<32x128xf32>, vector<1x128xf32> -> vector<1x128xf32>
    %170 = arith.addf %168, %169 : vector<1x128xf32>
    %171 = arith.negf %167 : vector<1x128xf32>
    %172 = math.exp %171 : vector<1x128xf32>
    %cst_61 = arith.constant 1.000000e+00 : f32
    %173 = vector.broadcast %cst_61 : f32 to vector<1x128xf32>
    %174 = arith.addf %173, %172 : vector<1x128xf32>
    %175 = arith.divf %173, %174 : vector<1x128xf32>
    %176 = math.tanh %167 : vector<1x128xf32>
    %177 = vector.extract_strided_slice %175 {offsets = [0, 0], sizes = [1, 32], strides = [1, 1]} : vector<1x128xf32> to vector<1x32xf32>
    %178 = vector.extract_strided_slice %175 {offsets = [0, 32], sizes = [1, 32], strides = [1, 1]} : vector<1x128xf32> to vector<1x32xf32>
    %179 = vector.extract_strided_slice %176 {offsets = [0, 64], sizes = [1, 32], strides = [1, 1]} : vector<1x128xf32> to vector<1x32xf32>
    %180 = vector.extract_strided_slice %175 {offsets = [0, 96], sizes = [1, 32], strides = [1, 1]} : vector<1x128xf32> to vector<1x32xf32>
    %181 = arith.mulf %178, %145 : vector<1x32xf32>
    %182 = arith.mulf %177, %179 : vector<1x32xf32>
    %183 = arith.addf %181, %182 : vector<1x32xf32>
    %184 = math.tanh %183 : vector<1x32xf32>
    %185 = arith.mulf %180, %184 : vector<1x32xf32>
    %186 = arith.negf %170 : vector<1x128xf32>
    %187 = math.exp %186 : vector<1x128xf32>
    %cst_62 = arith.constant 1.000000e+00 : f32
    %188 = vector.broadcast %cst_62 : f32 to vector<1x128xf32>
    %189 = arith.addf %188, %187 : vector<1x128xf32>
    %190 = arith.divf %188, %189 : vector<1x128xf32>
    %191 = math.tanh %170 : vector<1x128xf32>
    %192 = vector.extract_strided_slice %190 {offsets = [0, 0], sizes = [1, 32], strides = [1, 1]} : vector<1x128xf32> to vector<1x32xf32>
    %193 = vector.extract_strided_slice %190 {offsets = [0, 32], sizes = [1, 32], strides = [1, 1]} : vector<1x128xf32> to vector<1x32xf32>
    %194 = vector.extract_strided_slice %191 {offsets = [0, 64], sizes = [1, 32], strides = [1, 1]} : vector<1x128xf32> to vector<1x32xf32>
    %195 = vector.extract_strided_slice %190 {offsets = [0, 96], sizes = [1, 32], strides = [1, 1]} : vector<1x128xf32> to vector<1x32xf32>
    %196 = arith.mulf %193, %160 : vector<1x32xf32>
    %197 = arith.mulf %192, %194 : vector<1x32xf32>
    %198 = arith.addf %196, %197 : vector<1x32xf32>
    %199 = math.tanh %198 : vector<1x32xf32>
    %200 = arith.mulf %195, %199 : vector<1x32xf32>
    %c4_63 = arith.constant 4 : index
    %c0_64 = arith.constant 0 : index
    %201 = vector.load %arg14[%c4_63, %c0_64] : memref<8x32xf32, #tpu.memory_space<vmem>>, vector<1x32xf32>
    tpu.vector_store %arg14[%c4_63, %c0_64], %185 {strides = array<i32>} : memref<8x32xf32, #tpu.memory_space<vmem>>, vector<1x32xf32>,
    %c3_65 = arith.constant 3 : index
    %c0_66 = arith.constant 0 : index
    %202 = vector.load %arg15[%c3_65, %c0_66] : memref<8x32xf32, #tpu.memory_space<vmem>>, vector<1x32xf32>
    tpu.vector_store %arg15[%c3_65, %c0_66], %200 {strides = array<i32>} : memref<8x32xf32, #tpu.memory_space<vmem>>, vector<1x32xf32>,
    %c5_67 = arith.constant 5 : index
    %c0_68 = arith.constant 0 : index
    %203 = vector.load %arg12[%c5_67, %c0_68] : memref<8x128xf32, #tpu.memory_space<vmem>>, vector<1x128xf32>
    %cst_69 = arith.constant dense<0.000000e+00> : vector<1x128xf32>
    %204 = tpu.matmul %185, %0, %cst_69 {dimension_numbers = #tpu.dot_dimension_numbers<[1], [0], [0], [1], [0, 0, 1, 1], [], []>} : vector<1x32xf32>, vector<32x128xf32>, vector<1x128xf32> -> vector<1x128xf32>
    %205 = arith.addf %203, %204 : vector<1x128xf32>
    %c2_70 = arith.constant 2 : index
    %c0_71 = arith.constant 0 : index
    %206 = vector.load %arg13[%c2_70, %c0_71] : memref<8x128xf32, #tpu.memory_space<vmem>>, vector<1x128xf32>
    %cst_72 = arith.constant dense<0.000000e+00> : vector<1x128xf32>
    %207 = tpu.matmul %200, %1, %cst_72 {dimension_numbers = #tpu.dot_dimension_numbers<[1], [0], [0], [1], [0, 0, 1, 1], [], []>} : vector<1x32xf32>, vector<32x128xf32>, vector<1x128xf32> -> vector<1x128xf32>
    %208 = arith.addf %206, %207 : vector<1x128xf32>
    %209 = arith.negf %205 : vector<1x128xf32>
    %210 = math.exp %209 : vector<1x128xf32>
    %cst_73 = arith.constant 1.000000e+00 : f32
    %211 = vector.broadcast %cst_73 : f32 to vector<1x128xf32>
    %212 = arith.addf %211, %210 : vector<1x128xf32>
    %213 = arith.divf %211, %212 : vector<1x128xf32>
    %214 = math.tanh %205 : vector<1x128xf32>
    %215 = vector.extract_strided_slice %213 {offsets = [0, 0], sizes = [1, 32], strides = [1, 1]} : vector<1x128xf32> to vector<1x32xf32>
    %216 = vector.extract_strided_slice %213 {offsets = [0, 32], sizes = [1, 32], strides = [1, 1]} : vector<1x128xf32> to vector<1x32xf32>
    %217 = vector.extract_strided_slice %214 {offsets = [0, 64], sizes = [1, 32], strides = [1, 1]} : vector<1x128xf32> to vector<1x32xf32>
    %218 = vector.extract_strided_slice %213 {offsets = [0, 96], sizes = [1, 32], strides = [1, 1]} : vector<1x128xf32> to vector<1x32xf32>
    %219 = arith.mulf %216, %183 : vector<1x32xf32>
    %220 = arith.mulf %215, %217 : vector<1x32xf32>
    %221 = arith.addf %219, %220 : vector<1x32xf32>
    %222 = math.tanh %221 : vector<1x32xf32>
    %223 = arith.mulf %218, %222 : vector<1x32xf32>
    %224 = arith.negf %208 : vector<1x128xf32>
    %225 = math.exp %224 : vector<1x128xf32>
    %cst_74 = arith.constant 1.000000e+00 : f32
    %226 = vector.broadcast %cst_74 : f32 to vector<1x128xf32>
    %227 = arith.addf %226, %225 : vector<1x128xf32>
    %228 = arith.divf %226, %227 : vector<1x128xf32>
    %229 = math.tanh %208 : vector<1x128xf32>
    %230 = vector.extract_strided_slice %228 {offsets = [0, 0], sizes = [1, 32], strides = [1, 1]} : vector<1x128xf32> to vector<1x32xf32>
    %231 = vector.extract_strided_slice %228 {offsets = [0, 32], sizes = [1, 32], strides = [1, 1]} : vector<1x128xf32> to vector<1x32xf32>
    %232 = vector.extract_strided_slice %229 {offsets = [0, 64], sizes = [1, 32], strides = [1, 1]} : vector<1x128xf32> to vector<1x32xf32>
    %233 = vector.extract_strided_slice %228 {offsets = [0, 96], sizes = [1, 32], strides = [1, 1]} : vector<1x128xf32> to vector<1x32xf32>
    %234 = arith.mulf %231, %198 : vector<1x32xf32>
    %235 = arith.mulf %230, %232 : vector<1x32xf32>
    %236 = arith.addf %234, %235 : vector<1x32xf32>
    %237 = math.tanh %236 : vector<1x32xf32>
    %238 = arith.mulf %233, %237 : vector<1x32xf32>
    %c5_75 = arith.constant 5 : index
    %c0_76 = arith.constant 0 : index
    %239 = vector.load %arg14[%c5_75, %c0_76] : memref<8x32xf32, #tpu.memory_space<vmem>>, vector<1x32xf32>
    tpu.vector_store %arg14[%c5_75, %c0_76], %223 {strides = array<i32>} : memref<8x32xf32, #tpu.memory_space<vmem>>, vector<1x32xf32>,
    %c2_77 = arith.constant 2 : index
    %c0_78 = arith.constant 0 : index
    %240 = vector.load %arg15[%c2_77, %c0_78] : memref<8x32xf32, #tpu.memory_space<vmem>>, vector<1x32xf32>
    tpu.vector_store %arg15[%c2_77, %c0_78], %238 {strides = array<i32>} : memref<8x32xf32, #tpu.memory_space<vmem>>, vector<1x32xf32>,
    %c6_79 = arith.constant 6 : index
    %c0_80 = arith.constant 0 : index
    %241 = vector.load %arg12[%c6_79, %c0_80] : memref<8x128xf32, #tpu.memory_space<vmem>>, vector<1x128xf32>
    %cst_81 = arith.constant dense<0.000000e+00> : vector<1x128xf32>
    %242 = tpu.matmul %223, %0, %cst_81 {dimension_numbers = #tpu.dot_dimension_numbers<[1], [0], [0], [1], [0, 0, 1, 1], [], []>} : vector<1x32xf32>, vector<32x128xf32>, vector<1x128xf32> -> vector<1x128xf32>
    %243 = arith.addf %241, %242 : vector<1x128xf32>
    %c1_82 = arith.constant 1 : index
    %c0_83 = arith.constant 0 : index
    %244 = vector.load %arg13[%c1_82, %c0_83] : memref<8x128xf32, #tpu.memory_space<vmem>>, vector<1x128xf32>
    %cst_84 = arith.constant dense<0.000000e+00> : vector<1x128xf32>
    %245 = tpu.matmul %238, %1, %cst_84 {dimension_numbers = #tpu.dot_dimension_numbers<[1], [0], [0], [1], [0, 0, 1, 1], [], []>} : vector<1x32xf32>, vector<32x128xf32>, vector<1x128xf32> -> vector<1x128xf32>
    %246 = arith.addf %244, %245 : vector<1x128xf32>
    %247 = arith.negf %243 : vector<1x128xf32>
    %248 = math.exp %247 : vector<1x128xf32>
    %cst_85 = arith.constant 1.000000e+00 : f32
    %249 = vector.broadcast %cst_85 : f32 to vector<1x128xf32>
    %250 = arith.addf %249, %248 : vector<1x128xf32>
    %251 = arith.divf %249, %250 : vector<1x128xf32>
    %252 = math.tanh %243 : vector<1x128xf32>
    %253 = vector.extract_strided_slice %251 {offsets = [0, 0], sizes = [1, 32], strides = [1, 1]} : vector<1x128xf32> to vector<1x32xf32>
    %254 = vector.extract_strided_slice %251 {offsets = [0, 32], sizes = [1, 32], strides = [1, 1]} : vector<1x128xf32> to vector<1x32xf32>
    %255 = vector.extract_strided_slice %252 {offsets = [0, 64], sizes = [1, 32], strides = [1, 1]} : vector<1x128xf32> to vector<1x32xf32>
    %256 = vector.extract_strided_slice %251 {offsets = [0, 96], sizes = [1, 32], strides = [1, 1]} : vector<1x128xf32> to vector<1x32xf32>
    %257 = arith.mulf %254, %221 : vector<1x32xf32>
    %258 = arith.mulf %253, %255 : vector<1x32xf32>
    %259 = arith.addf %257, %258 : vector<1x32xf32>
    %260 = math.tanh %259 : vector<1x32xf32>
    %261 = arith.mulf %256, %260 : vector<1x32xf32>
    %262 = arith.negf %246 : vector<1x128xf32>
    %263 = math.exp %262 : vector<1x128xf32>
    %cst_86 = arith.constant 1.000000e+00 : f32
    %264 = vector.broadcast %cst_86 : f32 to vector<1x128xf32>
    %265 = arith.addf %264, %263 : vector<1x128xf32>
    %266 = arith.divf %264, %265 : vector<1x128xf32>
    %267 = math.tanh %246 : vector<1x128xf32>
    %268 = vector.extract_strided_slice %266 {offsets = [0, 0], sizes = [1, 32], strides = [1, 1]} : vector<1x128xf32> to vector<1x32xf32>
    %269 = vector.extract_strided_slice %266 {offsets = [0, 32], sizes = [1, 32], strides = [1, 1]} : vector<1x128xf32> to vector<1x32xf32>
    %270 = vector.extract_strided_slice %267 {offsets = [0, 64], sizes = [1, 32], strides = [1, 1]} : vector<1x128xf32> to vector<1x32xf32>
    %271 = vector.extract_strided_slice %266 {offsets = [0, 96], sizes = [1, 32], strides = [1, 1]} : vector<1x128xf32> to vector<1x32xf32>
    %272 = arith.mulf %269, %236 : vector<1x32xf32>
    %273 = arith.mulf %268, %270 : vector<1x32xf32>
    %274 = arith.addf %272, %273 : vector<1x32xf32>
    %275 = math.tanh %274 : vector<1x32xf32>
    %276 = arith.mulf %271, %275 : vector<1x32xf32>
    %c6_87 = arith.constant 6 : index
    %c0_88 = arith.constant 0 : index
    %277 = vector.load %arg14[%c6_87, %c0_88] : memref<8x32xf32, #tpu.memory_space<vmem>>, vector<1x32xf32>
    tpu.vector_store %arg14[%c6_87, %c0_88], %261 {strides = array<i32>} : memref<8x32xf32, #tpu.memory_space<vmem>>, vector<1x32xf32>,
    %c1_89 = arith.constant 1 : index
    %c0_90 = arith.constant 0 : index
    %278 = vector.load %arg15[%c1_89, %c0_90] : memref<8x32xf32, #tpu.memory_space<vmem>>, vector<1x32xf32>
    tpu.vector_store %arg15[%c1_89, %c0_90], %276 {strides = array<i32>} : memref<8x32xf32, #tpu.memory_space<vmem>>, vector<1x32xf32>,
    %c7_91 = arith.constant 7 : index
    %c0_92 = arith.constant 0 : index
    %279 = vector.load %arg12[%c7_91, %c0_92] : memref<8x128xf32, #tpu.memory_space<vmem>>, vector<1x128xf32>
    %cst_93 = arith.constant dense<0.000000e+00> : vector<1x128xf32>
    %280 = tpu.matmul %261, %0, %cst_93 {dimension_numbers = #tpu.dot_dimension_numbers<[1], [0], [0], [1], [0, 0, 1, 1], [], []>} : vector<1x32xf32>, vector<32x128xf32>, vector<1x128xf32> -> vector<1x128xf32>
    %281 = arith.addf %279, %280 : vector<1x128xf32>
    %c0_94 = arith.constant 0 : index
    %c0_95 = arith.constant 0 : index
    %282 = vector.load %arg13[%c0_94, %c0_95] : memref<8x128xf32, #tpu.memory_space<vmem>>, vector<1x128xf32>
    %cst_96 = arith.constant dense<0.000000e+00> : vector<1x128xf32>
    %283 = tpu.matmul %276, %1, %cst_96 {dimension_numbers = #tpu.dot_dimension_numbers<[1], [0], [0], [1], [0, 0, 1, 1], [], []>} : vector<1x32xf32>, vector<32x128xf32>, vector<1x128xf32> -> vector<1x128xf32>
    %284 = arith.addf %282, %283 : vector<1x128xf32>
    %285 = arith.negf %281 : vector<1x128xf32>
    %286 = math.exp %285 : vector<1x128xf32>
    %cst_97 = arith.constant 1.000000e+00 : f32
    %287 = vector.broadcast %cst_97 : f32 to vector<1x128xf32>
    %288 = arith.addf %287, %286 : vector<1x128xf32>
    %289 = arith.divf %287, %288 : vector<1x128xf32>
    %290 = math.tanh %281 : vector<1x128xf32>
    %291 = vector.extract_strided_slice %289 {offsets = [0, 0], sizes = [1, 32], strides = [1, 1]} : vector<1x128xf32> to vector<1x32xf32>
    %292 = vector.extract_strided_slice %289 {offsets = [0, 32], sizes = [1, 32], strides = [1, 1]} : vector<1x128xf32> to vector<1x32xf32>
    %293 = vector.extract_strided_slice %290 {offsets = [0, 64], sizes = [1, 32], strides = [1, 1]} : vector<1x128xf32> to vector<1x32xf32>
    %294 = vector.extract_strided_slice %289 {offsets = [0, 96], sizes = [1, 32], strides = [1, 1]} : vector<1x128xf32> to vector<1x32xf32>
    %295 = arith.mulf %292, %259 : vector<1x32xf32>
    %296 = arith.mulf %291, %293 : vector<1x32xf32>
    %297 = arith.addf %295, %296 : vector<1x32xf32>
    %298 = math.tanh %297 : vector<1x32xf32>
    %299 = arith.mulf %294, %298 : vector<1x32xf32>
    %300 = arith.negf %284 : vector<1x128xf32>
    %301 = math.exp %300 : vector<1x128xf32>
    %cst_98 = arith.constant 1.000000e+00 : f32
    %302 = vector.broadcast %cst_98 : f32 to vector<1x128xf32>
    %303 = arith.addf %302, %301 : vector<1x128xf32>
    %304 = arith.divf %302, %303 : vector<1x128xf32>
    %305 = math.tanh %284 : vector<1x128xf32>
    %306 = vector.extract_strided_slice %304 {offsets = [0, 0], sizes = [1, 32], strides = [1, 1]} : vector<1x128xf32> to vector<1x32xf32>
    %307 = vector.extract_strided_slice %304 {offsets = [0, 32], sizes = [1, 32], strides = [1, 1]} : vector<1x128xf32> to vector<1x32xf32>
    %308 = vector.extract_strided_slice %305 {offsets = [0, 64], sizes = [1, 32], strides = [1, 1]} : vector<1x128xf32> to vector<1x32xf32>
    %309 = vector.extract_strided_slice %304 {offsets = [0, 96], sizes = [1, 32], strides = [1, 1]} : vector<1x128xf32> to vector<1x32xf32>
    %310 = arith.mulf %307, %274 : vector<1x32xf32>
    %311 = arith.mulf %306, %308 : vector<1x32xf32>
    %312 = arith.addf %310, %311 : vector<1x32xf32>
    %313 = math.tanh %312 : vector<1x32xf32>
    %314 = arith.mulf %309, %313 : vector<1x32xf32>
    %c7_99 = arith.constant 7 : index
    %c0_100 = arith.constant 0 : index
    %315 = vector.load %arg14[%c7_99, %c0_100] : memref<8x32xf32, #tpu.memory_space<vmem>>, vector<1x32xf32>
    tpu.vector_store %arg14[%c7_99, %c0_100], %299 {strides = array<i32>} : memref<8x32xf32, #tpu.memory_space<vmem>>, vector<1x32xf32>,
    %c0_101 = arith.constant 0 : index
    %c0_102 = arith.constant 0 : index
    %316 = vector.load %arg15[%c0_101, %c0_102] : memref<8x32xf32, #tpu.memory_space<vmem>>, vector<1x32xf32>
    tpu.vector_store %arg15[%c0_101, %c0_102], %314 {strides = array<i32>} : memref<8x32xf32, #tpu.memory_space<vmem>>, vector<1x32xf32>,
    %c0_103 = arith.constant 0 : index
    %c0_104 = arith.constant 0 : index
    %317 = vector.load %arg10[%c0_103, %c0_104] : memref<4x32xf32, #tpu.memory_space<vmem>>, vector<1x32xf32>
    tpu.vector_store %arg10[%c0_103, %c0_104], %299 {strides = array<i32>} : memref<4x32xf32, #tpu.memory_space<vmem>>, vector<1x32xf32>,
    %c1_105 = arith.constant 1 : index
    %c0_106 = arith.constant 0 : index
    %318 = vector.load %arg10[%c1_105, %c0_106] : memref<4x32xf32, #tpu.memory_space<vmem>>, vector<1x32xf32>
    tpu.vector_store %arg10[%c1_105, %c0_106], %314 {strides = array<i32>} : memref<4x32xf32, #tpu.memory_space<vmem>>, vector<1x32xf32>,
    %c0_107 = arith.constant 0 : index
    %c0_108 = arith.constant 0 : index
    %319 = vector.load %arg11[%c0_107, %c0_108] : memref<4x32xf32, #tpu.memory_space<vmem>>, vector<1x32xf32>
    tpu.vector_store %arg11[%c0_107, %c0_108], %297 {strides = array<i32>} : memref<4x32xf32, #tpu.memory_space<vmem>>, vector<1x32xf32>,
    %c1_109 = arith.constant 1 : index
    %c0_110 = arith.constant 0 : index
    %320 = vector.load %arg11[%c1_109, %c0_110] : memref<4x32xf32, #tpu.memory_space<vmem>>, vector<1x32xf32>
    tpu.vector_store %arg11[%c1_109, %c0_110], %312 {strides = array<i32>} : memref<4x32xf32, #tpu.memory_space<vmem>>, vector<1x32xf32>,
    %c0_111 = arith.constant 0 : index
    %c0_112 = arith.constant 0 : index
    %321 = vector.load %arg7[%c0_111, %c0_112] : memref<32x128xf32, #tpu.memory_space<vmem>>, vector<32x128xf32>
    %c0_113 = arith.constant 0 : index
    %c0_114 = arith.constant 0 : index
    %322 = vector.load %arg8[%c0_113, %c0_114] : memref<32x128xf32, #tpu.memory_space<vmem>>, vector<32x128xf32>
    %c0_115 = arith.constant 0 : index
    %c0_116 = arith.constant 0 : index
    %323 = vector.load %arg6[%c0_115, %c0_116] : memref<1x256xf32, #tpu.memory_space<vmem>>, vector<1x256xf32>
    %c0_117 = arith.constant 0 : index
    %c0_118 = arith.constant 0 : index
    %324 = vector.load %arg14[%c0_117, %c0_118] : memref<8x32xf32, #tpu.memory_space<vmem>>, vector<8x32xf32>
    %c0_119 = arith.constant 0 : index
    %c0_120 = arith.constant 0 : index
    %325 = vector.load %arg15[%c0_119, %c0_120] : memref<8x32xf32, #tpu.memory_space<vmem>>, vector<8x32xf32>
    %326 = tpu.concatenate %324, %325 in 1 : vector<8x32xf32>, vector<8x32xf32> -> vector<8x64xf32>
    %c0_121 = arith.constant 0 : index
    %c0_122 = arith.constant 0 : index
    %327 = vector.load %arg5[%c0_121, %c0_122] : memref<64x256xf32, #tpu.memory_space<vmem>>, vector<64x256xf32>
    %cst_123 = arith.constant dense<0.000000e+00> : vector<8x256xf32>
    %328 = tpu.matmul %326, %327, %cst_123 {dimension_numbers = #tpu.dot_dimension_numbers<[1], [0], [0], [1], [0, 0, 1, 1], [], []>} : vector<8x64xf32>, vector<64x256xf32>, vector<8x256xf32> -> vector<8x256xf32>
    %329 = vector.broadcast %323 : vector<1x256xf32> to vector<8x256xf32>
    %330 = arith.addf %328, %329 : vector<8x256xf32>
    %331 = vector.extract_strided_slice %330 {offsets = [0, 0], sizes = [8, 128], strides = [1, 1]} : vector<8x256xf32> to vector<8x128xf32>
    %c0_124 = arith.constant 0 : index
    %c0_125 = arith.constant 0 : index
    %332 = vector.load %arg12[%c0_124, %c0_125] : memref<8x128xf32, #tpu.memory_space<vmem>>, vector<8x128xf32>
    tpu.vector_store %arg12[%c0_124, %c0_125], %331 {strides = array<i32>} : memref<8x128xf32, #tpu.memory_space<vmem>>, vector<8x128xf32>,
    %333 = vector.extract_strided_slice %330 {offsets = [0, 128], sizes = [8, 128], strides = [1, 1]} : vector<8x256xf32> to vector<8x128xf32>
    %c0_126 = arith.constant 0 : index
    %c0_127 = arith.constant 0 : index
    %334 = vector.load %arg13[%c0_126, %c0_127] : memref<8x128xf32, #tpu.memory_space<vmem>>, vector<8x128xf32>
    tpu.vector_store %arg13[%c0_126, %c0_127], %333 {strides = array<i32>} : memref<8x128xf32, #tpu.memory_space<vmem>>, vector<8x128xf32>,
    %cst_128 = arith.constant 0.000000e+00 : f32
    %335 = vector.broadcast %cst_128 : f32 to vector<1x32xf32>
    %c0_129 = arith.constant 0 : index
    %c0_130 = arith.constant 0 : index
    %336 = vector.load %arg12[%c0_129, %c0_130] : memref<8x128xf32, #tpu.memory_space<vmem>>, vector<1x128xf32>
    %cst_131 = arith.constant dense<0.000000e+00> : vector<1x128xf32>
    %337 = tpu.matmul %335, %321, %cst_131 {dimension_numbers = #tpu.dot_dimension_numbers<[1], [0], [0], [1], [0, 0, 1, 1], [], []>} : vector<1x32xf32>, vector<32x128xf32>, vector<1x128xf32> -> vector<1x128xf32>
    %338 = arith.addf %336, %337 : vector<1x128xf32>
    %c7_132 = arith.constant 7 : index
    %c0_133 = arith.constant 0 : index
    %339 = vector.load %arg13[%c7_132, %c0_133] : memref<8x128xf32, #tpu.memory_space<vmem>>, vector<1x128xf32>
    %cst_134 = arith.constant dense<0.000000e+00> : vector<1x128xf32>
    %340 = tpu.matmul %335, %322, %cst_134 {dimension_numbers = #tpu.dot_dimension_numbers<[1], [0], [0], [1], [0, 0, 1, 1], [], []>} : vector<1x32xf32>, vector<32x128xf32>, vector<1x128xf32> -> vector<1x128xf32>
    %341 = arith.addf %339, %340 : vector<1x128xf32>
    %342 = arith.negf %338 : vector<1x128xf32>
    %343 = math.exp %342 : vector<1x128xf32>
    %cst_135 = arith.constant 1.000000e+00 : f32
    %344 = vector.broadcast %cst_135 : f32 to vector<1x128xf32>
    %345 = arith.addf %344, %343 : vector<1x128xf32>
    %346 = arith.divf %344, %345 : vector<1x128xf32>
    %347 = math.tanh %338 : vector<1x128xf32>
    %348 = vector.extract_strided_slice %346 {offsets = [0, 0], sizes = [1, 32], strides = [1, 1]} : vector<1x128xf32> to vector<1x32xf32>
    %349 = vector.extract_strided_slice %346 {offsets = [0, 32], sizes = [1, 32], strides = [1, 1]} : vector<1x128xf32> to vector<1x32xf32>
    %350 = vector.extract_strided_slice %347 {offsets = [0, 64], sizes = [1, 32], strides = [1, 1]} : vector<1x128xf32> to vector<1x32xf32>
    %351 = vector.extract_strided_slice %346 {offsets = [0, 96], sizes = [1, 32], strides = [1, 1]} : vector<1x128xf32> to vector<1x32xf32>
    %352 = arith.mulf %349, %335 : vector<1x32xf32>
    %353 = arith.mulf %348, %350 : vector<1x32xf32>
    %354 = arith.addf %352, %353 : vector<1x32xf32>
    %355 = math.tanh %354 : vector<1x32xf32>
    %356 = arith.mulf %351, %355 : vector<1x32xf32>
    %357 = arith.negf %341 : vector<1x128xf32>
    %358 = math.exp %357 : vector<1x128xf32>
    %cst_136 = arith.constant 1.000000e+00 : f32
    %359 = vector.broadcast %cst_136 : f32 to vector<1x128xf32>
    %360 = arith.addf %359, %358 : vector<1x128xf32>
    %361 = arith.divf %359, %360 : vector<1x128xf32>
    %362 = math.tanh %341 : vector<1x128xf32>
    %363 = vector.extract_strided_slice %361 {offsets = [0, 0], sizes = [1, 32], strides = [1, 1]} : vector<1x128xf32> to vector<1x32xf32>
    %364 = vector.extract_strided_slice %361 {offsets = [0, 32], sizes = [1, 32], strides = [1, 1]} : vector<1x128xf32> to vector<1x32xf32>
    %365 = vector.extract_strided_slice %362 {offsets = [0, 64], sizes = [1, 32], strides = [1, 1]} : vector<1x128xf32> to vector<1x32xf32>
    %366 = vector.extract_strided_slice %361 {offsets = [0, 96], sizes = [1, 32], strides = [1, 1]} : vector<1x128xf32> to vector<1x32xf32>
    %367 = arith.mulf %364, %335 : vector<1x32xf32>
    %368 = arith.mulf %363, %365 : vector<1x32xf32>
    %369 = arith.addf %367, %368 : vector<1x32xf32>
    %370 = math.tanh %369 : vector<1x32xf32>
    %371 = arith.mulf %366, %370 : vector<1x32xf32>
    %c0_137 = arith.constant 0 : index
    %c0_138 = arith.constant 0 : index
    %372 = vector.load %arg14[%c0_137, %c0_138] : memref<8x32xf32, #tpu.memory_space<vmem>>, vector<1x32xf32>
    tpu.vector_store %arg14[%c0_137, %c0_138], %356 {strides = array<i32>} : memref<8x32xf32, #tpu.memory_space<vmem>>, vector<1x32xf32>,
    %c7_139 = arith.constant 7 : index
    %c0_140 = arith.constant 0 : index
    %373 = vector.load %arg15[%c7_139, %c0_140] : memref<8x32xf32, #tpu.memory_space<vmem>>, vector<1x32xf32>
    tpu.vector_store %arg15[%c7_139, %c0_140], %371 {strides = array<i32>} : memref<8x32xf32, #tpu.memory_space<vmem>>, vector<1x32xf32>,
    %c1_141 = arith.constant 1 : index
    %c0_142 = arith.constant 0 : index
    %374 = vector.load %arg12[%c1_141, %c0_142] : memref<8x128xf32, #tpu.memory_space<vmem>>, vector<1x128xf32>
    %cst_143 = arith.constant dense<0.000000e+00> : vector<1x128xf32>
    %375 = tpu.matmul %356, %321, %cst_143 {dimension_numbers = #tpu.dot_dimension_numbers<[1], [0], [0], [1], [0, 0, 1, 1], [], []>} : vector<1x32xf32>, vector<32x128xf32>, vector<1x128xf32> -> vector<1x128xf32>
    %376 = arith.addf %374, %375 : vector<1x128xf32>
    %c6_144 = arith.constant 6 : index
    %c0_145 = arith.constant 0 : index
    %377 = vector.load %arg13[%c6_144, %c0_145] : memref<8x128xf32, #tpu.memory_space<vmem>>, vector<1x128xf32>
    %cst_146 = arith.constant dense<0.000000e+00> : vector<1x128xf32>
    %378 = tpu.matmul %371, %322, %cst_146 {dimension_numbers = #tpu.dot_dimension_numbers<[1], [0], [0], [1], [0, 0, 1, 1], [], []>} : vector<1x32xf32>, vector<32x128xf32>, vector<1x128xf32> -> vector<1x128xf32>
    %379 = arith.addf %377, %378 : vector<1x128xf32>
    %380 = arith.negf %376 : vector<1x128xf32>
    %381 = math.exp %380 : vector<1x128xf32>
    %cst_147 = arith.constant 1.000000e+00 : f32
    %382 = vector.broadcast %cst_147 : f32 to vector<1x128xf32>
    %383 = arith.addf %382, %381 : vector<1x128xf32>
    %384 = arith.divf %382, %383 : vector<1x128xf32>
    %385 = math.tanh %376 : vector<1x128xf32>
    %386 = vector.extract_strided_slice %384 {offsets = [0, 0], sizes = [1, 32], strides = [1, 1]} : vector<1x128xf32> to vector<1x32xf32>
    %387 = vector.extract_strided_slice %384 {offsets = [0, 32], sizes = [1, 32], strides = [1, 1]} : vector<1x128xf32> to vector<1x32xf32>
    %388 = vector.extract_strided_slice %385 {offsets = [0, 64], sizes = [1, 32], strides = [1, 1]} : vector<1x128xf32> to vector<1x32xf32>
    %389 = vector.extract_strided_slice %384 {offsets = [0, 96], sizes = [1, 32], strides = [1, 1]} : vector<1x128xf32> to vector<1x32xf32>
    %390 = arith.mulf %387, %354 : vector<1x32xf32>
    %391 = arith.mulf %386, %388 : vector<1x32xf32>
    %392 = arith.addf %390, %391 : vector<1x32xf32>
    %393 = math.tanh %392 : vector<1x32xf32>
    %394 = arith.mulf %389, %393 : vector<1x32xf32>
    %395 = arith.negf %379 : vector<1x128xf32>
    %396 = math.exp %395 : vector<1x128xf32>
    %cst_148 = arith.constant 1.000000e+00 : f32
    %397 = vector.broadcast %cst_148 : f32 to vector<1x128xf32>
    %398 = arith.addf %397, %396 : vector<1x128xf32>
    %399 = arith.divf %397, %398 : vector<1x128xf32>
    %400 = math.tanh %379 : vector<1x128xf32>
    %401 = vector.extract_strided_slice %399 {offsets = [0, 0], sizes = [1, 32], strides = [1, 1]} : vector<1x128xf32> to vector<1x32xf32>
    %402 = vector.extract_strided_slice %399 {offsets = [0, 32], sizes = [1, 32], strides = [1, 1]} : vector<1x128xf32> to vector<1x32xf32>
    %403 = vector.extract_strided_slice %400 {offsets = [0, 64], sizes = [1, 32], strides = [1, 1]} : vector<1x128xf32> to vector<1x32xf32>
    %404 = vector.extract_strided_slice %399 {offsets = [0, 96], sizes = [1, 32], strides = [1, 1]} : vector<1x128xf32> to vector<1x32xf32>
    %405 = arith.mulf %402, %369 : vector<1x32xf32>
    %406 = arith.mulf %401, %403 : vector<1x32xf32>
    %407 = arith.addf %405, %406 : vector<1x32xf32>
    %408 = math.tanh %407 : vector<1x32xf32>
    %409 = arith.mulf %404, %408 : vector<1x32xf32>
    %c1_149 = arith.constant 1 : index
    %c0_150 = arith.constant 0 : index
    %410 = vector.load %arg14[%c1_149, %c0_150] : memref<8x32xf32, #tpu.memory_space<vmem>>, vector<1x32xf32>
    tpu.vector_store %arg14[%c1_149, %c0_150], %394 {strides = array<i32>} : memref<8x32xf32, #tpu.memory_space<vmem>>, vector<1x32xf32>,
    %c6_151 = arith.constant 6 : index
    %c0_152 = arith.constant 0 : index
    %411 = vector.load %arg15[%c6_151, %c0_152] : memref<8x32xf32, #tpu.memory_space<vmem>>, vector<1x32xf32>
    tpu.vector_store %arg15[%c6_151, %c0_152], %409 {strides = array<i32>} : memref<8x32xf32, #tpu.memory_space<vmem>>, vector<1x32xf32>,
    %c2_153 = arith.constant 2 : index
    %c0_154 = arith.constant 0 : index
    %412 = vector.load %arg12[%c2_153, %c0_154] : memref<8x128xf32, #tpu.memory_space<vmem>>, vector<1x128xf32>
    %cst_155 = arith.constant dense<0.000000e+00> : vector<1x128xf32>
    %413 = tpu.matmul %394, %321, %cst_155 {dimension_numbers = #tpu.dot_dimension_numbers<[1], [0], [0], [1], [0, 0, 1, 1], [], []>} : vector<1x32xf32>, vector<32x128xf32>, vector<1x128xf32> -> vector<1x128xf32>
    %414 = arith.addf %412, %413 : vector<1x128xf32>
    %c5_156 = arith.constant 5 : index
    %c0_157 = arith.constant 0 : index
    %415 = vector.load %arg13[%c5_156, %c0_157] : memref<8x128xf32, #tpu.memory_space<vmem>>, vector<1x128xf32>
    %cst_158 = arith.constant dense<0.000000e+00> : vector<1x128xf32>
    %416 = tpu.matmul %409, %322, %cst_158 {dimension_numbers = #tpu.dot_dimension_numbers<[1], [0], [0], [1], [0, 0, 1, 1], [], []>} : vector<1x32xf32>, vector<32x128xf32>, vector<1x128xf32> -> vector<1x128xf32>
    %417 = arith.addf %415, %416 : vector<1x128xf32>
    %418 = arith.negf %414 : vector<1x128xf32>
    %419 = math.exp %418 : vector<1x128xf32>
    %cst_159 = arith.constant 1.000000e+00 : f32
    %420 = vector.broadcast %cst_159 : f32 to vector<1x128xf32>
    %421 = arith.addf %420, %419 : vector<1x128xf32>
    %422 = arith.divf %420, %421 : vector<1x128xf32>
    %423 = math.tanh %414 : vector<1x128xf32>
    %424 = vector.extract_strided_slice %422 {offsets = [0, 0], sizes = [1, 32], strides = [1, 1]} : vector<1x128xf32> to vector<1x32xf32>
    %425 = vector.extract_strided_slice %422 {offsets = [0, 32], sizes = [1, 32], strides = [1, 1]} : vector<1x128xf32> to vector<1x32xf32>
    %426 = vector.extract_strided_slice %423 {offsets = [0, 64], sizes = [1, 32], strides = [1, 1]} : vector<1x128xf32> to vector<1x32xf32>
    %427 = vector.extract_strided_slice %422 {offsets = [0, 96], sizes = [1, 32], strides = [1, 1]} : vector<1x128xf32> to vector<1x32xf32>
    %428 = arith.mulf %425, %392 : vector<1x32xf32>
    %429 = arith.mulf %424, %426 : vector<1x32xf32>
    %430 = arith.addf %428, %429 : vector<1x32xf32>
    %431 = math.tanh %430 : vector<1x32xf32>
    %432 = arith.mulf %427, %431 : vector<1x32xf32>
    %433 = arith.negf %417 : vector<1x128xf32>
    %434 = math.exp %433 : vector<1x128xf32>
    %cst_160 = arith.constant 1.000000e+00 : f32
    %435 = vector.broadcast %cst_160 : f32 to vector<1x128xf32>
    %436 = arith.addf %435, %434 : vector<1x128xf32>
    %437 = arith.divf %435, %436 : vector<1x128xf32>
    %438 = math.tanh %417 : vector<1x128xf32>
    %439 = vector.extract_strided_slice %437 {offsets = [0, 0], sizes = [1, 32], strides = [1, 1]} : vector<1x128xf32> to vector<1x32xf32>
    %440 = vector.extract_strided_slice %437 {offsets = [0, 32], sizes = [1, 32], strides = [1, 1]} : vector<1x128xf32> to vector<1x32xf32>
    %441 = vector.extract_strided_slice %438 {offsets = [0, 64], sizes = [1, 32], strides = [1, 1]} : vector<1x128xf32> to vector<1x32xf32>
    %442 = vector.extract_strided_slice %437 {offsets = [0, 96], sizes = [1, 32], strides = [1, 1]} : vector<1x128xf32> to vector<1x32xf32>
    %443 = arith.mulf %440, %407 : vector<1x32xf32>
    %444 = arith.mulf %439, %441 : vector<1x32xf32>
    %445 = arith.addf %443, %444 : vector<1x32xf32>
    %446 = math.tanh %445 : vector<1x32xf32>
    %447 = arith.mulf %442, %446 : vector<1x32xf32>
    %c2_161 = arith.constant 2 : index
    %c0_162 = arith.constant 0 : index
    %448 = vector.load %arg14[%c2_161, %c0_162] : memref<8x32xf32, #tpu.memory_space<vmem>>, vector<1x32xf32>
    tpu.vector_store %arg14[%c2_161, %c0_162], %432 {strides = array<i32>} : memref<8x32xf32, #tpu.memory_space<vmem>>, vector<1x32xf32>,
    %c5_163 = arith.constant 5 : index
    %c0_164 = arith.constant 0 : index
    %449 = vector.load %arg15[%c5_163, %c0_164] : memref<8x32xf32, #tpu.memory_space<vmem>>, vector<1x32xf32>
    tpu.vector_store %arg15[%c5_163, %c0_164], %447 {strides = array<i32>} : memref<8x32xf32, #tpu.memory_space<vmem>>, vector<1x32xf32>,
    %c3_165 = arith.constant 3 : index
    %c0_166 = arith.constant 0 : index
    %450 = vector.load %arg12[%c3_165, %c0_166] : memref<8x128xf32, #tpu.memory_space<vmem>>, vector<1x128xf32>
    %cst_167 = arith.constant dense<0.000000e+00> : vector<1x128xf32>
    %451 = tpu.matmul %432, %321, %cst_167 {dimension_numbers = #tpu.dot_dimension_numbers<[1], [0], [0], [1], [0, 0, 1, 1], [], []>} : vector<1x32xf32>, vector<32x128xf32>, vector<1x128xf32> -> vector<1x128xf32>
    %452 = arith.addf %450, %451 : vector<1x128xf32>
    %c4_168 = arith.constant 4 : index
    %c0_169 = arith.constant 0 : index
    %453 = vector.load %arg13[%c4_168, %c0_169] : memref<8x128xf32, #tpu.memory_space<vmem>>, vector<1x128xf32>
    %cst_170 = arith.constant dense<0.000000e+00> : vector<1x128xf32>
    %454 = tpu.matmul %447, %322, %cst_170 {dimension_numbers = #tpu.dot_dimension_numbers<[1], [0], [0], [1], [0, 0, 1, 1], [], []>} : vector<1x32xf32>, vector<32x128xf32>, vector<1x128xf32> -> vector<1x128xf32>
    %455 = arith.addf %453, %454 : vector<1x128xf32>
    %456 = arith.negf %452 : vector<1x128xf32>
    %457 = math.exp %456 : vector<1x128xf32>
    %cst_171 = arith.constant 1.000000e+00 : f32
    %458 = vector.broadcast %cst_171 : f32 to vector<1x128xf32>
    %459 = arith.addf %458, %457 : vector<1x128xf32>
    %460 = arith.divf %458, %459 : vector<1x128xf32>
    %461 = math.tanh %452 : vector<1x128xf32>
    %462 = vector.extract_strided_slice %460 {offsets = [0, 0], sizes = [1, 32], strides = [1, 1]} : vector<1x128xf32> to vector<1x32xf32>
    %463 = vector.extract_strided_slice %460 {offsets = [0, 32], sizes = [1, 32], strides = [1, 1]} : vector<1x128xf32> to vector<1x32xf32>
    %464 = vector.extract_strided_slice %461 {offsets = [0, 64], sizes = [1, 32], strides = [1, 1]} : vector<1x128xf32> to vector<1x32xf32>
    %465 = vector.extract_strided_slice %460 {offsets = [0, 96], sizes = [1, 32], strides = [1, 1]} : vector<1x128xf32> to vector<1x32xf32>
    %466 = arith.mulf %463, %430 : vector<1x32xf32>
    %467 = arith.mulf %462, %464 : vector<1x32xf32>
    %468 = arith.addf %466, %467 : vector<1x32xf32>
    %469 = math.tanh %468 : vector<1x32xf32>
    %470 = arith.mulf %465, %469 : vector<1x32xf32>
    %471 = arith.negf %455 : vector<1x128xf32>
    %472 = math.exp %471 : vector<1x128xf32>
    %cst_172 = arith.constant 1.000000e+00 : f32
    %473 = vector.broadcast %cst_172 : f32 to vector<1x128xf32>
    %474 = arith.addf %473, %472 : vector<1x128xf32>
    %475 = arith.divf %473, %474 : vector<1x128xf32>
    %476 = math.tanh %455 : vector<1x128xf32>
    %477 = vector.extract_strided_slice %475 {offsets = [0, 0], sizes = [1, 32], strides = [1, 1]} : vector<1x128xf32> to vector<1x32xf32>
    %478 = vector.extract_strided_slice %475 {offsets = [0, 32], sizes = [1, 32], strides = [1, 1]} : vector<1x128xf32> to vector<1x32xf32>
    %479 = vector.extract_strided_slice %476 {offsets = [0, 64], sizes = [1, 32], strides = [1, 1]} : vector<1x128xf32> to vector<1x32xf32>
    %480 = vector.extract_strided_slice %475 {offsets = [0, 96], sizes = [1, 32], strides = [1, 1]} : vector<1x128xf32> to vector<1x32xf32>
    %481 = arith.mulf %478, %445 : vector<1x32xf32>
    %482 = arith.mulf %477, %479 : vector<1x32xf32>
    %483 = arith.addf %481, %482 : vector<1x32xf32>
    %484 = math.tanh %483 : vector<1x32xf32>
    %485 = arith.mulf %480, %484 : vector<1x32xf32>
    %c3_173 = arith.constant 3 : index
    %c0_174 = arith.constant 0 : index
    %486 = vector.load %arg14[%c3_173, %c0_174] : memref<8x32xf32, #tpu.memory_space<vmem>>, vector<1x32xf32>
    tpu.vector_store %arg14[%c3_173, %c0_174], %470 {strides = array<i32>} : memref<8x32xf32, #tpu.memory_space<vmem>>, vector<1x32xf32>,
    %c4_175 = arith.constant 4 : index
    %c0_176 = arith.constant 0 : index
    %487 = vector.load %arg15[%c4_175, %c0_176] : memref<8x32xf32, #tpu.memory_space<vmem>>, vector<1x32xf32>
    tpu.vector_store %arg15[%c4_175, %c0_176], %485 {strides = array<i32>} : memref<8x32xf32, #tpu.memory_space<vmem>>, vector<1x32xf32>,
    %c4_177 = arith.constant 4 : index
    %c0_178 = arith.constant 0 : index
    %488 = vector.load %arg12[%c4_177, %c0_178] : memref<8x128xf32, #tpu.memory_space<vmem>>, vector<1x128xf32>
    %cst_179 = arith.constant dense<0.000000e+00> : vector<1x128xf32>
    %489 = tpu.matmul %470, %321, %cst_179 {dimension_numbers = #tpu.dot_dimension_numbers<[1], [0], [0], [1], [0, 0, 1, 1], [], []>} : vector<1x32xf32>, vector<32x128xf32>, vector<1x128xf32> -> vector<1x128xf32>
    %490 = arith.addf %488, %489 : vector<1x128xf32>
    %c3_180 = arith.constant 3 : index
    %c0_181 = arith.constant 0 : index
    %491 = vector.load %arg13[%c3_180, %c0_181] : memref<8x128xf32, #tpu.memory_space<vmem>>, vector<1x128xf32>
    %cst_182 = arith.constant dense<0.000000e+00> : vector<1x128xf32>
    %492 = tpu.matmul %485, %322, %cst_182 {dimension_numbers = #tpu.dot_dimension_numbers<[1], [0], [0], [1], [0, 0, 1, 1], [], []>} : vector<1x32xf32>, vector<32x128xf32>, vector<1x128xf32> -> vector<1x128xf32>
    %493 = arith.addf %491, %492 : vector<1x128xf32>
    %494 = arith.negf %490 : vector<1x128xf32>
    %495 = math.exp %494 : vector<1x128xf32>
    %cst_183 = arith.constant 1.000000e+00 : f32
    %496 = vector.broadcast %cst_183 : f32 to vector<1x128xf32>
    %497 = arith.addf %496, %495 : vector<1x128xf32>
    %498 = arith.divf %496, %497 : vector<1x128xf32>
    %499 = math.tanh %490 : vector<1x128xf32>
    %500 = vector.extract_strided_slice %498 {offsets = [0, 0], sizes = [1, 32], strides = [1, 1]} : vector<1x128xf32> to vector<1x32xf32>
    %501 = vector.extract_strided_slice %498 {offsets = [0, 32], sizes = [1, 32], strides = [1, 1]} : vector<1x128xf32> to vector<1x32xf32>
    %502 = vector.extract_strided_slice %499 {offsets = [0, 64], sizes = [1, 32], strides = [1, 1]} : vector<1x128xf32> to vector<1x32xf32>
    %503 = vector.extract_strided_slice %498 {offsets = [0, 96], sizes = [1, 32], strides = [1, 1]} : vector<1x128xf32> to vector<1x32xf32>
    %504 = arith.mulf %501, %468 : vector<1x32xf32>
    %505 = arith.mulf %500, %502 : vector<1x32xf32>
    %506 = arith.addf %504, %505 : vector<1x32xf32>
    %507 = math.tanh %506 : vector<1x32xf32>
    %508 = arith.mulf %503, %507 : vector<1x32xf32>
    %509 = arith.negf %493 : vector<1x128xf32>
    %510 = math.exp %509 : vector<1x128xf32>
    %cst_184 = arith.constant 1.000000e+00 : f32
    %511 = vector.broadcast %cst_184 : f32 to vector<1x128xf32>
    %512 = arith.addf %511, %510 : vector<1x128xf32>
    %513 = arith.divf %511, %512 : vector<1x128xf32>
    %514 = math.tanh %493 : vector<1x128xf32>
    %515 = vector.extract_strided_slice %513 {offsets = [0, 0], sizes = [1, 32], strides = [1, 1]} : vector<1x128xf32> to vector<1x32xf32>
    %516 = vector.extract_strided_slice %513 {offsets = [0, 32], sizes = [1, 32], strides = [1, 1]} : vector<1x128xf32> to vector<1x32xf32>
    %517 = vector.extract_strided_slice %514 {offsets = [0, 64], sizes = [1, 32], strides = [1, 1]} : vector<1x128xf32> to vector<1x32xf32>
    %518 = vector.extract_strided_slice %513 {offsets = [0, 96], sizes = [1, 32], strides = [1, 1]} : vector<1x128xf32> to vector<1x32xf32>
    %519 = arith.mulf %516, %483 : vector<1x32xf32>
    %520 = arith.mulf %515, %517 : vector<1x32xf32>
    %521 = arith.addf %519, %520 : vector<1x32xf32>
    %522 = math.tanh %521 : vector<1x32xf32>
    %523 = arith.mulf %518, %522 : vector<1x32xf32>
    %c4_185 = arith.constant 4 : index
    %c0_186 = arith.constant 0 : index
    %524 = vector.load %arg14[%c4_185, %c0_186] : memref<8x32xf32, #tpu.memory_space<vmem>>, vector<1x32xf32>
    tpu.vector_store %arg14[%c4_185, %c0_186], %508 {strides = array<i32>} : memref<8x32xf32, #tpu.memory_space<vmem>>, vector<1x32xf32>,
    %c3_187 = arith.constant 3 : index
    %c0_188 = arith.constant 0 : index
    %525 = vector.load %arg15[%c3_187, %c0_188] : memref<8x32xf32, #tpu.memory_space<vmem>>, vector<1x32xf32>
    tpu.vector_store %arg15[%c3_187, %c0_188], %523 {strides = array<i32>} : memref<8x32xf32, #tpu.memory_space<vmem>>, vector<1x32xf32>,
    %c5_189 = arith.constant 5 : index
    %c0_190 = arith.constant 0 : index
    %526 = vector.load %arg12[%c5_189, %c0_190] : memref<8x128xf32, #tpu.memory_space<vmem>>, vector<1x128xf32>
    %cst_191 = arith.constant dense<0.000000e+00> : vector<1x128xf32>
    %527 = tpu.matmul %508, %321, %cst_191 {dimension_numbers = #tpu.dot_dimension_numbers<[1], [0], [0], [1], [0, 0, 1, 1], [], []>} : vector<1x32xf32>, vector<32x128xf32>, vector<1x128xf32> -> vector<1x128xf32>
    %528 = arith.addf %526, %527 : vector<1x128xf32>
    %c2_192 = arith.constant 2 : index
    %c0_193 = arith.constant 0 : index
    %529 = vector.load %arg13[%c2_192, %c0_193] : memref<8x128xf32, #tpu.memory_space<vmem>>, vector<1x128xf32>
    %cst_194 = arith.constant dense<0.000000e+00> : vector<1x128xf32>
    %530 = tpu.matmul %523, %322, %cst_194 {dimension_numbers = #tpu.dot_dimension_numbers<[1], [0], [0], [1], [0, 0, 1, 1], [], []>} : vector<1x32xf32>, vector<32x128xf32>, vector<1x128xf32> -> vector<1x128xf32>
    %531 = arith.addf %529, %530 : vector<1x128xf32>
    %532 = arith.negf %528 : vector<1x128xf32>
    %533 = math.exp %532 : vector<1x128xf32>
    %cst_195 = arith.constant 1.000000e+00 : f32
    %534 = vector.broadcast %cst_195 : f32 to vector<1x128xf32>
    %535 = arith.addf %534, %533 : vector<1x128xf32>
    %536 = arith.divf %534, %535 : vector<1x128xf32>
    %537 = math.tanh %528 : vector<1x128xf32>
    %538 = vector.extract_strided_slice %536 {offsets = [0, 0], sizes = [1, 32], strides = [1, 1]} : vector<1x128xf32> to vector<1x32xf32>
    %539 = vector.extract_strided_slice %536 {offsets = [0, 32], sizes = [1, 32], strides = [1, 1]} : vector<1x128xf32> to vector<1x32xf32>
    %540 = vector.extract_strided_slice %537 {offsets = [0, 64], sizes = [1, 32], strides = [1, 1]} : vector<1x128xf32> to vector<1x32xf32>
    %541 = vector.extract_strided_slice %536 {offsets = [0, 96], sizes = [1, 32], strides = [1, 1]} : vector<1x128xf32> to vector<1x32xf32>
    %542 = arith.mulf %539, %506 : vector<1x32xf32>
    %543 = arith.mulf %538, %540 : vector<1x32xf32>
    %544 = arith.addf %542, %543 : vector<1x32xf32>
    %545 = math.tanh %544 : vector<1x32xf32>
    %546 = arith.mulf %541, %545 : vector<1x32xf32>
    %547 = arith.negf %531 : vector<1x128xf32>
    %548 = math.exp %547 : vector<1x128xf32>
    %cst_196 = arith.constant 1.000000e+00 : f32
    %549 = vector.broadcast %cst_196 : f32 to vector<1x128xf32>
    %550 = arith.addf %549, %548 : vector<1x128xf32>
    %551 = arith.divf %549, %550 : vector<1x128xf32>
    %552 = math.tanh %531 : vector<1x128xf32>
    %553 = vector.extract_strided_slice %551 {offsets = [0, 0], sizes = [1, 32], strides = [1, 1]} : vector<1x128xf32> to vector<1x32xf32>
    %554 = vector.extract_strided_slice %551 {offsets = [0, 32], sizes = [1, 32], strides = [1, 1]} : vector<1x128xf32> to vector<1x32xf32>
    %555 = vector.extract_strided_slice %552 {offsets = [0, 64], sizes = [1, 32], strides = [1, 1]} : vector<1x128xf32> to vector<1x32xf32>
    %556 = vector.extract_strided_slice %551 {offsets = [0, 96], sizes = [1, 32], strides = [1, 1]} : vector<1x128xf32> to vector<1x32xf32>
    %557 = arith.mulf %554, %521 : vector<1x32xf32>
    %558 = arith.mulf %553, %555 : vector<1x32xf32>
    %559 = arith.addf %557, %558 : vector<1x32xf32>
    %560 = math.tanh %559 : vector<1x32xf32>
    %561 = arith.mulf %556, %560 : vector<1x32xf32>
    %c5_197 = arith.constant 5 : index
    %c0_198 = arith.constant 0 : index
    %562 = vector.load %arg14[%c5_197, %c0_198] : memref<8x32xf32, #tpu.memory_space<vmem>>, vector<1x32xf32>
    tpu.vector_store %arg14[%c5_197, %c0_198], %546 {strides = array<i32>} : memref<8x32xf32, #tpu.memory_space<vmem>>, vector<1x32xf32>,
    %c2_199 = arith.constant 2 : index
    %c0_200 = arith.constant 0 : index
    %563 = vector.load %arg15[%c2_199, %c0_200] : memref<8x32xf32, #tpu.memory_space<vmem>>, vector<1x32xf32>
    tpu.vector_store %arg15[%c2_199, %c0_200], %561 {strides = array<i32>} : memref<8x32xf32, #tpu.memory_space<vmem>>, vector<1x32xf32>,
    %c6_201 = arith.constant 6 : index
    %c0_202 = arith.constant 0 : index
    %564 = vector.load %arg12[%c6_201, %c0_202] : memref<8x128xf32, #tpu.memory_space<vmem>>, vector<1x128xf32>
    %cst_203 = arith.constant dense<0.000000e+00> : vector<1x128xf32>
    %565 = tpu.matmul %546, %321, %cst_203 {dimension_numbers = #tpu.dot_dimension_numbers<[1], [0], [0], [1], [0, 0, 1, 1], [], []>} : vector<1x32xf32>, vector<32x128xf32>, vector<1x128xf32> -> vector<1x128xf32>
    %566 = arith.addf %564, %565 : vector<1x128xf32>
    %c1_204 = arith.constant 1 : index
    %c0_205 = arith.constant 0 : index
    %567 = vector.load %arg13[%c1_204, %c0_205] : memref<8x128xf32, #tpu.memory_space<vmem>>, vector<1x128xf32>
    %cst_206 = arith.constant dense<0.000000e+00> : vector<1x128xf32>
    %568 = tpu.matmul %561, %322, %cst_206 {dimension_numbers = #tpu.dot_dimension_numbers<[1], [0], [0], [1], [0, 0, 1, 1], [], []>} : vector<1x32xf32>, vector<32x128xf32>, vector<1x128xf32> -> vector<1x128xf32>
    %569 = arith.addf %567, %568 : vector<1x128xf32>
    %570 = arith.negf %566 : vector<1x128xf32>
    %571 = math.exp %570 : vector<1x128xf32>
    %cst_207 = arith.constant 1.000000e+00 : f32
    %572 = vector.broadcast %cst_207 : f32 to vector<1x128xf32>
    %573 = arith.addf %572, %571 : vector<1x128xf32>
    %574 = arith.divf %572, %573 : vector<1x128xf32>
    %575 = math.tanh %566 : vector<1x128xf32>
    %576 = vector.extract_strided_slice %574 {offsets = [0, 0], sizes = [1, 32], strides = [1, 1]} : vector<1x128xf32> to vector<1x32xf32>
    %577 = vector.extract_strided_slice %574 {offsets = [0, 32], sizes = [1, 32], strides = [1, 1]} : vector<1x128xf32> to vector<1x32xf32>
    %578 = vector.extract_strided_slice %575 {offsets = [0, 64], sizes = [1, 32], strides = [1, 1]} : vector<1x128xf32> to vector<1x32xf32>
    %579 = vector.extract_strided_slice %574 {offsets = [0, 96], sizes = [1, 32], strides = [1, 1]} : vector<1x128xf32> to vector<1x32xf32>
    %580 = arith.mulf %577, %544 : vector<1x32xf32>
    %581 = arith.mulf %576, %578 : vector<1x32xf32>
    %582 = arith.addf %580, %581 : vector<1x32xf32>
    %583 = math.tanh %582 : vector<1x32xf32>
    %584 = arith.mulf %579, %583 : vector<1x32xf32>
    %585 = arith.negf %569 : vector<1x128xf32>
    %586 = math.exp %585 : vector<1x128xf32>
    %cst_208 = arith.constant 1.000000e+00 : f32
    %587 = vector.broadcast %cst_208 : f32 to vector<1x128xf32>
    %588 = arith.addf %587, %586 : vector<1x128xf32>
    %589 = arith.divf %587, %588 : vector<1x128xf32>
    %590 = math.tanh %569 : vector<1x128xf32>
    %591 = vector.extract_strided_slice %589 {offsets = [0, 0], sizes = [1, 32], strides = [1, 1]} : vector<1x128xf32> to vector<1x32xf32>
    %592 = vector.extract_strided_slice %589 {offsets = [0, 32], sizes = [1, 32], strides = [1, 1]} : vector<1x128xf32> to vector<1x32xf32>
    %593 = vector.extract_strided_slice %590 {offsets = [0, 64], sizes = [1, 32], strides = [1, 1]} : vector<1x128xf32> to vector<1x32xf32>
    %594 = vector.extract_strided_slice %589 {offsets = [0, 96], sizes = [1, 32], strides = [1, 1]} : vector<1x128xf32> to vector<1x32xf32>
    %595 = arith.mulf %592, %559 : vector<1x32xf32>
    %596 = arith.mulf %591, %593 : vector<1x32xf32>
    %597 = arith.addf %595, %596 : vector<1x32xf32>
    %598 = math.tanh %597 : vector<1x32xf32>
    %599 = arith.mulf %594, %598 : vector<1x32xf32>
    %c6_209 = arith.constant 6 : index
    %c0_210 = arith.constant 0 : index
    %600 = vector.load %arg14[%c6_209, %c0_210] : memref<8x32xf32, #tpu.memory_space<vmem>>, vector<1x32xf32>
    tpu.vector_store %arg14[%c6_209, %c0_210], %584 {strides = array<i32>} : memref<8x32xf32, #tpu.memory_space<vmem>>, vector<1x32xf32>,
    %c1_211 = arith.constant 1 : index
    %c0_212 = arith.constant 0 : index
    %601 = vector.load %arg15[%c1_211, %c0_212] : memref<8x32xf32, #tpu.memory_space<vmem>>, vector<1x32xf32>
    tpu.vector_store %arg15[%c1_211, %c0_212], %599 {strides = array<i32>} : memref<8x32xf32, #tpu.memory_space<vmem>>, vector<1x32xf32>,
    %c7_213 = arith.constant 7 : index
    %c0_214 = arith.constant 0 : index
    %602 = vector.load %arg12[%c7_213, %c0_214] : memref<8x128xf32, #tpu.memory_space<vmem>>, vector<1x128xf32>
    %cst_215 = arith.constant dense<0.000000e+00> : vector<1x128xf32>
    %603 = tpu.matmul %584, %321, %cst_215 {dimension_numbers = #tpu.dot_dimension_numbers<[1], [0], [0], [1], [0, 0, 1, 1], [], []>} : vector<1x32xf32>, vector<32x128xf32>, vector<1x128xf32> -> vector<1x128xf32>
    %604 = arith.addf %602, %603 : vector<1x128xf32>
    %c0_216 = arith.constant 0 : index
    %c0_217 = arith.constant 0 : index
    %605 = vector.load %arg13[%c0_216, %c0_217] : memref<8x128xf32, #tpu.memory_space<vmem>>, vector<1x128xf32>
    %cst_218 = arith.constant dense<0.000000e+00> : vector<1x128xf32>
    %606 = tpu.matmul %599, %322, %cst_218 {dimension_numbers = #tpu.dot_dimension_numbers<[1], [0], [0], [1], [0, 0, 1, 1], [], []>} : vector<1x32xf32>, vector<32x128xf32>, vector<1x128xf32> -> vector<1x128xf32>
    %607 = arith.addf %605, %606 : vector<1x128xf32>
    %608 = arith.negf %604 : vector<1x128xf32>
    %609 = math.exp %608 : vector<1x128xf32>
    %cst_219 = arith.constant 1.000000e+00 : f32
    %610 = vector.broadcast %cst_219 : f32 to vector<1x128xf32>
    %611 = arith.addf %610, %609 : vector<1x128xf32>
    %612 = arith.divf %610, %611 : vector<1x128xf32>
    %613 = math.tanh %604 : vector<1x128xf32>
    %614 = vector.extract_strided_slice %612 {offsets = [0, 0], sizes = [1, 32], strides = [1, 1]} : vector<1x128xf32> to vector<1x32xf32>
    %615 = vector.extract_strided_slice %612 {offsets = [0, 32], sizes = [1, 32], strides = [1, 1]} : vector<1x128xf32> to vector<1x32xf32>
    %616 = vector.extract_strided_slice %613 {offsets = [0, 64], sizes = [1, 32], strides = [1, 1]} : vector<1x128xf32> to vector<1x32xf32>
    %617 = vector.extract_strided_slice %612 {offsets = [0, 96], sizes = [1, 32], strides = [1, 1]} : vector<1x128xf32> to vector<1x32xf32>
    %618 = arith.mulf %615, %582 : vector<1x32xf32>
    %619 = arith.mulf %614, %616 : vector<1x32xf32>
    %620 = arith.addf %618, %619 : vector<1x32xf32>
    %621 = math.tanh %620 : vector<1x32xf32>
    %622 = arith.mulf %617, %621 : vector<1x32xf32>
    %623 = arith.negf %607 : vector<1x128xf32>
    %624 = math.exp %623 : vector<1x128xf32>
    %cst_220 = arith.constant 1.000000e+00 : f32
    %625 = vector.broadcast %cst_220 : f32 to vector<1x128xf32>
    %626 = arith.addf %625, %624 : vector<1x128xf32>
    %627 = arith.divf %625, %626 : vector<1x128xf32>
    %628 = math.tanh %607 : vector<1x128xf32>
    %629 = vector.extract_strided_slice %627 {offsets = [0, 0], sizes = [1, 32], strides = [1, 1]} : vector<1x128xf32> to vector<1x32xf32>
    %630 = vector.extract_strided_slice %627 {offsets = [0, 32], sizes = [1, 32], strides = [1, 1]} : vector<1x128xf32> to vector<1x32xf32>
    %631 = vector.extract_strided_slice %628 {offsets = [0, 64], sizes = [1, 32], strides = [1, 1]} : vector<1x128xf32> to vector<1x32xf32>
    %632 = vector.extract_strided_slice %627 {offsets = [0, 96], sizes = [1, 32], strides = [1, 1]} : vector<1x128xf32> to vector<1x32xf32>
    %633 = arith.mulf %630, %597 : vector<1x32xf32>
    %634 = arith.mulf %629, %631 : vector<1x32xf32>
    %635 = arith.addf %633, %634 : vector<1x32xf32>
    %636 = math.tanh %635 : vector<1x32xf32>
    %637 = arith.mulf %632, %636 : vector<1x32xf32>
    %c7_221 = arith.constant 7 : index
    %c0_222 = arith.constant 0 : index
    %638 = vector.load %arg14[%c7_221, %c0_222] : memref<8x32xf32, #tpu.memory_space<vmem>>, vector<1x32xf32>
    tpu.vector_store %arg14[%c7_221, %c0_222], %622 {strides = array<i32>} : memref<8x32xf32, #tpu.memory_space<vmem>>, vector<1x32xf32>,
    %c0_223 = arith.constant 0 : index
    %c0_224 = arith.constant 0 : index
    %639 = vector.load %arg15[%c0_223, %c0_224] : memref<8x32xf32, #tpu.memory_space<vmem>>, vector<1x32xf32>
    tpu.vector_store %arg15[%c0_223, %c0_224], %637 {strides = array<i32>} : memref<8x32xf32, #tpu.memory_space<vmem>>, vector<1x32xf32>,
    %c2_225 = arith.constant 2 : index
    %c0_226 = arith.constant 0 : index
    %640 = vector.load %arg10[%c2_225, %c0_226] : memref<4x32xf32, #tpu.memory_space<vmem>>, vector<1x32xf32>
    tpu.vector_store %arg10[%c2_225, %c0_226], %622 {strides = array<i32>} : memref<4x32xf32, #tpu.memory_space<vmem>>, vector<1x32xf32>,
    %c3_227 = arith.constant 3 : index
    %c0_228 = arith.constant 0 : index
    %641 = vector.load %arg10[%c3_227, %c0_228] : memref<4x32xf32, #tpu.memory_space<vmem>>, vector<1x32xf32>
    tpu.vector_store %arg10[%c3_227, %c0_228], %637 {strides = array<i32>} : memref<4x32xf32, #tpu.memory_space<vmem>>, vector<1x32xf32>,
    %c2_229 = arith.constant 2 : index
    %c0_230 = arith.constant 0 : index
    %642 = vector.load %arg11[%c2_229, %c0_230] : memref<4x32xf32, #tpu.memory_space<vmem>>, vector<1x32xf32>
    tpu.vector_store %arg11[%c2_229, %c0_230], %620 {strides = array<i32>} : memref<4x32xf32, #tpu.memory_space<vmem>>, vector<1x32xf32>,
    %c3_231 = arith.constant 3 : index
    %c0_232 = arith.constant 0 : index
    %643 = vector.load %arg11[%c3_231, %c0_232] : memref<4x32xf32, #tpu.memory_space<vmem>>, vector<1x32xf32>
    tpu.vector_store %arg11[%c3_231, %c0_232], %635 {strides = array<i32>} : memref<4x32xf32, #tpu.memory_space<vmem>>, vector<1x32xf32>,
    %c0_233 = arith.constant 0 : index
    %c0_234 = arith.constant 0 : index
    %644 = vector.load %arg14[%c0_233, %c0_234] : memref<8x32xf32, #tpu.memory_space<vmem>>, vector<8x32xf32>
    %c0_235 = arith.constant 0 : index
    %c0_236 = arith.constant 0 : index
    %645 = vector.load %arg15[%c0_235, %c0_236] : memref<8x32xf32, #tpu.memory_space<vmem>>, vector<8x32xf32>
    %646 = arith.addf %644, %645 : vector<8x32xf32>
    %c0_237 = arith.constant 0 : index
    %c0_238 = arith.constant 0 : index
    %647 = vector.load %arg0[%c0_237, %c0_238] : memref<8x32xf32, #tpu.memory_space<vmem>>, vector<8x32xf32>
    %648 = arith.addf %646, %647 : vector<8x32xf32>
    %c0_239 = arith.constant 0 : index
    %c0_240 = arith.constant 0 : index
    %649 = vector.load %arg9[%c0_239, %c0_240] : memref<8x32xf32, #tpu.memory_space<vmem>>, vector<8x32xf32>
    tpu.vector_store %arg9[%c0_239, %c0_240], %648 {strides = array<i32>} : memref<8x32xf32, #tpu.memory_space<vmem>>, vector<8x32xf32>,
    return
  }
}

</mosaic_0001>

<llo_original>
// kernel: bidirectional_lstm_forward.1
$region0: #{bidirectional_lstm_forward.1}
  #allocation0 [shape = 'u32[]', space=smem, size = 0x4, offset = 0x4, fixed_abs, tag = 'smem constant byte address 0x4 - core index']
  #allocation1 [shape = 'u32[144,128]{1,0:T(1,128)}', space=vmem, size = 0x12000, scoped, tag = 'internal scratch']
  #allocation2 [shape = 'f32[8,128]{1,0:T(8,128)}', space=vmem, size = 0x1000, scoped, tag = 'scratch operand']
  #allocation3 [shape = 'f32[8,128]{1,0:T(8,128)}', space=vmem, size = 0x1000, scoped, tag = 'scratch operand']
  #allocation4 [shape = 'f32[8,32]{1,0:T(8,128)}', space=vmem, size = 0x1000, scoped, tag = 'scratch operand']
  #allocation5 [shape = 'f32[8,32]{1,0:T(8,128)}', space=vmem, size = 0x1000, scoped, tag = 'scratch operand']
  %s0 = inlined_call_operand.vmem [shape: f32[8,32], index: 0, kind: input, shape index: {}]
  %s1 = inlined_call_operand.vmem [shape: f32[32,256], index: 1, kind: input, shape index: {}]
  %s2 = inlined_call_operand.vmem [shape: f32[1,256], index: 2, kind: input, shape index: {}]
  %s3 = inlined_call_operand.vmem [shape: f32[32,128], index: 3, kind: input, shape index: {}]
  %s4 = inlined_call_operand.vmem [shape: f32[32,128], index: 4, kind: input, shape index: {}]
  %s5 = inlined_call_operand.vmem [shape: f32[64,256], index: 5, kind: input, shape index: {}]
  %s6 = inlined_call_operand.vmem [shape: f32[1,256], index: 6, kind: input, shape index: {}]
  %s7 = inlined_call_operand.vmem [shape: f32[32,128], index: 7, kind: input, shape index: {}]
  %s8 = inlined_call_operand.vmem [shape: f32[32,128], index: 8, kind: input, shape index: {}]
  %s9 = inlined_call_operand.hbm [shape: f32[8,32], index: 9, kind: output, shape index: {0}]
  %s10 = inlined_call_operand.hbm [shape: f32[4,32], index: 10, kind: output, shape index: {1}]
  %s11 = inlined_call_operand.hbm [shape: f32[4,32], index: 11, kind: output, shape index: {2}]
  %12 = xla_tuple %s9, %s10, %s11
  %s13 = sld [smem:[#allocation0]]
  $region62: #{bidirectional_lstm_forward.1} parent=0
    _
  %s15 = ssub.s32 1, %s13
  %s16 = scalar_select 0, %s15, %s13
  $region1: #{bidirectional_lstm_forward.1} parent=0
    #allocation6 [shape = 'u8[4096]{0}', space=vmem, size = 0x1000, scoped, tag = 'output window, operand 0, single buffered']
    #allocation7 [shape = 's32[1]{0}', space=sflag, size = 0x4, scoped, tag = 'scoped memory for bidirectional_lstm_forward.1']
    #allocation8 [shape = 'u8[2048]{0}', space=vmem, size = 0x800, scoped, tag = 'output window, operand 1, single buffered']
    #allocation9 [shape = 's32[1]{0}', space=sflag, size = 0x4, scoped, tag = 'scoped memory for bidirectional_lstm_forward.1']
    #allocation10 [shape = 'u8[2048]{0}', space=vmem, size = 0x800, scoped, tag = 'output window, operand 2, single buffered']
    %17 = vsyncpa [#allocation7], 0
    %18 = vsyncpa [#allocation9], 0
    // Predicated region
    $region2: #{bidirectional_lstm_forward.1} parent=1 // pred_check
      _
    $region3: #{bidirectional_lstm_forward.1} parent=1 // pred_check_branch
      %20 = sbr.rel (0) target = $region5
    $region4: #{bidirectional_lstm_forward.1} parent=1 // pred_region
      _
    $region5: #{bidirectional_lstm_forward.1} parent=1 // pred_fallthru
      _
    // Predicated region
    $region6: #{bidirectional_lstm_forward.1} parent=1 // pred_check
      _
    $region7: #{bidirectional_lstm_forward.1} parent=1 // pred_check_branch
      %22 = sbr.rel (0) target = $region9
    $region8: #{bidirectional_lstm_forward.1} parent=1 // pred_region
      _
    $region9: #{bidirectional_lstm_forward.1} parent=1 // pred_fallthru
      _
    // Predicated region
    $region10: #{bidirectional_lstm_forward.1} parent=1 // pred_check
      _
    $region11: #{bidirectional_lstm_forward.1} parent=1 // pred_check_branch
      %24 = sbr.rel (0) target = $region13
    $region12: #{bidirectional_lstm_forward.1} parent=1 // pred_region
      _
    $region13: #{bidirectional_lstm_forward.1} parent=1 // pred_fallthru
      _
    // Predicated region
    $region14: #{bidirectional_lstm_forward.1} parent=1 // pred_check
      _
    $region15: #{bidirectional_lstm_forward.1} parent=1 // pred_check_branch
      %26 = sbr.rel (0) target = $region17
    $region16: #{bidirectional_lstm_forward.1} parent=1 // pred_region
      _
    $region17: #{bidirectional_lstm_forward.1} parent=1 // pred_fallthru
      _
    // Predicated region
    $region18: #{bidirectional_lstm_forward.1} parent=1 // pred_check
      _
    $region19: #{bidirectional_lstm_forward.1} parent=1 // pred_check_branch
      %28 = sbr.rel (0) target = $region21
    $region20: #{bidirectional_lstm_forward.1} parent=1 // pred_region
      _
    $region21: #{bidirectional_lstm_forward.1} parent=1 // pred_fallthru
      _
    // Predicated region
    $region22: #{bidirectional_lstm_forward.1} parent=1 // pred_check
      _
    $region23: #{bidirectional_lstm_forward.1} parent=1 // pred_check_branch
      %30 = sbr.rel (0) target = $region25
    $region24: #{bidirectional_lstm_forward.1} parent=1 // pred_region
      _
    $region25: #{bidirectional_lstm_forward.1} parent=1 // pred_fallthru
      _
    // Predicated region
    $region26: #{bidirectional_lstm_forward.1} parent=1 // pred_check
      _
    $region27: #{bidirectional_lstm_forward.1} parent=1 // pred_check_branch
      %32 = sbr.rel (0) target = $region29
    $region28: #{bidirectional_lstm_forward.1} parent=1 // pred_region
      _
    $region29: #{bidirectional_lstm_forward.1} parent=1 // pred_fallthru
      _
    // Predicated region
    $region30: #{bidirectional_lstm_forward.1} parent=1 // pred_check
      _
    $region31: #{bidirectional_lstm_forward.1} parent=1 // pred_check_branch
      %34 = sbr.rel (0) target = $region33
    $region32: #{bidirectional_lstm_forward.1} parent=1 // pred_region
      _
    $region33: #{bidirectional_lstm_forward.1} parent=1 // pred_fallthru
      _
    // Predicated region
    $region34: #{bidirectional_lstm_forward.1} parent=1 // pred_check
      _
    $region35: #{bidirectional_lstm_forward.1} parent=1 // pred_check_branch
      %36 = sbr.rel (0) target = $region37
    $region36: #{bidirectional_lstm_forward.1} parent=1 // pred_region
      _
    $region37: #{bidirectional_lstm_forward.1} parent=1 // pred_fallthru
      _
    %v37 = vld [vmem:[%s3] sm:$0xff]
    %v38 = vld [vmem:[%s3 + $0x8] sm:$0xff]
    %v39 = vld [vmem:[%s3 + $0x10] sm:$0xff]
    %v40 = vld [vmem:[%s3 + $0x18] sm:$0xff]
    %v41 = vld [vmem:[%s4] sm:$0xff]
    %v42 = vld [vmem:[%s4 + $0x8] sm:$0xff]
    %v43 = vld [vmem:[%s4 + $0x10] sm:$0xff]
    %v44 = vld [vmem:[%s4 + $0x18] sm:$0xff]
    %v45 = vld [vmem:[%s2] sm:$0x3]
    %v46 = vld [vmem:[%s0] sm:$0xff]
    %v47 = vld [vmem:[%s1] sm:$0xff]
    %v48 = vld [vmem:[%s1 + $0x8] sm:$0xff]
    %v49 = vld [vmem:[%s1 + $0x10] sm:$0xff]
    %v50 = vld [vmem:[%s1 + $0x18] sm:$0xff]
    %v51 = vld [vmem:[%s1 + $0x20] sm:$0xff]
    %v52 = vld [vmem:[%s1 + $0x28] sm:$0xff]
    %v53 = vld [vmem:[%s1 + $0x30] sm:$0xff]
    %v54 = vld [vmem:[%s1 + $0x38] sm:$0xff]
    %v56 = vlaneseq
    %v57 = vshrl.u32 %v56, 7
    %v58 = vsub.s32 0, %v57
    %v59 = vrot.slane %v45, %v58
    %v60 = vlaneseq
    %v61 = vshrl.u32 %v60, 7
    %v62 = vsub.s32 1, %v61
    %v63 = vrot.slane %v45, %v62
    %vm66 = vcmask 261120
    %v68 = vsel %vm66, %v46, 0
    %70 = vmatprep.subr.mxu0 %v48
    %71 = vmatpush1.msra.mxu0 %v47
    %72 = vmatprep.subr.mxu0 %v50
    %73 = vmatpush1.msra.mxu0 %v49
    %74 = vmatprep.subr.mxu0 %v52
    %75 = vmatpush1.msra.mxu0 %v51
    %76 = vmatprep.subr.mxu0 %v54
    %77 = vmatpush1.msra.mxu0 %v53
    %78 = vmatprep.subr.mxu0 0.0
    %79 = vmatpush1.msra.mxu0 0.0
    %80 = vmatprep.subr.mxu0 0.0
    %81 = vmatpush1.msra.mxu0 0.0
    %82 = vmatprep.subr.mxu0 0.0
    %83 = vmatpush1.msra.mxu0 0.0
    %84 = vmatprep.subr.mxu0 0.0
    %85 = vmatpush1.msra.mxu0 0.0
    %86 = vmatprep.subr.mxu0 0.0
    %87 = vmatpush1.msra.mxu0 0.0
    %88 = vmatprep.subr.mxu0 0.0
    %89 = vmatpush1.msra.mxu0 0.0
    %90 = vmatprep.subr.mxu0 0.0
    %91 = vmatpush1.msra.mxu0 0.0
    %92 = vmatprep.subr.mxu0 0.0
    %93 = vmatpush1.msra.mxu0 0.0
    %94 = vmatprep.subr.mxu0 0.0
    %95 = vmatpush1.msra.mxu0 0.0
    %96 = vmatprep.subr.mxu0 0.0
    %97 = vmatpush1.msra.mxu0 0.0
    %98 = vmatprep.subr.mxu0 0.0
    %99 = vmatpush1.msra.mxu0 0.0
    %100 = vmatprep.subr.mxu0 0.0
    %101 = vmatpush1.msra.mxu0 0.0
    %102 = vmatprep.subr.mxu0 0.0
    %103 = vmatpush1.msra.mxu0 0.0
    %104 = vmatprep.subr.mxu0 0.0
    %105 = vmatpush1.msra.mxu0 0.0
    %106 = vmatprep.subr.mxu0 0.0
    %107 = vmatpush1.msra.mxu0 0.0
    %108 = vmatprep.subr.mxu0 0.0
    %109 = vmatpush1.msra.mxu0 0.0
    %110 = vmatprep.subr.mxu0 0.0
    %111 = vmatpush1.msra.mxu0 0.0
    %112 = vmatprep.subr.mxu0 0.0
    %113 = vmatpush1.msra.mxu0 0.0
    %114 = vmatprep.subr.mxu0 0.0
    %115 = vmatpush1.msra.mxu0 0.0
    %116 = vmatprep.subr.mxu0 0.0
    %117 = vmatpush1.msra.mxu0 0.0
    %118 = vmatprep.subr.mxu0 0.0
    %119 = vmatpush1.msra.mxu0 0.0
    %120 = vmatprep.subr.mxu0 0.0
    %121 = vmatpush1.msra.mxu0 0.0
    %122 = vmatprep.subr.mxu0 0.0
    %123 = vmatpush1.msra.mxu0 0.0
    %124 = vmatprep.subr.mxu0 0.0
    %125 = vmatpush1.msra.mxu0 0.0
    %126 = vmatprep.subr.mxu0 0.0
    %127 = vmatpush1.msra.mxu0 0.0
    %128 = vmatprep.subr.mxu0 0.0
    %129 = vmatpush1.msra.mxu0 0.0
    %130 = vmatprep.subr.mxu0 0.0
    %131 = vmatpush1.msra.mxu0 0.0
    %132 = vmatprep.subr.mxu0 0.0
    %133 = vmatpush1.msra.mxu0 0.0
    %134 = vmatprep.mubr.f32.mxu0 0.0
    %135 = vmatmul.mubr.f32.gmra.mrb[0].mxu0 %v68
    %v136 = vpop.f32.mrb[0].mxu0
    %v137 = vadd.f32 %v59, %v136
    %v138 = vpop.f32.mrb[0].mxu0
    %v139 = vadd.f32 %v63, %v138
    %140 = vdwg.mxu0
    %141 = vst [vmem:[#allocation2] sm:$0xff] %v137
    %142 = vst [vmem:[#allocation3] sm:$0xff] %v139
    %v143 = vld [vmem:[#allocation2] sm:$0x1]
    %v145 = vsel %vm66, 0.0, 0
    %147 = vmatprep.subr.mxu0 0.0
    %148 = vmatpush1.msra.mxu0 %v37
    %149 = vmatprep.subr.mxu0 0.0
    %150 = vmatpush1.msra.mxu0 %v38
    %151 = vmatprep.subr.mxu0 0.0
    %152 = vmatpush1.msra.mxu0 %v39
    %153 = vmatprep.subr.mxu0 0.0
    %154 = vmatpush1.msra.mxu0 %v40
    %155 = vmatprep.subr.mxu0 0.0
    %156 = vmatpush1.msra.mxu0 0.0
    %157 = vmatprep.subr.mxu0 0.0
    %158 = vmatpush1.msra.mxu0 0.0
    %159 = vmatprep.subr.mxu0 0.0
    %160 = vmatpush1.msra.mxu0 0.0
    %161 = vmatprep.subr.mxu0 0.0
    %162 = vmatpush1.msra.mxu0 0.0
    %163 = vmatprep.subr.mxu0 0.0
    %164 = vmatpush1.msra.mxu0 0.0
    %165 = vmatprep.subr.mxu0 0.0
    %166 = vmatpush1.msra.mxu0 0.0
    %167 = vmatprep.subr.mxu0 0.0
    %168 = vmatpush1.msra.mxu0 0.0
    %169 = vmatprep.subr.mxu0 0.0
    %170 = vmatpush1.msra.mxu0 0.0
    %171 = vmatprep.subr.mxu0 0.0
    %172 = vmatpush1.msra.mxu0 0.0
    %173 = vmatprep.subr.mxu0 0.0
    %174 = vmatpush1.msra.mxu0 0.0
    %175 = vmatprep.subr.mxu0 0.0
    %176 = vmatpush1.msra.mxu0 0.0
    %177 = vmatprep.subr.mxu0 0.0
    %178 = vmatpush1.msra.mxu0 0.0
    %179 = vmatprep.subr.mxu0 0.0
    %180 = vmatpush1.msra.mxu0 0.0
    %181 = vmatprep.subr.mxu0 0.0
    %182 = vmatpush1.msra.mxu0 0.0
    %183 = vmatprep.subr.mxu0 0.0
    %184 = vmatpush1.msra.mxu0 0.0
    %185 = vmatprep.subr.mxu0 0.0
    %186 = vmatpush1.msra.mxu0 0.0
    %187 = vmatprep.subr.mxu0 0.0
    %188 = vmatpush1.msra.mxu0 0.0
    %189 = vmatprep.subr.mxu0 0.0
    %190 = vmatpush1.msra.mxu0 0.0
    %191 = vmatprep.subr.mxu0 0.0
    %192 = vmatpush1.msra.mxu0 0.0
    %193 = vmatprep.subr.mxu0 0.0
    %194 = vmatpush1.msra.mxu0 0.0
    %195 = vmatprep.subr.mxu0 0.0
    %196 = vmatpush1.msra.mxu0 0.0
    %197 = vmatprep.subr.mxu0 0.0
    %198 = vmatpush1.msra.mxu0 0.0
    %199 = vmatprep.subr.mxu0 0.0
    %200 = vmatpush1.msra.mxu0 0.0
    %201 = vmatprep.subr.mxu0 0.0
    %202 = vmatpush1.msra.mxu0 0.0
    %203 = vmatprep.subr.mxu0 0.0
    %204 = vmatpush1.msra.mxu0 0.0
    %205 = vmatprep.subr.mxu0 0.0
    %206 = vmatpush1.msra.mxu0 0.0
    %207 = vmatprep.subr.mxu0 0.0
    %208 = vmatpush1.msra.mxu0 0.0
    %209 = vmatprep.subr.mxu0 0.0
    %210 = vmatpush1.msra.mxu0 0.0
    %211 = vmatprep.mubr.f32.mxu0 0.0
    %212 = vmatmul.mubr.f32.gmra.mrb[0].mxu0 %v145
    %v213 = vpop.f32.mrb[0].mxu0
    %v214 = vadd.f32 0.0, %v213
    %v215 = vpop.f32.mrb[0].mxu0
    %216 = vdwg.mxu0
    %v217 = vadd.f32 %v143, %v214
    %v218 = vld [vmem:[#allocation3 + $0x7] sm:$0x1]
    %219 = vmatprep.subr.mxu0 0.0
    %220 = vmatpush1.msra.mxu0 %v41
    %221 = vmatprep.subr.mxu0 0.0
    %222 = vmatpush1.msra.mxu0 %v42
    %223 = vmatprep.subr.mxu0 0.0
    %224 = vmatpush1.msra.mxu0 %v43
    %225 = vmatprep.subr.mxu0 0.0
    %226 = vmatpush1.msra.mxu0 %v44
    %227 = vmatprep.subr.mxu0 0.0
    %228 = vmatpush1.msra.mxu0 0.0
    %229 = vmatprep.subr.mxu0 0.0
    %230 = vmatpush1.msra.mxu0 0.0
    %231 = vmatprep.subr.mxu0 0.0
    %232 = vmatpush1.msra.mxu0 0.0
    %233 = vmatprep.subr.mxu0 0.0
    %234 = vmatpush1.msra.mxu0 0.0
    %235 = vmatprep.subr.mxu0 0.0
    %236 = vmatpush1.msra.mxu0 0.0
    %237 = vmatprep.subr.mxu0 0.0
    %238 = vmatpush1.msra.mxu0 0.0
    %239 = vmatprep.subr.mxu0 0.0
    %240 = vmatpush1.msra.mxu0 0.0
    %241 = vmatprep.subr.mxu0 0.0
    %242 = vmatpush1.msra.mxu0 0.0
    %243 = vmatprep.subr.mxu0 0.0
    %244 = vmatpush1.msra.mxu0 0.0
    %245 = vmatprep.subr.mxu0 0.0
    %246 = vmatpush1.msra.mxu0 0.0
    %247 = vmatprep.subr.mxu0 0.0
    %248 = vmatpush1.msra.mxu0 0.0
    %249 = vmatprep.subr.mxu0 0.0
    %250 = vmatpush1.msra.mxu0 0.0
    %251 = vmatprep.subr.mxu0 0.0
    %252 = vmatpush1.msra.mxu0 0.0
    %253 = vmatprep.subr.mxu0 0.0
    %254 = vmatpush1.msra.mxu0 0.0
    %255 = vmatprep.subr.mxu0 0.0
    %256 = vmatpush1.msra.mxu0 0.0
    %257 = vmatprep.subr.mxu0 0.0
    %258 = vmatpush1.msra.mxu0 0.0
    %259 = vmatprep.subr.mxu0 0.0
    %260 = vmatpush1.msra.mxu0 0.0
    %261 = vmatprep.subr.mxu0 0.0
    %262 = vmatpush1.msra.mxu0 0.0
    %263 = vmatprep.subr.mxu0 0.0
    %264 = vmatpush1.msra.mxu0 0.0
    %265 = vmatprep.subr.mxu0 0.0
    %266 = vmatpush1.msra.mxu0 0.0
    %267 = vmatprep.subr.mxu0 0.0
    %268 = vmatpush1.msra.mxu0 0.0
    %269 = vmatprep.subr.mxu0 0.0
    %270 = vmatpush1.msra.mxu0 0.0
    %271 = vmatprep.subr.mxu0 0.0
    %272 = vmatpush1.msra.mxu0 0.0
    %273 = vmatprep.subr.mxu0 0.0
    %274 = vmatpush1.msra.mxu0 0.0
    %275 = vmatprep.subr.mxu0 0.0
    %276 = vmatpush1.msra.mxu0 0.0
    %277 = vmatprep.subr.mxu0 0.0
    %278 = vmatpush1.msra.mxu0 0.0
    %279 = vmatprep.subr.mxu0 0.0
    %280 = vmatpush1.msra.mxu0 0.0
    %281 = vmatprep.subr.mxu0 0.0
    %282 = vmatpush1.msra.mxu0 0.0
    %283 = vmatprep.mubr.f32.mxu0 0.0
    %284 = vmatmul.mubr.f32.gmra.mrb[0].mxu0 %v145
    %v285 = vpop.f32.mrb[0].mxu0
    %v286 = vadd.f32 0.0, %v285
    %v287 = vpop.f32.mrb[0].mxu0
    %288 = vdwg.mxu0
    %v289 = vadd.f32 %v218, %v286
    %v290 = vxor.u32 %v217, 2147483648
    %v291 = vmul.f32 %v290, 1.442695
    %v292 = vpow.pop %v291
    %v293 = vadd.f32 %v292, 1.0
    %v294 = vrcp.pop %v293
    %v295 = vmul.f32 1.0, %v294
    %v296 = vtanh.pop %v217
    %v297 = vmul.f32 %v295, 0.0
    %299 = vrot.lane.b32.xlu0 %v296, 64
    %v300 = vpop.permute.xlu0 %299
    %v302 = vmul.f32 %v295, %v300
    %304 = vrot.lane.b32.xlu0 %v302, 32
    %v305 = vpop.permute.xlu0 %304
    %v307 = vadd.f32 %v297, %v305
    %v308 = vtanh.pop %v307
    %310 = vrot.lane.b32.xlu0 %v308, 64
    %v311 = vpop.permute.xlu0 %310
    %v313 = vmul.f32 %v295, %v311
    %v314 = vxor.u32 %v289, 2147483648
    %v315 = vmul.f32 %v314, 1.442695
    %v316 = vpow.pop %v315
    %v317 = vadd.f32 %v316, 1.0
    %v318 = vrcp.pop %v317
    %v319 = vmul.f32 1.0, %v318
    %v320 = vtanh.pop %v289
    %v321 = vmul.f32 %v319, 0.0
    %323 = vrot.lane.b32.xlu0 %v320, 64
    %v324 = vpop.permute.xlu0 %323
    %v326 = vmul.f32 %v319, %v324
    %328 = vrot.lane.b32.xlu0 %v326, 32
    %v329 = vpop.permute.xlu0 %328
    %v331 = vadd.f32 %v321, %v329
    %v332 = vtanh.pop %v331
    %334 = vrot.lane.b32.xlu0 %v332, 64
    %v335 = vpop.permute.xlu0 %334
    %v337 = vmul.f32 %v319, %v335
    %339 = vrot.lane.b32.xlu0 %v313, 32
    %v340 = vpop.permute.xlu0 %339
    %vm342 = vcmask 253952
    %343 = vst.msk [vmem:[#allocation4] sm:$0x1] %vm342, %v340
    %345 = vrot.lane.b32.xlu0 %v337, 32
    %v346 = vpop.permute.xlu0 %345
    %348 = vst.msk [vmem:[#allocation5 + $0x7] sm:$0x1] %vm342, %v346
    %v349 = vld [vmem:[#allocation2 + $0x1] sm:$0x1]
    %v350 = vsel %vm66, %v340, 0
    %352 = vmatprep.subr.mxu0 0.0
    %353 = vmatpush1.msra.mxu0 %v37
    %354 = vmatprep.subr.mxu0 0.0
    %355 = vmatpush1.msra.mxu0 %v38
    %356 = vmatprep.subr.mxu0 0.0
    %357 = vmatpush1.msra.mxu0 %v39
    %358 = vmatprep.subr.mxu0 0.0
    %359 = vmatpush1.msra.mxu0 %v40
    %360 = vmatprep.subr.mxu0 0.0
    %361 = vmatpush1.msra.mxu0 0.0
    %362 = vmatprep.subr.mxu0 0.0
    %363 = vmatpush1.msra.mxu0 0.0
    %364 = vmatprep.subr.mxu0 0.0
    %365 = vmatpush1.msra.mxu0 0.0
    %366 = vmatprep.subr.mxu0 0.0
    %367 = vmatpush1.msra.mxu0 0.0
    %368 = vmatprep.subr.mxu0 0.0
    %369 = vmatpush1.msra.mxu0 0.0
    %370 = vmatprep.subr.mxu0 0.0
    %371 = vmatpush1.msra.mxu0 0.0
    %372 = vmatprep.subr.mxu0 0.0
    %373 = vmatpush1.msra.mxu0 0.0
    %374 = vmatprep.subr.mxu0 0.0
    %375 = vmatpush1.msra.mxu0 0.0
    %376 = vmatprep.subr.mxu0 0.0
    %377 = vmatpush1.msra.mxu0 0.0
    %378 = vmatprep.subr.mxu0 0.0
    %379 = vmatpush1.msra.mxu0 0.0
    %380 = vmatprep.subr.mxu0 0.0
    %381 = vmatpush1.msra.mxu0 0.0
    %382 = vmatprep.subr.mxu0 0.0
    %383 = vmatpush1.msra.mxu0 0.0
    %384 = vmatprep.subr.mxu0 0.0
    %385 = vmatpush1.msra.mxu0 0.0
    %386 = vmatprep.subr.mxu0 0.0
    %387 = vmatpush1.msra.mxu0 0.0
    %388 = vmatprep.subr.mxu0 0.0
    %389 = vmatpush1.msra.mxu0 0.0
    %390 = vmatprep.subr.mxu0 0.0
    %391 = vmatpush1.msra.mxu0 0.0
    %392 = vmatprep.subr.mxu0 0.0
    %393 = vmatpush1.msra.mxu0 0.0
    %394 = vmatprep.subr.mxu0 0.0
    %395 = vmatpush1.msra.mxu0 0.0
    %396 = vmatprep.subr.mxu0 0.0
    %397 = vmatpush1.msra.mxu0 0.0
    %398 = vmatprep.subr.mxu0 0.0
    %399 = vmatpush1.msra.mxu0 0.0
    %400 = vmatprep.subr.mxu0 0.0
    %401 = vmatpush1.msra.mxu0 0.0
    %402 = vmatprep.subr.mxu0 0.0
    %403 = vmatpush1.msra.mxu0 0.0
    %404 = vmatprep.subr.mxu0 0.0
    %405 = vmatpush1.msra.mxu0 0.0
    %406 = vmatprep.subr.mxu0 0.0
    %407 = vmatpush1.msra.mxu0 0.0
    %408 = vmatprep.subr.mxu0 0.0
    %409 = vmatpush1.msra.mxu0 0.0
    %410 = vmatprep.subr.mxu0 0.0
    %411 = vmatpush1.msra.mxu0 0.0
    %412 = vmatprep.subr.mxu0 0.0
    %413 = vmatpush1.msra.mxu0 0.0
    %414 = vmatprep.subr.mxu0 0.0
    %415 = vmatpush1.msra.mxu0 0.0
    %416 = vmatprep.mubr.f32.mxu0 0.0
    %417 = vmatmul.mubr.f32.gmra.mrb[0].mxu0 %v350
    %v418 = vpop.f32.mrb[0].mxu0
    %v419 = vadd.f32 0.0, %v418
    %v420 = vpop.f32.mrb[0].mxu0
    %421 = vdwg.mxu0
    %v422 = vadd.f32 %v349, %v419
    %v423 = vld [vmem:[#allocation3 + $0x6] sm:$0x1]
    %v424 = vsel %vm66, %v346, 0
    %426 = vmatprep.subr.mxu0 0.0
    %427 = vmatpush1.msra.mxu0 %v41
    %428 = vmatprep.subr.mxu0 0.0
    %429 = vmatpush1.msra.mxu0 %v42
    %430 = vmatprep.subr.mxu0 0.0
    %431 = vmatpush1.msra.mxu0 %v43
    %432 = vmatprep.subr.mxu0 0.0
    %433 = vmatpush1.msra.mxu0 %v44
    %434 = vmatprep.subr.mxu0 0.0
    %435 = vmatpush1.msra.mxu0 0.0
    %436 = vmatprep.subr.mxu0 0.0
    %437 = vmatpush1.msra.mxu0 0.0
    %438 = vmatprep.subr.mxu0 0.0
    %439 = vmatpush1.msra.mxu0 0.0
    %440 = vmatprep.subr.mxu0 0.0
    %441 = vmatpush1.msra.mxu0 0.0
    %442 = vmatprep.subr.mxu0 0.0
    %443 = vmatpush1.msra.mxu0 0.0
    %444 = vmatprep.subr.mxu0 0.0
    %445 = vmatpush1.msra.mxu0 0.0
    %446 = vmatprep.subr.mxu0 0.0
    %447 = vmatpush1.msra.mxu0 0.0
    %448 = vmatprep.subr.mxu0 0.0
    %449 = vmatpush1.msra.mxu0 0.0
    %450 = vmatprep.subr.mxu0 0.0
    %451 = vmatpush1.msra.mxu0 0.0
    %452 = vmatprep.subr.mxu0 0.0
    %453 = vmatpush1.msra.mxu0 0.0
    %454 = vmatprep.subr.mxu0 0.0
    %455 = vmatpush1.msra.mxu0 0.0
    %456 = vmatprep.subr.mxu0 0.0
    %457 = vmatpush1.msra.mxu0 0.0
    %458 = vmatprep.subr.mxu0 0.0
    %459 = vmatpush1.msra.mxu0 0.0
    %460 = vmatprep.subr.mxu0 0.0
    %461 = vmatpush1.msra.mxu0 0.0
    %462 = vmatprep.subr.mxu0 0.0
    %463 = vmatpush1.msra.mxu0 0.0
    %464 = vmatprep.subr.mxu0 0.0
    %465 = vmatpush1.msra.mxu0 0.0
    %466 = vmatprep.subr.mxu0 0.0
    %467 = vmatpush1.msra.mxu0 0.0
    %468 = vmatprep.subr.mxu0 0.0
    %469 = vmatpush1.msra.mxu0 0.0
    %470 = vmatprep.subr.mxu0 0.0
    %471 = vmatpush1.msra.mxu0 0.0
    %472 = vmatprep.subr.mxu0 0.0
    %473 = vmatpush1.msra.mxu0 0.0
    %474 = vmatprep.subr.mxu0 0.0
    %475 = vmatpush1.msra.mxu0 0.0
    %476 = vmatprep.subr.mxu0 0.0
    %477 = vmatpush1.msra.mxu0 0.0
    %478 = vmatprep.subr.mxu0 0.0
    %479 = vmatpush1.msra.mxu0 0.0
    %480 = vmatprep.subr.mxu0 0.0
    %481 = vmatpush1.msra.mxu0 0.0
    %482 = vmatprep.subr.mxu0 0.0
    %483 = vmatpush1.msra.mxu0 0.0
    %484 = vmatprep.subr.mxu0 0.0
    %485 = vmatpush1.msra.mxu0 0.0
    %486 = vmatprep.subr.mxu0 0.0
    %487 = vmatpush1.msra.mxu0 0.0
    %488 = vmatprep.subr.mxu0 0.0
    %489 = vmatpush1.msra.mxu0 0.0
    %490 = vmatprep.mubr.f32.mxu0 0.0
    %491 = vmatmul.mubr.f32.gmra.mrb[0].mxu0 %v424
    %v492 = vpop.f32.mrb[0].mxu0
    %v493 = vadd.f32 0.0, %v492
    %v494 = vpop.f32.mrb[0].mxu0
    %495 = vdwg.mxu0
    %v496 = vadd.f32 %v423, %v493
    %v497 = vxor.u32 %v422, 2147483648
    %v498 = vmul.f32 %v497, 1.442695
    %v499 = vpow.pop %v498
    %v500 = vadd.f32 %v499, 1.0
    %v501 = vrcp.pop %v500
    %v502 = vmul.f32 1.0, %v501
    %v503 = vtanh.pop %v422
    %v504 = vmul.f32 %v502, %v307
    %506 = vrot.lane.b32.xlu0 %v503, 64
    %v507 = vpop.permute.xlu0 %506
    %v509 = vmul.f32 %v502, %v507
    %511 = vrot.lane.b32.xlu0 %v509, 32
    %v512 = vpop.permute.xlu0 %511
    %v514 = vadd.f32 %v504, %v512
    %v515 = vtanh.pop %v514
    %517 = vrot.lane.b32.xlu0 %v515, 64
    %v518 = vpop.permute.xlu0 %517
    %v520 = vmul.f32 %v502, %v518
    %v521 = vxor.u32 %v496, 2147483648
    %v522 = vmul.f32 %v521, 1.442695
    %v523 = vpow.pop %v522
    %v524 = vadd.f32 %v523, 1.0
    %v525 = vrcp.pop %v524
    %v526 = vmul.f32 1.0, %v525
    %v527 = vtanh.pop %v496
    %v528 = vmul.f32 %v526, %v331
    %530 = vrot.lane.b32.xlu0 %v527, 64
    %v531 = vpop.permute.xlu0 %530
    %v533 = vmul.f32 %v526, %v531
    %535 = vrot.lane.b32.xlu0 %v533, 32
    %v536 = vpop.permute.xlu0 %535
    %v538 = vadd.f32 %v528, %v536
    %v539 = vtanh.pop %v538
    %541 = vrot.lane.b32.xlu0 %v539, 64
    %v542 = vpop.permute.xlu0 %541
    %v544 = vmul.f32 %v526, %v542
    %546 = vrot.lane.b32.xlu0 %v520, 32
    %v547 = vpop.permute.xlu0 %546
    %549 = vst.msk [vmem:[#allocation4 + $0x1] sm:$0x1] %vm342, %v547
    %551 = vrot.lane.b32.xlu0 %v544, 32
    %v552 = vpop.permute.xlu0 %551
    %554 = vst.msk [vmem:[#allocation5 + $0x6] sm:$0x1] %vm342, %v552
    %v555 = vld [vmem:[#allocation2 + $0x2] sm:$0x1]
    %v556 = vsel %vm66, %v547, 0
    %558 = vmatprep.subr.mxu0 0.0
    %559 = vmatpush1.msra.mxu0 %v37
    %560 = vmatprep.subr.mxu0 0.0
    %561 = vmatpush1.msra.mxu0 %v38
    %562 = vmatprep.subr.mxu0 0.0
    %563 = vmatpush1.msra.mxu0 %v39
    %564 = vmatprep.subr.mxu0 0.0
    %565 = vmatpush1.msra.mxu0 %v40
    %566 = vmatprep.subr.mxu0 0.0
    %567 = vmatpush1.msra.mxu0 0.0
    %568 = vmatprep.subr.mxu0 0.0
    %569 = vmatpush1.msra.mxu0 0.0
    %570 = vmatprep.subr.mxu0 0.0
    %571 = vmatpush1.msra.mxu0 0.0
    %572 = vmatprep.subr.mxu0 0.0
    %573 = vmatpush1.msra.mxu0 0.0
    %574 = vmatprep.subr.mxu0 0.0
    %575 = vmatpush1.msra.mxu0 0.0
    %576 = vmatprep.subr.mxu0 0.0
    %577 = vmatpush1.msra.mxu0 0.0
    %578 = vmatprep.subr.mxu0 0.0
    %579 = vmatpush1.msra.mxu0 0.0
    %580 = vmatprep.subr.mxu0 0.0
    %581 = vmatpush1.msra.mxu0 0.0
    %582 = vmatprep.subr.mxu0 0.0
    %583 = vmatpush1.msra.mxu0 0.0
    %584 = vmatprep.subr.mxu0 0.0
    %585 = vmatpush1.msra.mxu0 0.0
    %586 = vmatprep.subr.mxu0 0.0
    %587 = vmatpush1.msra.mxu0 0.0
    %588 = vmatprep.subr.mxu0 0.0
    %589 = vmatpush1.msra.mxu0 0.0
    %590 = vmatprep.subr.mxu0 0.0
    %591 = vmatpush1.msra.mxu0 0.0
    %592 = vmatprep.subr.mxu0 0.0
    %593 = vmatpush1.msra.mxu0 0.0
    %594 = vmatprep.subr.mxu0 0.0
    %595 = vmatpush1.msra.mxu0 0.0
    %596 = vmatprep.subr.mxu0 0.0
    %597 = vmatpush1.msra.mxu0 0.0
    %598 = vmatprep.subr.mxu0 0.0
    %599 = vmatpush1.msra.mxu0 0.0
    %600 = vmatprep.subr.mxu0 0.0
    %601 = vmatpush1.msra.mxu0 0.0
    %602 = vmatprep.subr.mxu0 0.0
    %603 = vmatpush1.msra.mxu0 0.0
    %604 = vmatprep.subr.mxu0 0.0
    %605 = vmatpush1.msra.mxu0 0.0
    %606 = vmatprep.subr.mxu0 0.0
    %607 = vmatpush1.msra.mxu0 0.0
    %608 = vmatprep.subr.mxu0 0.0
    %609 = vmatpush1.msra.mxu0 0.0
    %610 = vmatprep.subr.mxu0 0.0
    %611 = vmatpush1.msra.mxu0 0.0
    %612 = vmatprep.subr.mxu0 0.0
    %613 = vmatpush1.msra.mxu0 0.0
    %614 = vmatprep.subr.mxu0 0.0
    %615 = vmatpush1.msra.mxu0 0.0
    %616 = vmatprep.subr.mxu0 0.0
    %617 = vmatpush1.msra.mxu0 0.0
    %618 = vmatprep.subr.mxu0 0.0
    %619 = vmatpush1.msra.mxu0 0.0
    %620 = vmatprep.subr.mxu0 0.0
    %621 = vmatpush1.msra.mxu0 0.0
    %622 = vmatprep.mubr.f32.mxu0 0.0
    %623 = vmatmul.mubr.f32.gmra.mrb[0].mxu0 %v556
    %v624 = vpop.f32.mrb[0].mxu0
    %v625 = vadd.f32 0.0, %v624
    %v626 = vpop.f32.mrb[0].mxu0
    %627 = vdwg.mxu0
    %v628 = vadd.f32 %v555, %v625
    %v629 = vld [vmem:[#allocation3 + $0x5] sm:$0x1]
    %v630 = vsel %vm66, %v552, 0
    %632 = vmatprep.subr.mxu0 0.0
    %633 = vmatpush1.msra.mxu0 %v41
    %634 = vmatprep.subr.mxu0 0.0
    %635 = vmatpush1.msra.mxu0 %v42
    %636 = vmatprep.subr.mxu0 0.0
    %637 = vmatpush1.msra.mxu0 %v43
    %638 = vmatprep.subr.mxu0 0.0
    %639 = vmatpush1.msra.mxu0 %v44
    %640 = vmatprep.subr.mxu0 0.0
    %641 = vmatpush1.msra.mxu0 0.0
    %642 = vmatprep.subr.mxu0 0.0
    %643 = vmatpush1.msra.mxu0 0.0
    %644 = vmatprep.subr.mxu0 0.0
    %645 = vmatpush1.msra.mxu0 0.0
    %646 = vmatprep.subr.mxu0 0.0
    %647 = vmatpush1.msra.mxu0 0.0
    %648 = vmatprep.subr.mxu0 0.0
    %649 = vmatpush1.msra.mxu0 0.0
    %650 = vmatprep.subr.mxu0 0.0
    %651 = vmatpush1.msra.mxu0 0.0
    %652 = vmatprep.subr.mxu0 0.0
    %653 = vmatpush1.msra.mxu0 0.0
    %654 = vmatprep.subr.mxu0 0.0
    %655 = vmatpush1.msra.mxu0 0.0
    %656 = vmatprep.subr.mxu0 0.0
    %657 = vmatpush1.msra.mxu0 0.0
    %658 = vmatprep.subr.mxu0 0.0
    %659 = vmatpush1.msra.mxu0 0.0
    %660 = vmatprep.subr.mxu0 0.0
    %661 = vmatpush1.msra.mxu0 0.0
    %662 = vmatprep.subr.mxu0 0.0
    %663 = vmatpush1.msra.mxu0 0.0
    %664 = vmatprep.subr.mxu0 0.0
    %665 = vmatpush1.msra.mxu0 0.0
    %666 = vmatprep.subr.mxu0 0.0
    %667 = vmatpush1.msra.mxu0 0.0
    %668 = vmatprep.subr.mxu0 0.0
    %669 = vmatpush1.msra.mxu0 0.0
    %670 = vmatprep.subr.mxu0 0.0
    %671 = vmatpush1.msra.mxu0 0.0
    %672 = vmatprep.subr.mxu0 0.0
    %673 = vmatpush1.msra.mxu0 0.0
    %674 = vmatprep.subr.mxu0 0.0
    %675 = vmatpush1.msra.mxu0 0.0
    %676 = vmatprep.subr.mxu0 0.0
    %677 = vmatpush1.msra.mxu0 0.0
    %678 = vmatprep.subr.mxu0 0.0
    %679 = vmatpush1.msra.mxu0 0.0
    %680 = vmatprep.subr.mxu0 0.0
    %681 = vmatpush1.msra.mxu0 0.0
    %682 = vmatprep.subr.mxu0 0.0
    %683 = vmatpush1.msra.mxu0 0.0
    %684 = vmatprep.subr.mxu0 0.0
    %685 = vmatpush1.msra.mxu0 0.0
    %686 = vmatprep.subr.mxu0 0.0
    %687 = vmatpush1.msra.mxu0 0.0
    %688 = vmatprep.subr.mxu0 0.0
    %689 = vmatpush1.msra.mxu0 0.0
    %690 = vmatprep.subr.mxu0 0.0
    %691 = vmatpush1.msra.mxu0 0.0
    %692 = vmatprep.subr.mxu0 0.0
    %693 = vmatpush1.msra.mxu0 0.0
    %694 = vmatprep.subr.mxu0 0.0
    %695 = vmatpush1.msra.mxu0 0.0
    %696 = vmatprep.mubr.f32.mxu0 0.0
    %697 = vmatmul.mubr.f32.gmra.mrb[0].mxu0 %v630
    %v698 = vpop.f32.mrb[0].mxu0
    %v699 = vadd.f32 0.0, %v698
    %v700 = vpop.f32.mrb[0].mxu0
    %701 = vdwg.mxu0
    %v702 = vadd.f32 %v629, %v699
    %v703 = vxor.u32 %v628, 2147483648
    %v704 = vmul.f32 %v703, 1.442695
    %v705 = vpow.pop %v704
    %v706 = vadd.f32 %v705, 1.0
    %v707 = vrcp.pop %v706
    %v708 = vmul.f32 1.0, %v707
    %v709 = vtanh.pop %v628
    %v710 = vmul.f32 %v708, %v514
    %712 = vrot.lane.b32.xlu0 %v709, 64
    %v713 = vpop.permute.xlu0 %712
    %v715 = vmul.f32 %v708, %v713
    %717 = vrot.lane.b32.xlu0 %v715, 32
    %v718 = vpop.permute.xlu0 %717
    %v720 = vadd.f32 %v710, %v718
    %v721 = vtanh.pop %v720
    %723 = vrot.lane.b32.xlu0 %v721, 64
    %v724 = vpop.permute.xlu0 %723
    %v726 = vmul.f32 %v708, %v724
    %v727 = vxor.u32 %v702, 2147483648
    %v728 = vmul.f32 %v727, 1.442695
    %v729 = vpow.pop %v728
    %v730 = vadd.f32 %v729, 1.0
    %v731 = vrcp.pop %v730
    %v732 = vmul.f32 1.0, %v731
    %v733 = vtanh.pop %v702
    %v734 = vmul.f32 %v732, %v538
    %736 = vrot.lane.b32.xlu0 %v733, 64
    %v737 = vpop.permute.xlu0 %736
    %v739 = vmul.f32 %v732, %v737
    %741 = vrot.lane.b32.xlu0 %v739, 32
    %v742 = vpop.permute.xlu0 %741
    %v744 = vadd.f32 %v734, %v742
    %v745 = vtanh.pop %v744
    %747 = vrot.lane.b32.xlu0 %v745, 64
    %v748 = vpop.permute.xlu0 %747
    %v750 = vmul.f32 %v732, %v748
    %752 = vrot.lane.b32.xlu0 %v726, 32
    %v753 = vpop.permute.xlu0 %752
    %755 = vst.msk [vmem:[#allocation4 + $0x2] sm:$0x1] %vm342, %v753
    %757 = vrot.lane.b32.xlu0 %v750, 32
    %v758 = vpop.permute.xlu0 %757
    %760 = vst.msk [vmem:[#allocation5 + $0x5] sm:$0x1] %vm342, %v758
    %v761 = vld [vmem:[#allocation2 + $0x3] sm:$0x1]
    %v762 = vsel %vm66, %v753, 0
    %764 = vmatprep.subr.mxu0 0.0
    %765 = vmatpush1.msra.mxu0 %v37
    %766 = vmatprep.subr.mxu0 0.0
    %767 = vmatpush1.msra.mxu0 %v38
    %768 = vmatprep.subr.mxu0 0.0
    %769 = vmatpush1.msra.mxu0 %v39
    %770 = vmatprep.subr.mxu0 0.0
    %771 = vmatpush1.msra.mxu0 %v40
    %772 = vmatprep.subr.mxu0 0.0
    %773 = vmatpush1.msra.mxu0 0.0
    %774 = vmatprep.subr.mxu0 0.0
    %775 = vmatpush1.msra.mxu0 0.0
    %776 = vmatprep.subr.mxu0 0.0
    %777 = vmatpush1.msra.mxu0 0.0
    %778 = vmatprep.subr.mxu0 0.0
    %779 = vmatpush1.msra.mxu0 0.0
    %780 = vmatprep.subr.mxu0 0.0
    %781 = vmatpush1.msra.mxu0 0.0
    %782 = vmatprep.subr.mxu0 0.0
    %783 = vmatpush1.msra.mxu0 0.0
    %784 = vmatprep.subr.mxu0 0.0
    %785 = vmatpush1.msra.mxu0 0.0
    %786 = vmatprep.subr.mxu0 0.0
    %787 = vmatpush1.msra.mxu0 0.0
    %788 = vmatprep.subr.mxu0 0.0
    %789 = vmatpush1.msra.mxu0 0.0
    %790 = vmatprep.subr.mxu0 0.0
    %791 = vmatpush1.msra.mxu0 0.0
    %792 = vmatprep.subr.mxu0 0.0
    %793 = vmatpush1.msra.mxu0 0.0
    %794 = vmatprep.subr.mxu0 0.0
    %795 = vmatpush1.msra.mxu0 0.0
    %796 = vmatprep.subr.mxu0 0.0
    %797 = vmatpush1.msra.mxu0 0.0
    %798 = vmatprep.subr.mxu0 0.0
    %799 = vmatpush1.msra.mxu0 0.0
    %800 = vmatprep.subr.mxu0 0.0
    %801 = vmatpush1.msra.mxu0 0.0
    %802 = vmatprep.subr.mxu0 0.0
    %803 = vmatpush1.msra.mxu0 0.0
    %804 = vmatprep.subr.mxu0 0.0
    %805 = vmatpush1.msra.mxu0 0.0
    %806 = vmatprep.subr.mxu0 0.0
    %807 = vmatpush1.msra.mxu0 0.0
    %808 = vmatprep.subr.mxu0 0.0
    %809 = vmatpush1.msra.mxu0 0.0
    %810 = vmatprep.subr.mxu0 0.0
    %811 = vmatpush1.msra.mxu0 0.0
    %812 = vmatprep.subr.mxu0 0.0
    %813 = vmatpush1.msra.mxu0 0.0
    %814 = vmatprep.subr.mxu0 0.0
    %815 = vmatpush1.msra.mxu0 0.0
    %816 = vmatprep.subr.mxu0 0.0
    %817 = vmatpush1.msra.mxu0 0.0
    %818 = vmatprep.subr.mxu0 0.0
    %819 = vmatpush1.msra.mxu0 0.0
    %820 = vmatprep.subr.mxu0 0.0
    %821 = vmatpush1.msra.mxu0 0.0
    %822 = vmatprep.subr.mxu0 0.0
    %823 = vmatpush1.msra.mxu0 0.0
    %824 = vmatprep.subr.mxu0 0.0
    %825 = vmatpush1.msra.mxu0 0.0
    %826 = vmatprep.subr.mxu0 0.0
    %827 = vmatpush1.msra.mxu0 0.0
    %828 = vmatprep.mubr.f32.mxu0 0.0
    %829 = vmatmul.mubr.f32.gmra.mrb[0].mxu0 %v762
    %v830 = vpop.f32.mrb[0].mxu0
    %v831 = vadd.f32 0.0, %v830
    %v832 = vpop.f32.mrb[0].mxu0
    %833 = vdwg.mxu0
    %v834 = vadd.f32 %v761, %v831
    %v835 = vld [vmem:[#allocation3 + $0x4] sm:$0x1]
    %v836 = vsel %vm66, %v758, 0
    %838 = vmatprep.subr.mxu0 0.0
    %839 = vmatpush1.msra.mxu0 %v41
    %840 = vmatprep.subr.mxu0 0.0
    %841 = vmatpush1.msra.mxu0 %v42
    %842 = vmatprep.subr.mxu0 0.0
    %843 = vmatpush1.msra.mxu0 %v43
    %844 = vmatprep.subr.mxu0 0.0
    %845 = vmatpush1.msra.mxu0 %v44
    %846 = vmatprep.subr.mxu0 0.0
    %847 = vmatpush1.msra.mxu0 0.0
    %848 = vmatprep.subr.mxu0 0.0
    %849 = vmatpush1.msra.mxu0 0.0
    %850 = vmatprep.subr.mxu0 0.0
    %851 = vmatpush1.msra.mxu0 0.0
    %852 = vmatprep.subr.mxu0 0.0
    %853 = vmatpush1.msra.mxu0 0.0
    %854 = vmatprep.subr.mxu0 0.0
    %855 = vmatpush1.msra.mxu0 0.0
    %856 = vmatprep.subr.mxu0 0.0
    %857 = vmatpush1.msra.mxu0 0.0
    %858 = vmatprep.subr.mxu0 0.0
    %859 = vmatpush1.msra.mxu0 0.0
    %860 = vmatprep.subr.mxu0 0.0
    %861 = vmatpush1.msra.mxu0 0.0
    %862 = vmatprep.subr.mxu0 0.0
    %863 = vmatpush1.msra.mxu0 0.0
    %864 = vmatprep.subr.mxu0 0.0
    %865 = vmatpush1.msra.mxu0 0.0
    %866 = vmatprep.subr.mxu0 0.0
    %867 = vmatpush1.msra.mxu0 0.0
    %868 = vmatprep.subr.mxu0 0.0
    %869 = vmatpush1.msra.mxu0 0.0
    %870 = vmatprep.subr.mxu0 0.0
    %871 = vmatpush1.msra.mxu0 0.0
    %872 = vmatprep.subr.mxu0 0.0
    %873 = vmatpush1.msra.mxu0 0.0
    %874 = vmatprep.subr.mxu0 0.0
    %875 = vmatpush1.msra.mxu0 0.0
    %876 = vmatprep.subr.mxu0 0.0
    %877 = vmatpush1.msra.mxu0 0.0
    %878 = vmatprep.subr.mxu0 0.0
    %879 = vmatpush1.msra.mxu0 0.0
    %880 = vmatprep.subr.mxu0 0.0
    %881 = vmatpush1.msra.mxu0 0.0
    %882 = vmatprep.subr.mxu0 0.0
    %883 = vmatpush1.msra.mxu0 0.0
    %884 = vmatprep.subr.mxu0 0.0
    %885 = vmatpush1.msra.mxu0 0.0
    %886 = vmatprep.subr.mxu0 0.0
    %887 = vmatpush1.msra.mxu0 0.0
    %888 = vmatprep.subr.mxu0 0.0
    %889 = vmatpush1.msra.mxu0 0.0
    %890 = vmatprep.subr.mxu0 0.0
    %891 = vmatpush1.msra.mxu0 0.0
    %892 = vmatprep.subr.mxu0 0.0
    %893 = vmatpush1.msra.mxu0 0.0
    %894 = vmatprep.subr.mxu0 0.0
    %895 = vmatpush1.msra.mxu0 0.0
    %896 = vmatprep.subr.mxu0 0.0
    %897 = vmatpush1.msra.mxu0 0.0
    %898 = vmatprep.subr.mxu0 0.0
    %899 = vmatpush1.msra.mxu0 0.0
    %900 = vmatprep.subr.mxu0 0.0
    %901 = vmatpush1.msra.mxu0 0.0
    %902 = vmatprep.mubr.f32.mxu0 0.0
    %903 = vmatmul.mubr.f32.gmra.mrb[0].mxu0 %v836
    %v904 = vpop.f32.mrb[0].mxu0
    %v905 = vadd.f32 0.0, %v904
    %v906 = vpop.f32.mrb[0].mxu0
    %907 = vdwg.mxu0
    %v908 = vadd.f32 %v835, %v905
    %v909 = vxor.u32 %v834, 2147483648
    %v910 = vmul.f32 %v909, 1.442695
    %v911 = vpow.pop %v910
    %v912 = vadd.f32 %v911, 1.0
    %v913 = vrcp.pop %v912
    %v914 = vmul.f32 1.0, %v913
    %v915 = vtanh.pop %v834
    %v916 = vmul.f32 %v914, %v720
    %918 = vrot.lane.b32.xlu0 %v915, 64
    %v919 = vpop.permute.xlu0 %918
    %v921 = vmul.f32 %v914, %v919
    %923 = vrot.lane.b32.xlu0 %v921, 32
    %v924 = vpop.permute.xlu0 %923
    %v926 = vadd.f32 %v916, %v924
    %v927 = vtanh.pop %v926
    %929 = vrot.lane.b32.xlu0 %v927, 64
    %v930 = vpop.permute.xlu0 %929
    %v932 = vmul.f32 %v914, %v930
    %v933 = vxor.u32 %v908, 2147483648
    %v934 = vmul.f32 %v933, 1.442695
    %v935 = vpow.pop %v934
    %v936 = vadd.f32 %v935, 1.0
    %v937 = vrcp.pop %v936
    %v938 = vmul.f32 1.0, %v937
    %v939 = vtanh.pop %v908
    %v940 = vmul.f32 %v938, %v744
    %942 = vrot.lane.b32.xlu0 %v939, 64
    %v943 = vpop.permute.xlu0 %942
    %v945 = vmul.f32 %v938, %v943
    %947 = vrot.lane.b32.xlu0 %v945, 32
    %v948 = vpop.permute.xlu0 %947
    %v950 = vadd.f32 %v940, %v948
    %v951 = vtanh.pop %v950
    %953 = vrot.lane.b32.xlu0 %v951, 64
    %v954 = vpop.permute.xlu0 %953
    %v956 = vmul.f32 %v938, %v954
    %958 = vrot.lane.b32.xlu0 %v932, 32
    %v959 = vpop.permute.xlu0 %958
    %961 = vst.msk [vmem:[#allocation4 + $0x3] sm:$0x1] %vm342, %v959
    %963 = vrot.lane.b32.xlu0 %v956, 32
    %v964 = vpop.permute.xlu0 %963
    %966 = vst.msk [vmem:[#allocation5 + $0x4] sm:$0x1] %vm342, %v964
    %v967 = vld [vmem:[#allocation2 + $0x4] sm:$0x1]
    %v968 = vsel %vm66, %v959, 0
    %970 = vmatprep.subr.mxu0 0.0
    %971 = vmatpush1.msra.mxu0 %v37
    %972 = vmatprep.subr.mxu0 0.0
    %973 = vmatpush1.msra.mxu0 %v38
    %974 = vmatprep.subr.mxu0 0.0
    %975 = vmatpush1.msra.mxu0 %v39
    %976 = vmatprep.subr.mxu0 0.0
    %977 = vmatpush1.msra.mxu0 %v40
    %978 = vmatprep.subr.mxu0 0.0
    %979 = vmatpush1.msra.mxu0 0.0
    %980 = vmatprep.subr.mxu0 0.0
    %981 = vmatpush1.msra.mxu0 0.0
    %982 = vmatprep.subr.mxu0 0.0
    %983 = vmatpush1.msra.mxu0 0.0
    %984 = vmatprep.subr.mxu0 0.0
    %985 = vmatpush1.msra.mxu0 0.0
    %986 = vmatprep.subr.mxu0 0.0
    %987 = vmatpush1.msra.mxu0 0.0
    %988 = vmatprep.subr.mxu0 0.0
    %989 = vmatpush1.msra.mxu0 0.0
    %990 = vmatprep.subr.mxu0 0.0
    %991 = vmatpush1.msra.mxu0 0.0
    %992 = vmatprep.subr.mxu0 0.0
    %993 = vmatpush1.msra.mxu0 0.0
    %994 = vmatprep.subr.mxu0 0.0
    %995 = vmatpush1.msra.mxu0 0.0
    %996 = vmatprep.subr.mxu0 0.0
    %997 = vmatpush1.msra.mxu0 0.0
    %998 = vmatprep.subr.mxu0 0.0
    %999 = vmatpush1.msra.mxu0 0.0
    %1000 = vmatprep.subr.mxu0 0.0
    %1001 = vmatpush1.msra.mxu0 0.0
    %1002 = vmatprep.subr.mxu0 0.0
    %1003 = vmatpush1.msra.mxu0 0.0
    %1004 = vmatprep.subr.mxu0 0.0
    %1005 = vmatpush1.msra.mxu0 0.0
    %1006 = vmatprep.subr.mxu0 0.0
    %1007 = vmatpush1.msra.mxu0 0.0
    %1008 = vmatprep.subr.mxu0 0.0
    %1009 = vmatpush1.msra.mxu0 0.0
    %1010 = vmatprep.subr.mxu0 0.0
    %1011 = vmatpush1.msra.mxu0 0.0
    %1012 = vmatprep.subr.mxu0 0.0
    %1013 = vmatpush1.msra.mxu0 0.0
    %1014 = vmatprep.subr.mxu0 0.0
    %1015 = vmatpush1.msra.mxu0 0.0
    %1016 = vmatprep.subr.mxu0 0.0
    %1017 = vmatpush1.msra.mxu0 0.0
    %1018 = vmatprep.subr.mxu0 0.0
    %1019 = vmatpush1.msra.mxu0 0.0
    %1020 = vmatprep.subr.mxu0 0.0
    %1021 = vmatpush1.msra.mxu0 0.0
    %1022 = vmatprep.subr.mxu0 0.0
    %1023 = vmatpush1.msra.mxu0 0.0
    %1024 = vmatprep.subr.mxu0 0.0
    %1025 = vmatpush1.msra.mxu0 0.0
    %1026 = vmatprep.subr.mxu0 0.0
    %1027 = vmatpush1.msra.mxu0 0.0
    %1028 = vmatprep.subr.mxu0 0.0
    %1029 = vmatpush1.msra.mxu0 0.0
    %1030 = vmatprep.subr.mxu0 0.0
    %1031 = vmatpush1.msra.mxu0 0.0
    %1032 = vmatprep.subr.mxu0 0.0
    %1033 = vmatpush1.msra.mxu0 0.0
    %1034 = vmatprep.mubr.f32.mxu0 0.0
    %1035 = vmatmul.mubr.f32.gmra.mrb[0].mxu0 %v968
    %v1036 = vpop.f32.mrb[0].mxu0
    %v1037 = vadd.f32 0.0, %v1036
    %v1038 = vpop.f32.mrb[0].mxu0
    %1039 = vdwg.mxu0
    %v1040 = vadd.f32 %v967, %v1037
    %v1041 = vld [vmem:[#allocation3 + $0x3] sm:$0x1]
    %v1042 = vsel %vm66, %v964, 0
    %1044 = vmatprep.subr.mxu0 0.0
    %1045 = vmatpush1.msra.mxu0 %v41
    %1046 = vmatprep.subr.mxu0 0.0
    %1047 = vmatpush1.msra.mxu0 %v42
    %1048 = vmatprep.subr.mxu0 0.0
    %1049 = vmatpush1.msra.mxu0 %v43
    %1050 = vmatprep.subr.mxu0 0.0
    %1051 = vmatpush1.msra.mxu0 %v44
    %1052 = vmatprep.subr.mxu0 0.0
    %1053 = vmatpush1.msra.mxu0 0.0
    %1054 = vmatprep.subr.mxu0 0.0
    %1055 = vmatpush1.msra.mxu0 0.0
    %1056 = vmatprep.subr.mxu0 0.0
    %1057 = vmatpush1.msra.mxu0 0.0
    %1058 = vmatprep.subr.mxu0 0.0
    %1059 = vmatpush1.msra.mxu0 0.0
    %1060 = vmatprep.subr.mxu0 0.0
    %1061 = vmatpush1.msra.mxu0 0.0
    %1062 = vmatprep.subr.mxu0 0.0
    %1063 = vmatpush1.msra.mxu0 0.0
    %1064 = vmatprep.subr.mxu0 0.0
    %1065 = vmatpush1.msra.mxu0 0.0
    %1066 = vmatprep.subr.mxu0 0.0
    %1067 = vmatpush1.msra.mxu0 0.0
    %1068 = vmatprep.subr.mxu0 0.0
    %1069 = vmatpush1.msra.mxu0 0.0
    %1070 = vmatprep.subr.mxu0 0.0
    %1071 = vmatpush1.msra.mxu0 0.0
    %1072 = vmatprep.subr.mxu0 0.0
    %1073 = vmatpush1.msra.mxu0 0.0
    %1074 = vmatprep.subr.mxu0 0.0
    %1075 = vmatpush1.msra.mxu0 0.0
    %1076 = vmatprep.subr.mxu0 0.0
    %1077 = vmatpush1.msra.mxu0 0.0
    %1078 = vmatprep.subr.mxu0 0.0
    %1079 = vmatpush1.msra.mxu0 0.0
    %1080 = vmatprep.subr.mxu0 0.0
    %1081 = vmatpush1.msra.mxu0 0.0
    %1082 = vmatprep.subr.mxu0 0.0
    %1083 = vmatpush1.msra.mxu0 0.0
    %1084 = vmatprep.subr.mxu0 0.0
    %1085 = vmatpush1.msra.mxu0 0.0
    %1086 = vmatprep.subr.mxu0 0.0
    %1087 = vmatpush1.msra.mxu0 0.0
    %1088 = vmatprep.subr.mxu0 0.0
    %1089 = vmatpush1.msra.mxu0 0.0
    %1090 = vmatprep.subr.mxu0 0.0
    %1091 = vmatpush1.msra.mxu0 0.0
    %1092 = vmatprep.subr.mxu0 0.0
    %1093 = vmatpush1.msra.mxu0 0.0
    %1094 = vmatprep.subr.mxu0 0.0
    %1095 = vmatpush1.msra.mxu0 0.0
    %1096 = vmatprep.subr.mxu0 0.0
    %1097 = vmatpush1.msra.mxu0 0.0
    %1098 = vmatprep.subr.mxu0 0.0
    %1099 = vmatpush1.msra.mxu0 0.0
    %1100 = vmatprep.subr.mxu0 0.0
    %1101 = vmatpush1.msra.mxu0 0.0
    %1102 = vmatprep.subr.mxu0 0.0
    %1103 = vmatpush1.msra.mxu0 0.0
    %1104 = vmatprep.subr.mxu0 0.0
    %1105 = vmatpush1.msra.mxu0 0.0
    %1106 = vmatprep.subr.mxu0 0.0
    %1107 = vmatpush1.msra.mxu0 0.0
    %1108 = vmatprep.mubr.f32.mxu0 0.0
    %1109 = vmatmul.mubr.f32.gmra.mrb[0].mxu0 %v1042
    %v1110 = vpop.f32.mrb[0].mxu0
    %v1111 = vadd.f32 0.0, %v1110
    %v1112 = vpop.f32.mrb[0].mxu0
    %1113 = vdwg.mxu0
    %v1114 = vadd.f32 %v1041, %v1111
    %v1115 = vxor.u32 %v1040, 2147483648
    %v1116 = vmul.f32 %v1115, 1.442695
    %v1117 = vpow.pop %v1116
    %v1118 = vadd.f32 %v1117, 1.0
    %v1119 = vrcp.pop %v1118
    %v1120 = vmul.f32 1.0, %v1119
    %v1121 = vtanh.pop %v1040
    %v1122 = vmul.f32 %v1120, %v926
    %1124 = vrot.lane.b32.xlu0 %v1121, 64
    %v1125 = vpop.permute.xlu0 %1124
    %v1127 = vmul.f32 %v1120, %v1125
    %1129 = vrot.lane.b32.xlu0 %v1127, 32
    %v1130 = vpop.permute.xlu0 %1129
    %v1132 = vadd.f32 %v1122, %v1130
    %v1133 = vtanh.pop %v1132
    %1135 = vrot.lane.b32.xlu0 %v1133, 64
    %v1136 = vpop.permute.xlu0 %1135
    %v1138 = vmul.f32 %v1120, %v1136
    %v1139 = vxor.u32 %v1114, 2147483648
    %v1140 = vmul.f32 %v1139, 1.442695
    %v1141 = vpow.pop %v1140
    %v1142 = vadd.f32 %v1141, 1.0
    %v1143 = vrcp.pop %v1142
    %v1144 = vmul.f32 1.0, %v1143
    %v1145 = vtanh.pop %v1114
    %v1146 = vmul.f32 %v1144, %v950
    %1148 = vrot.lane.b32.xlu0 %v1145, 64
    %v1149 = vpop.permute.xlu0 %1148
    %v1151 = vmul.f32 %v1144, %v1149
    %1153 = vrot.lane.b32.xlu0 %v1151, 32
    %v1154 = vpop.permute.xlu0 %1153
    %v1156 = vadd.f32 %v1146, %v1154
    %v1157 = vtanh.pop %v1156
    %1159 = vrot.lane.b32.xlu0 %v1157, 64
    %v1160 = vpop.permute.xlu0 %1159
    %v1162 = vmul.f32 %v1144, %v1160
    %1164 = vrot.lane.b32.xlu0 %v1138, 32
    %v1165 = vpop.permute.xlu0 %1164
    %1167 = vst.msk [vmem:[#allocation4 + $0x4] sm:$0x1] %vm342, %v1165
    %1169 = vrot.lane.b32.xlu0 %v1162, 32
    %v1170 = vpop.permute.xlu0 %1169
    %1172 = vst.msk [vmem:[#allocation5 + $0x3] sm:$0x1] %vm342, %v1170
    %v1173 = vld [vmem:[#allocation2 + $0x5] sm:$0x1]
    %v1174 = vsel %vm66, %v1165, 0
    %1176 = vmatprep.subr.mxu0 0.0
    %1177 = vmatpush1.msra.mxu0 %v37
    %1178 = vmatprep.subr.mxu0 0.0
    %1179 = vmatpush1.msra.mxu0 %v38
    %1180 = vmatprep.subr.mxu0 0.0
    %1181 = vmatpush1.msra.mxu0 %v39
    %1182 = vmatprep.subr.mxu0 0.0
    %1183 = vmatpush1.msra.mxu0 %v40
    %1184 = vmatprep.subr.mxu0 0.0
    %1185 = vmatpush1.msra.mxu0 0.0
    %1186 = vmatprep.subr.mxu0 0.0
    %1187 = vmatpush1.msra.mxu0 0.0
    %1188 = vmatprep.subr.mxu0 0.0
    %1189 = vmatpush1.msra.mxu0 0.0
    %1190 = vmatprep.subr.mxu0 0.0
    %1191 = vmatpush1.msra.mxu0 0.0
    %1192 = vmatprep.subr.mxu0 0.0
    %1193 = vmatpush1.msra.mxu0 0.0
    %1194 = vmatprep.subr.mxu0 0.0
    %1195 = vmatpush1.msra.mxu0 0.0
    %1196 = vmatprep.subr.mxu0 0.0
    %1197 = vmatpush1.msra.mxu0 0.0
    %1198 = vmatprep.subr.mxu0 0.0
    %1199 = vmatpush1.msra.mxu0 0.0
    %1200 = vmatprep.subr.mxu0 0.0
    %1201 = vmatpush1.msra.mxu0 0.0
    %1202 = vmatprep.subr.mxu0 0.0
    %1203 = vmatpush1.msra.mxu0 0.0
    %1204 = vmatprep.subr.mxu0 0.0
    %1205 = vmatpush1.msra.mxu0 0.0
    %1206 = vmatprep.subr.mxu0 0.0
    %1207 = vmatpush1.msra.mxu0 0.0
    %1208 = vmatprep.subr.mxu0 0.0
    %1209 = vmatpush1.msra.mxu0 0.0
    %1210 = vmatprep.subr.mxu0 0.0
    %1211 = vmatpush1.msra.mxu0 0.0
    %1212 = vmatprep.subr.mxu0 0.0
    %1213 = vmatpush1.msra.mxu0 0.0
    %1214 = vmatprep.subr.mxu0 0.0
    %1215 = vmatpush1.msra.mxu0 0.0
    %1216 = vmatprep.subr.mxu0 0.0
    %1217 = vmatpush1.msra.mxu0 0.0
    %1218 = vmatprep.subr.mxu0 0.0
    %1219 = vmatpush1.msra.mxu0 0.0
    %1220 = vmatprep.subr.mxu0 0.0
    %1221 = vmatpush1.msra.mxu0 0.0
    %1222 = vmatprep.subr.mxu0 0.0
    %1223 = vmatpush1.msra.mxu0 0.0
    %1224 = vmatprep.subr.mxu0 0.0
    %1225 = vmatpush1.msra.mxu0 0.0
    %1226 = vmatprep.subr.mxu0 0.0
    %1227 = vmatpush1.msra.mxu0 0.0
    %1228 = vmatprep.subr.mxu0 0.0
    %1229 = vmatpush1.msra.mxu0 0.0
    %1230 = vmatprep.subr.mxu0 0.0
    %1231 = vmatpush1.msra.mxu0 0.0
    %1232 = vmatprep.subr.mxu0 0.0
    %1233 = vmatpush1.msra.mxu0 0.0
    %1234 = vmatprep.subr.mxu0 0.0
    %1235 = vmatpush1.msra.mxu0 0.0
    %1236 = vmatprep.subr.mxu0 0.0
    %1237 = vmatpush1.msra.mxu0 0.0
    %1238 = vmatprep.subr.mxu0 0.0
    %1239 = vmatpush1.msra.mxu0 0.0
    %1240 = vmatprep.mubr.f32.mxu0 0.0
    %1241 = vmatmul.mubr.f32.gmra.mrb[0].mxu0 %v1174
    %v1242 = vpop.f32.mrb[0].mxu0
    %v1243 = vadd.f32 0.0, %v1242
    %v1244 = vpop.f32.mrb[0].mxu0
    %1245 = vdwg.mxu0
    %v1246 = vadd.f32 %v1173, %v1243
    %v1247 = vld [vmem:[#allocation3 + $0x2] sm:$0x1]
    %v1248 = vsel %vm66, %v1170, 0
    %1250 = vmatprep.subr.mxu0 0.0
    %1251 = vmatpush1.msra.mxu0 %v41
    %1252 = vmatprep.subr.mxu0 0.0
    %1253 = vmatpush1.msra.mxu0 %v42
    %1254 = vmatprep.subr.mxu0 0.0
    %1255 = vmatpush1.msra.mxu0 %v43
    %1256 = vmatprep.subr.mxu0 0.0
    %1257 = vmatpush1.msra.mxu0 %v44
    %1258 = vmatprep.subr.mxu0 0.0
    %1259 = vmatpush1.msra.mxu0 0.0
    %1260 = vmatprep.subr.mxu0 0.0
    %1261 = vmatpush1.msra.mxu0 0.0
    %1262 = vmatprep.subr.mxu0 0.0
    %1263 = vmatpush1.msra.mxu0 0.0
    %1264 = vmatprep.subr.mxu0 0.0
    %1265 = vmatpush1.msra.mxu0 0.0
    %1266 = vmatprep.subr.mxu0 0.0
    %1267 = vmatpush1.msra.mxu0 0.0
    %1268 = vmatprep.subr.mxu0 0.0
    %1269 = vmatpush1.msra.mxu0 0.0
    %1270 = vmatprep.subr.mxu0 0.0
    %1271 = vmatpush1.msra.mxu0 0.0
    %1272 = vmatprep.subr.mxu0 0.0
    %1273 = vmatpush1.msra.mxu0 0.0
    %1274 = vmatprep.subr.mxu0 0.0
    %1275 = vmatpush1.msra.mxu0 0.0
    %1276 = vmatprep.subr.mxu0 0.0
    %1277 = vmatpush1.msra.mxu0 0.0
    %1278 = vmatprep.subr.mxu0 0.0
    %1279 = vmatpush1.msra.mxu0 0.0
    %1280 = vmatprep.subr.mxu0 0.0
    %1281 = vmatpush1.msra.mxu0 0.0
    %1282 = vmatprep.subr.mxu0 0.0
    %1283 = vmatpush1.msra.mxu0 0.0
    %1284 = vmatprep.subr.mxu0 0.0
    %1285 = vmatpush1.msra.mxu0 0.0
    %1286 = vmatprep.subr.mxu0 0.0
    %1287 = vmatpush1.msra.mxu0 0.0
    %1288 = vmatprep.subr.mxu0 0.0
    %1289 = vmatpush1.msra.mxu0 0.0
    %1290 = vmatprep.subr.mxu0 0.0
    %1291 = vmatpush1.msra.mxu0 0.0
    %1292 = vmatprep.subr.mxu0 0.0
    %1293 = vmatpush1.msra.mxu0 0.0
    %1294 = vmatprep.subr.mxu0 0.0
    %1295 = vmatpush1.msra.mxu0 0.0
    %1296 = vmatprep.subr.mxu0 0.0
    %1297 = vmatpush1.msra.mxu0 0.0
    %1298 = vmatprep.subr.mxu0 0.0
    %1299 = vmatpush1.msra.mxu0 0.0
    %1300 = vmatprep.subr.mxu0 0.0
    %1301 = vmatpush1.msra.mxu0 0.0
    %1302 = vmatprep.subr.mxu0 0.0
    %1303 = vmatpush1.msra.mxu0 0.0
    %1304 = vmatprep.subr.mxu0 0.0
    %1305 = vmatpush1.msra.mxu0 0.0
    %1306 = vmatprep.subr.mxu0 0.0
    %1307 = vmatpush1.msra.mxu0 0.0
    %1308 = vmatprep.subr.mxu0 0.0
    %1309 = vmatpush1.msra.mxu0 0.0
    %1310 = vmatprep.subr.mxu0 0.0
    %1311 = vmatpush1.msra.mxu0 0.0
    %1312 = vmatprep.subr.mxu0 0.0
    %1313 = vmatpush1.msra.mxu0 0.0
    %1314 = vmatprep.mubr.f32.mxu0 0.0
    %1315 = vmatmul.mubr.f32.gmra.mrb[0].mxu0 %v1248
    %v1316 = vpop.f32.mrb[0].mxu0
    %v1317 = vadd.f32 0.0, %v1316
    %v1318 = vpop.f32.mrb[0].mxu0
    %1319 = vdwg.mxu0
    %v1320 = vadd.f32 %v1247, %v1317
    %v1321 = vxor.u32 %v1246, 2147483648
    %v1322 = vmul.f32 %v1321, 1.442695
    %v1323 = vpow.pop %v1322
    %v1324 = vadd.f32 %v1323, 1.0
    %v1325 = vrcp.pop %v1324
    %v1326 = vmul.f32 1.0, %v1325
    %v1327 = vtanh.pop %v1246
    %v1328 = vmul.f32 %v1326, %v1132
    %1330 = vrot.lane.b32.xlu0 %v1327, 64
    %v1331 = vpop.permute.xlu0 %1330
    %v1333 = vmul.f32 %v1326, %v1331
    %1335 = vrot.lane.b32.xlu0 %v1333, 32
    %v1336 = vpop.permute.xlu0 %1335
    %v1338 = vadd.f32 %v1328, %v1336
    %v1339 = vtanh.pop %v1338
    %1341 = vrot.lane.b32.xlu0 %v1339, 64
    %v1342 = vpop.permute.xlu0 %1341
    %v1344 = vmul.f32 %v1326, %v1342
    %v1345 = vxor.u32 %v1320, 2147483648
    %v1346 = vmul.f32 %v1345, 1.442695
    %v1347 = vpow.pop %v1346
    %v1348 = vadd.f32 %v1347, 1.0
    %v1349 = vrcp.pop %v1348
    %v1350 = vmul.f32 1.0, %v1349
    %v1351 = vtanh.pop %v1320
    %v1352 = vmul.f32 %v1350, %v1156
    %1354 = vrot.lane.b32.xlu0 %v1351, 64
    %v1355 = vpop.permute.xlu0 %1354
    %v1357 = vmul.f32 %v1350, %v1355
    %1359 = vrot.lane.b32.xlu0 %v1357, 32
    %v1360 = vpop.permute.xlu0 %1359
    %v1362 = vadd.f32 %v1352, %v1360
    %v1363 = vtanh.pop %v1362
    %1365 = vrot.lane.b32.xlu0 %v1363, 64
    %v1366 = vpop.permute.xlu0 %1365
    %v1368 = vmul.f32 %v1350, %v1366
    %1370 = vrot.lane.b32.xlu0 %v1344, 32
    %v1371 = vpop.permute.xlu0 %1370
    %1373 = vst.msk [vmem:[#allocation4 + $0x5] sm:$0x1] %vm342, %v1371
    %1375 = vrot.lane.b32.xlu0 %v1368, 32
    %v1376 = vpop.permute.xlu0 %1375
    %1378 = vst.msk [vmem:[#allocation5 + $0x2] sm:$0x1] %vm342, %v1376
    %v1379 = vld [vmem:[#allocation2 + $0x6] sm:$0x1]
    %v1380 = vsel %vm66, %v1371, 0
    %1382 = vmatprep.subr.mxu0 0.0
    %1383 = vmatpush1.msra.mxu0 %v37
    %1384 = vmatprep.subr.mxu0 0.0
    %1385 = vmatpush1.msra.mxu0 %v38
    %1386 = vmatprep.subr.mxu0 0.0
    %1387 = vmatpush1.msra.mxu0 %v39
    %1388 = vmatprep.subr.mxu0 0.0
    %1389 = vmatpush1.msra.mxu0 %v40
    %1390 = vmatprep.subr.mxu0 0.0
    %1391 = vmatpush1.msra.mxu0 0.0
    %1392 = vmatprep.subr.mxu0 0.0
    %1393 = vmatpush1.msra.mxu0 0.0
    %1394 = vmatprep.subr.mxu0 0.0
    %1395 = vmatpush1.msra.mxu0 0.0
    %1396 = vmatprep.subr.mxu0 0.0
    %1397 = vmatpush1.msra.mxu0 0.0
    %1398 = vmatprep.subr.mxu0 0.0
    %1399 = vmatpush1.msra.mxu0 0.0
    %1400 = vmatprep.subr.mxu0 0.0
    %1401 = vmatpush1.msra.mxu0 0.0
    %1402 = vmatprep.subr.mxu0 0.0
    %1403 = vmatpush1.msra.mxu0 0.0
    %1404 = vmatprep.subr.mxu0 0.0
    %1405 = vmatpush1.msra.mxu0 0.0
    %1406 = vmatprep.subr.mxu0 0.0
    %1407 = vmatpush1.msra.mxu0 0.0
    %1408 = vmatprep.subr.mxu0 0.0
    %1409 = vmatpush1.msra.mxu0 0.0
    %1410 = vmatprep.subr.mxu0 0.0
    %1411 = vmatpush1.msra.mxu0 0.0
    %1412 = vmatprep.subr.mxu0 0.0
    %1413 = vmatpush1.msra.mxu0 0.0
    %1414 = vmatprep.subr.mxu0 0.0
    %1415 = vmatpush1.msra.mxu0 0.0
    %1416 = vmatprep.subr.mxu0 0.0
    %1417 = vmatpush1.msra.mxu0 0.0
    %1418 = vmatprep.subr.mxu0 0.0
    %1419 = vmatpush1.msra.mxu0 0.0
    %1420 = vmatprep.subr.mxu0 0.0
    %1421 = vmatpush1.msra.mxu0 0.0
    %1422 = vmatprep.subr.mxu0 0.0
    %1423 = vmatpush1.msra.mxu0 0.0
    %1424 = vmatprep.subr.mxu0 0.0
    %1425 = vmatpush1.msra.mxu0 0.0
    %1426 = vmatprep.subr.mxu0 0.0
    %1427 = vmatpush1.msra.mxu0 0.0
    %1428 = vmatprep.subr.mxu0 0.0
    %1429 = vmatpush1.msra.mxu0 0.0
    %1430 = vmatprep.subr.mxu0 0.0
    %1431 = vmatpush1.msra.mxu0 0.0
    %1432 = vmatprep.subr.mxu0 0.0
    %1433 = vmatpush1.msra.mxu0 0.0
    %1434 = vmatprep.subr.mxu0 0.0
    %1435 = vmatpush1.msra.mxu0 0.0
    %1436 = vmatprep.subr.mxu0 0.0
    %1437 = vmatpush1.msra.mxu0 0.0
    %1438 = vmatprep.subr.mxu0 0.0
    %1439 = vmatpush1.msra.mxu0 0.0
    %1440 = vmatprep.subr.mxu0 0.0
    %1441 = vmatpush1.msra.mxu0 0.0
    %1442 = vmatprep.subr.mxu0 0.0
    %1443 = vmatpush1.msra.mxu0 0.0
    %1444 = vmatprep.subr.mxu0 0.0
    %1445 = vmatpush1.msra.mxu0 0.0
    %1446 = vmatprep.mubr.f32.mxu0 0.0
    %1447 = vmatmul.mubr.f32.gmra.mrb[0].mxu0 %v1380
    %v1448 = vpop.f32.mrb[0].mxu0
    %v1449 = vadd.f32 0.0, %v1448
    %v1450 = vpop.f32.mrb[0].mxu0
    %1451 = vdwg.mxu0
    %v1452 = vadd.f32 %v1379, %v1449
    %v1453 = vld [vmem:[#allocation3 + $0x1] sm:$0x1]
    %v1454 = vsel %vm66, %v1376, 0
    %1456 = vmatprep.subr.mxu0 0.0
    %1457 = vmatpush1.msra.mxu0 %v41
    %1458 = vmatprep.subr.mxu0 0.0
    %1459 = vmatpush1.msra.mxu0 %v42
    %1460 = vmatprep.subr.mxu0 0.0
    %1461 = vmatpush1.msra.mxu0 %v43
    %1462 = vmatprep.subr.mxu0 0.0
    %1463 = vmatpush1.msra.mxu0 %v44
    %1464 = vmatprep.subr.mxu0 0.0
    %1465 = vmatpush1.msra.mxu0 0.0
    %1466 = vmatprep.subr.mxu0 0.0
    %1467 = vmatpush1.msra.mxu0 0.0
    %1468 = vmatprep.subr.mxu0 0.0
    %1469 = vmatpush1.msra.mxu0 0.0
    %1470 = vmatprep.subr.mxu0 0.0
    %1471 = vmatpush1.msra.mxu0 0.0
    %1472 = vmatprep.subr.mxu0 0.0
    %1473 = vmatpush1.msra.mxu0 0.0
    %1474 = vmatprep.subr.mxu0 0.0
    %1475 = vmatpush1.msra.mxu0 0.0
    %1476 = vmatprep.subr.mxu0 0.0
    %1477 = vmatpush1.msra.mxu0 0.0
    %1478 = vmatprep.subr.mxu0 0.0
    %1479 = vmatpush1.msra.mxu0 0.0
    %1480 = vmatprep.subr.mxu0 0.0
    %1481 = vmatpush1.msra.mxu0 0.0
    %1482 = vmatprep.subr.mxu0 0.0
    %1483 = vmatpush1.msra.mxu0 0.0
    %1484 = vmatprep.subr.mxu0 0.0
    %1485 = vmatpush1.msra.mxu0 0.0
    %1486 = vmatprep.subr.mxu0 0.0
    %1487 = vmatpush1.msra.mxu0 0.0
    %1488 = vmatprep.subr.mxu0 0.0
    %1489 = vmatpush1.msra.mxu0 0.0
    %1490 = vmatprep.subr.mxu0 0.0
    %1491 = vmatpush1.msra.mxu0 0.0
    %1492 = vmatprep.subr.mxu0 0.0
    %1493 = vmatpush1.msra.mxu0 0.0
    %1494 = vmatprep.subr.mxu0 0.0
    %1495 = vmatpush1.msra.mxu0 0.0
    %1496 = vmatprep.subr.mxu0 0.0
    %1497 = vmatpush1.msra.mxu0 0.0
    %1498 = vmatprep.subr.mxu0 0.0
    %1499 = vmatpush1.msra.mxu0 0.0
    %1500 = vmatprep.subr.mxu0 0.0
    %1501 = vmatpush1.msra.mxu0 0.0
    %1502 = vmatprep.subr.mxu0 0.0
    %1503 = vmatpush1.msra.mxu0 0.0
    %1504 = vmatprep.subr.mxu0 0.0
    %1505 = vmatpush1.msra.mxu0 0.0
    %1506 = vmatprep.subr.mxu0 0.0
    %1507 = vmatpush1.msra.mxu0 0.0
    %1508 = vmatprep.subr.mxu0 0.0
    %1509 = vmatpush1.msra.mxu0 0.0
    %1510 = vmatprep.subr.mxu0 0.0
    %1511 = vmatpush1.msra.mxu0 0.0
    %1512 = vmatprep.subr.mxu0 0.0
    %1513 = vmatpush1.msra.mxu0 0.0
    %1514 = vmatprep.subr.mxu0 0.0
    %1515 = vmatpush1.msra.mxu0 0.0
    %1516 = vmatprep.subr.mxu0 0.0
    %1517 = vmatpush1.msra.mxu0 0.0
    %1518 = vmatprep.subr.mxu0 0.0
    %1519 = vmatpush1.msra.mxu0 0.0
    %1520 = vmatprep.mubr.f32.mxu0 0.0
    %1521 = vmatmul.mubr.f32.gmra.mrb[0].mxu0 %v1454
    %v1522 = vpop.f32.mrb[0].mxu0
    %v1523 = vadd.f32 0.0, %v1522
    %v1524 = vpop.f32.mrb[0].mxu0
    %1525 = vdwg.mxu0
    %v1526 = vadd.f32 %v1453, %v1523
    %v1527 = vxor.u32 %v1452, 2147483648
    %v1528 = vmul.f32 %v1527, 1.442695
    %v1529 = vpow.pop %v1528
    %v1530 = vadd.f32 %v1529, 1.0
    %v1531 = vrcp.pop %v1530
    %v1532 = vmul.f32 1.0, %v1531
    %v1533 = vtanh.pop %v1452
    %v1534 = vmul.f32 %v1532, %v1338
    %1536 = vrot.lane.b32.xlu0 %v1533, 64
    %v1537 = vpop.permute.xlu0 %1536
    %v1539 = vmul.f32 %v1532, %v1537
    %1541 = vrot.lane.b32.xlu0 %v1539, 32
    %v1542 = vpop.permute.xlu0 %1541
    %v1544 = vadd.f32 %v1534, %v1542
    %v1545 = vtanh.pop %v1544
    %1547 = vrot.lane.b32.xlu0 %v1545, 64
    %v1548 = vpop.permute.xlu0 %1547
    %v1550 = vmul.f32 %v1532, %v1548
    %v1551 = vxor.u32 %v1526, 2147483648
    %v1552 = vmul.f32 %v1551, 1.442695
    %v1553 = vpow.pop %v1552
    %v1554 = vadd.f32 %v1553, 1.0
    %v1555 = vrcp.pop %v1554
    %v1556 = vmul.f32 1.0, %v1555
    %v1557 = vtanh.pop %v1526
    %v1558 = vmul.f32 %v1556, %v1362
    %1560 = vrot.lane.b32.xlu0 %v1557, 64
    %v1561 = vpop.permute.xlu0 %1560
    %v1563 = vmul.f32 %v1556, %v1561
    %1565 = vrot.lane.b32.xlu0 %v1563, 32
    %v1566 = vpop.permute.xlu0 %1565
    %v1568 = vadd.f32 %v1558, %v1566
    %v1569 = vtanh.pop %v1568
    %1571 = vrot.lane.b32.xlu0 %v1569, 64
    %v1572 = vpop.permute.xlu0 %1571
    %v1574 = vmul.f32 %v1556, %v1572
    %1576 = vrot.lane.b32.xlu0 %v1550, 32
    %v1577 = vpop.permute.xlu0 %1576
    %1579 = vst.msk [vmem:[#allocation4 + $0x6] sm:$0x1] %vm342, %v1577
    %1581 = vrot.lane.b32.xlu0 %v1574, 32
    %v1582 = vpop.permute.xlu0 %1581
    %1584 = vst.msk [vmem:[#allocation5 + $0x1] sm:$0x1] %vm342, %v1582
    %v1585 = vld [vmem:[#allocation2 + $0x7] sm:$0x1]
    %v1586 = vsel %vm66, %v1577, 0
    %1588 = vmatprep.subr.mxu0 0.0
    %1589 = vmatpush1.msra.mxu0 %v37
    %1590 = vmatprep.subr.mxu0 0.0
    %1591 = vmatpush1.msra.mxu0 %v38
    %1592 = vmatprep.subr.mxu0 0.0
    %1593 = vmatpush1.msra.mxu0 %v39
    %1594 = vmatprep.subr.mxu0 0.0
    %1595 = vmatpush1.msra.mxu0 %v40
    %1596 = vmatprep.subr.mxu0 0.0
    %1597 = vmatpush1.msra.mxu0 0.0
    %1598 = vmatprep.subr.mxu0 0.0
    %1599 = vmatpush1.msra.mxu0 0.0
    %1600 = vmatprep.subr.mxu0 0.0
    %1601 = vmatpush1.msra.mxu0 0.0
    %1602 = vmatprep.subr.mxu0 0.0
    %1603 = vmatpush1.msra.mxu0 0.0
    %1604 = vmatprep.subr.mxu0 0.0
    %1605 = vmatpush1.msra.mxu0 0.0
    %1606 = vmatprep.subr.mxu0 0.0
    %1607 = vmatpush1.msra.mxu0 0.0
    %1608 = vmatprep.subr.mxu0 0.0
    %1609 = vmatpush1.msra.mxu0 0.0
    %1610 = vmatprep.subr.mxu0 0.0
    %1611 = vmatpush1.msra.mxu0 0.0
    %1612 = vmatprep.subr.mxu0 0.0
    %1613 = vmatpush1.msra.mxu0 0.0
    %1614 = vmatprep.subr.mxu0 0.0
    %1615 = vmatpush1.msra.mxu0 0.0
    %1616 = vmatprep.subr.mxu0 0.0
    %1617 = vmatpush1.msra.mxu0 0.0
    %1618 = vmatprep.subr.mxu0 0.0
    %1619 = vmatpush1.msra.mxu0 0.0
    %1620 = vmatprep.subr.mxu0 0.0
    %1621 = vmatpush1.msra.mxu0 0.0
    %1622 = vmatprep.subr.mxu0 0.0
    %1623 = vmatpush1.msra.mxu0 0.0
    %1624 = vmatprep.subr.mxu0 0.0
    %1625 = vmatpush1.msra.mxu0 0.0
    %1626 = vmatprep.subr.mxu0 0.0
    %1627 = vmatpush1.msra.mxu0 0.0
    %1628 = vmatprep.subr.mxu0 0.0
    %1629 = vmatpush1.msra.mxu0 0.0
    %1630 = vmatprep.subr.mxu0 0.0
    %1631 = vmatpush1.msra.mxu0 0.0
    %1632 = vmatprep.subr.mxu0 0.0
    %1633 = vmatpush1.msra.mxu0 0.0
    %1634 = vmatprep.subr.mxu0 0.0
    %1635 = vmatpush1.msra.mxu0 0.0
    %1636 = vmatprep.subr.mxu0 0.0
    %1637 = vmatpush1.msra.mxu0 0.0
    %1638 = vmatprep.subr.mxu0 0.0
    %1639 = vmatpush1.msra.mxu0 0.0
    %1640 = vmatprep.subr.mxu0 0.0
    %1641 = vmatpush1.msra.mxu0 0.0
    %1642 = vmatprep.subr.mxu0 0.0
    %1643 = vmatpush1.msra.mxu0 0.0
    %1644 = vmatprep.subr.mxu0 0.0
    %1645 = vmatpush1.msra.mxu0 0.0
    %1646 = vmatprep.subr.mxu0 0.0
    %1647 = vmatpush1.msra.mxu0 0.0
    %1648 = vmatprep.subr.mxu0 0.0
    %1649 = vmatpush1.msra.mxu0 0.0
    %1650 = vmatprep.subr.mxu0 0.0
    %1651 = vmatpush1.msra.mxu0 0.0
    %1652 = vmatprep.mubr.f32.mxu0 0.0
    %1653 = vmatmul.mubr.f32.gmra.mrb[0].mxu0 %v1586
    %v1654 = vpop.f32.mrb[0].mxu0
    %v1655 = vadd.f32 0.0, %v1654
    %v1656 = vpop.f32.mrb[0].mxu0
    %1657 = vdwg.mxu0
    %v1658 = vadd.f32 %v1585, %v1655
    %v1659 = vld [vmem:[#allocation3] sm:$0x1]
    %v1660 = vsel %vm66, %v1582, 0
    %1662 = vmatprep.subr.mxu0 0.0
    %1663 = vmatpush1.msra.mxu0 %v41
    %1664 = vmatprep.subr.mxu0 0.0
    %1665 = vmatpush1.msra.mxu0 %v42
    %1666 = vmatprep.subr.mxu0 0.0
    %1667 = vmatpush1.msra.mxu0 %v43
    %1668 = vmatprep.subr.mxu0 0.0
    %1669 = vmatpush1.msra.mxu0 %v44
    %1670 = vmatprep.subr.mxu0 0.0
    %1671 = vmatpush1.msra.mxu0 0.0
    %1672 = vmatprep.subr.mxu0 0.0
    %1673 = vmatpush1.msra.mxu0 0.0
    %1674 = vmatprep.subr.mxu0 0.0
    %1675 = vmatpush1.msra.mxu0 0.0
    %1676 = vmatprep.subr.mxu0 0.0
    %1677 = vmatpush1.msra.mxu0 0.0
    %1678 = vmatprep.subr.mxu0 0.0
    %1679 = vmatpush1.msra.mxu0 0.0
    %1680 = vmatprep.subr.mxu0 0.0
    %1681 = vmatpush1.msra.mxu0 0.0
    %1682 = vmatprep.subr.mxu0 0.0
    %1683 = vmatpush1.msra.mxu0 0.0
    %1684 = vmatprep.subr.mxu0 0.0
    %1685 = vmatpush1.msra.mxu0 0.0
    %1686 = vmatprep.subr.mxu0 0.0
    %1687 = vmatpush1.msra.mxu0 0.0
    %1688 = vmatprep.subr.mxu0 0.0
    %1689 = vmatpush1.msra.mxu0 0.0
    %1690 = vmatprep.subr.mxu0 0.0
    %1691 = vmatpush1.msra.mxu0 0.0
    %1692 = vmatprep.subr.mxu0 0.0
    %1693 = vmatpush1.msra.mxu0 0.0
    %1694 = vmatprep.subr.mxu0 0.0
    %1695 = vmatpush1.msra.mxu0 0.0
    %1696 = vmatprep.subr.mxu0 0.0
    %1697 = vmatpush1.msra.mxu0 0.0
    %1698 = vmatprep.subr.mxu0 0.0
    %1699 = vmatpush1.msra.mxu0 0.0
    %1700 = vmatprep.subr.mxu0 0.0
    %1701 = vmatpush1.msra.mxu0 0.0
    %1702 = vmatprep.subr.mxu0 0.0
    %1703 = vmatpush1.msra.mxu0 0.0
    %1704 = vmatprep.subr.mxu0 0.0
    %1705 = vmatpush1.msra.mxu0 0.0
    %1706 = vmatprep.subr.mxu0 0.0
    %1707 = vmatpush1.msra.mxu0 0.0
    %1708 = vmatprep.subr.mxu0 0.0
    %1709 = vmatpush1.msra.mxu0 0.0
    %1710 = vmatprep.subr.mxu0 0.0
    %1711 = vmatpush1.msra.mxu0 0.0
    %1712 = vmatprep.subr.mxu0 0.0
    %1713 = vmatpush1.msra.mxu0 0.0
    %1714 = vmatprep.subr.mxu0 0.0
    %1715 = vmatpush1.msra.mxu0 0.0
    %1716 = vmatprep.subr.mxu0 0.0
    %1717 = vmatpush1.msra.mxu0 0.0
    %1718 = vmatprep.subr.mxu0 0.0
    %1719 = vmatpush1.msra.mxu0 0.0
    %1720 = vmatprep.subr.mxu0 0.0
    %1721 = vmatpush1.msra.mxu0 0.0
    %1722 = vmatprep.subr.mxu0 0.0
    %1723 = vmatpush1.msra.mxu0 0.0
    %1724 = vmatprep.subr.mxu0 0.0
    %1725 = vmatpush1.msra.mxu0 0.0
    %1726 = vmatprep.mubr.f32.mxu0 0.0
    %1727 = vmatmul.mubr.f32.gmra.mrb[0].mxu0 %v1660
    %v1728 = vpop.f32.mrb[0].mxu0
    %v1729 = vadd.f32 0.0, %v1728
    %v1730 = vpop.f32.mrb[0].mxu0
    %1731 = vdwg.mxu0
    %v1732 = vadd.f32 %v1659, %v1729
    %v1733 = vxor.u32 %v1658, 2147483648
    %v1734 = vmul.f32 %v1733, 1.442695
    %v1735 = vpow.pop %v1734
    %v1736 = vadd.f32 %v1735, 1.0
    %v1737 = vrcp.pop %v1736
    %v1738 = vmul.f32 1.0, %v1737
    %v1739 = vtanh.pop %v1658
    %v1740 = vmul.f32 %v1738, %v1544
    %1742 = vrot.lane.b32.xlu0 %v1739, 64
    %v1743 = vpop.permute.xlu0 %1742
    %v1745 = vmul.f32 %v1738, %v1743
    %1747 = vrot.lane.b32.xlu0 %v1745, 32
    %v1748 = vpop.permute.xlu0 %1747
    %v1750 = vadd.f32 %v1740, %v1748
    %v1751 = vtanh.pop %v1750
    %1753 = vrot.lane.b32.xlu0 %v1751, 64
    %v1754 = vpop.permute.xlu0 %1753
    %v1756 = vmul.f32 %v1738, %v1754
    %v1757 = vxor.u32 %v1732, 2147483648
    %v1758 = vmul.f32 %v1757, 1.442695
    %v1759 = vpow.pop %v1758
    %v1760 = vadd.f32 %v1759, 1.0
    %v1761 = vrcp.pop %v1760
    %v1762 = vmul.f32 1.0, %v1761
    %v1763 = vtanh.pop %v1732
    %v1764 = vmul.f32 %v1762, %v1568
    %1766 = vrot.lane.b32.xlu0 %v1763, 64
    %v1767 = vpop.permute.xlu0 %1766
    %v1769 = vmul.f32 %v1762, %v1767
    %1771 = vrot.lane.b32.xlu0 %v1769, 32
    %v1772 = vpop.permute.xlu0 %1771
    %v1774 = vadd.f32 %v1764, %v1772
    %v1775 = vtanh.pop %v1774
    %1777 = vrot.lane.b32.xlu0 %v1775, 64
    %v1778 = vpop.permute.xlu0 %1777
    %v1780 = vmul.f32 %v1762, %v1778
    %1782 = vrot.lane.b32.xlu0 %v1756, 32
    %v1783 = vpop.permute.xlu0 %1782
    %1785 = vst.msk [vmem:[#allocation4 + $0x7] sm:$0x1] %vm342, %v1783
    %1787 = vrot.lane.b32.xlu0 %v1780, 32
    %v1788 = vpop.permute.xlu0 %1787
    %1790 = vst.msk [vmem:[#allocation5] sm:$0x1] %vm342, %v1788
    %1791 = vst.msk [vmem:[#allocation8] sm:$0x1] %vm342, %v1783
    %1792 = vst.msk [vmem:[#allocation8 + $0x1] sm:$0x1] %vm342, %v1788
    %1794 = vrot.lane.b32.xlu0 %v1750, 96
    %v1795 = vpop.permute.xlu0 %1794
    %1797 = vst.msk [vmem:[#allocation10] sm:$0x1] %vm342, %v1795
    %1799 = vrot.lane.b32.xlu0 %v1774, 96
    %v1800 = vpop.permute.xlu0 %1799
    %1802 = vst.msk [vmem:[#allocation10 + $0x1] sm:$0x1] %vm342, %v1800
    %v1803 = vld [vmem:[%s7] sm:$0xff]
    %v1804 = vld [vmem:[%s7 + $0x8] sm:$0xff]
    %v1805 = vld [vmem:[%s7 + $0x10] sm:$0xff]
    %v1806 = vld [vmem:[%s7 + $0x18] sm:$0xff]
    %v1807 = vld [vmem:[%s8] sm:$0xff]
    %v1808 = vld [vmem:[%s8 + $0x8] sm:$0xff]
    %v1809 = vld [vmem:[%s8 + $0x10] sm:$0xff]
    %v1810 = vld [vmem:[%s8 + $0x18] sm:$0xff]
    %v1811 = vld [vmem:[%s6] sm:$0x3]
    %v1812 = vld [vmem:[#allocation4] sm:$0xff]
    %v1813 = vld [vmem:[#allocation5] sm:$0xff]
    %1815 = vrot.lane.b32.xlu0 %v1813, 32
    %v1816 = vpop.permute.xlu0 %1815
    %v1818 = vsel %vm66, %v1812, %v1816
    %v1819 = vld [vmem:[%s5] sm:$0xff]
    %v1820 = vld [vmem:[%s5 + $0x8] sm:$0xff]
    %v1821 = vld [vmem:[%s5 + $0x10] sm:$0xff]
    %v1822 = vld [vmem:[%s5 + $0x18] sm:$0xff]
    %v1823 = vld [vmem:[%s5 + $0x20] sm:$0xff]
    %v1824 = vld [vmem:[%s5 + $0x28] sm:$0xff]
    %v1825 = vld [vmem:[%s5 + $0x30] sm:$0xff]
    %v1826 = vld [vmem:[%s5 + $0x38] sm:$0xff]
    %v1827 = vld [vmem:[%s5 + $0x40] sm:$0xff]
    %v1828 = vld [vmem:[%s5 + $0x48] sm:$0xff]
    %v1829 = vld [vmem:[%s5 + $0x50] sm:$0xff]
    %v1830 = vld [vmem:[%s5 + $0x58] sm:$0xff]
    %v1831 = vld [vmem:[%s5 + $0x60] sm:$0xff]
    %v1832 = vld [vmem:[%s5 + $0x68] sm:$0xff]
    %v1833 = vld [vmem:[%s5 + $0x70] sm:$0xff]
    %v1834 = vld [vmem:[%s5 + $0x78] sm:$0xff]
    %v1836 = vlaneseq
    %v1837 = vshrl.u32 %v1836, 7
    %v1838 = vsub.s32 0, %v1837
    %v1839 = vrot.slane %v1811, %v1838
    %v1840 = vlaneseq
    %v1841 = vshrl.u32 %v1840, 7
    %v1842 = vsub.s32 1, %v1841
    %v1843 = vrot.slane %v1811, %v1842
    %vm1846 = vcmask 523264
    %v1848 = vsel %vm1846, %v1818, 0
    %1850 = vmatprep.subr.mxu0 %v1820
    %1851 = vmatpush1.msra.mxu0 %v1819
    %1852 = vmatprep.subr.mxu0 %v1822
    %1853 = vmatpush1.msra.mxu0 %v1821
    %1854 = vmatprep.subr.mxu0 %v1824
    %1855 = vmatpush1.msra.mxu0 %v1823
    %1856 = vmatprep.subr.mxu0 %v1826
    %1857 = vmatpush1.msra.mxu0 %v1825
    %1858 = vmatprep.subr.mxu0 %v1828
    %1859 = vmatpush1.msra.mxu0 %v1827
    %1860 = vmatprep.subr.mxu0 %v1830
    %1861 = vmatpush1.msra.mxu0 %v1829
    %1862 = vmatprep.subr.mxu0 %v1832
    %1863 = vmatpush1.msra.mxu0 %v1831
    %1864 = vmatprep.subr.mxu0 %v1834
    %1865 = vmatpush1.msra.mxu0 %v1833
    %1866 = vmatprep.subr.mxu0 0.0
    %1867 = vmatpush1.msra.mxu0 0.0
    %1868 = vmatprep.subr.mxu0 0.0
    %1869 = vmatpush1.msra.mxu0 0.0
    %1870 = vmatprep.subr.mxu0 0.0
    %1871 = vmatpush1.msra.mxu0 0.0
    %1872 = vmatprep.subr.mxu0 0.0
    %1873 = vmatpush1.msra.mxu0 0.0
    %1874 = vmatprep.subr.mxu0 0.0
    %1875 = vmatpush1.msra.mxu0 0.0
    %1876 = vmatprep.subr.mxu0 0.0
    %1877 = vmatpush1.msra.mxu0 0.0
    %1878 = vmatprep.subr.mxu0 0.0
    %1879 = vmatpush1.msra.mxu0 0.0
    %1880 = vmatprep.subr.mxu0 0.0
    %1881 = vmatpush1.msra.mxu0 0.0
    %1882 = vmatprep.subr.mxu0 0.0
    %1883 = vmatpush1.msra.mxu0 0.0
    %1884 = vmatprep.subr.mxu0 0.0
    %1885 = vmatpush1.msra.mxu0 0.0
    %1886 = vmatprep.subr.mxu0 0.0
    %1887 = vmatpush1.msra.mxu0 0.0
    %1888 = vmatprep.subr.mxu0 0.0
    %1889 = vmatpush1.msra.mxu0 0.0
    %1890 = vmatprep.subr.mxu0 0.0
    %1891 = vmatpush1.msra.mxu0 0.0
    %1892 = vmatprep.subr.mxu0 0.0
    %1893 = vmatpush1.msra.mxu0 0.0
    %1894 = vmatprep.subr.mxu0 0.0
    %1895 = vmatpush1.msra.mxu0 0.0
    %1896 = vmatprep.subr.mxu0 0.0
    %1897 = vmatpush1.msra.mxu0 0.0
    %1898 = vmatprep.subr.mxu0 0.0
    %1899 = vmatpush1.msra.mxu0 0.0
    %1900 = vmatprep.subr.mxu0 0.0
    %1901 = vmatpush1.msra.mxu0 0.0
    %1902 = vmatprep.subr.mxu0 0.0
    %1903 = vmatpush1.msra.mxu0 0.0
    %1904 = vmatprep.subr.mxu0 0.0
    %1905 = vmatpush1.msra.mxu0 0.0
    %1906 = vmatprep.subr.mxu0 0.0
    %1907 = vmatpush1.msra.mxu0 0.0
    %1908 = vmatprep.subr.mxu0 0.0
    %1909 = vmatpush1.msra.mxu0 0.0
    %1910 = vmatprep.subr.mxu0 0.0
    %1911 = vmatpush1.msra.mxu0 0.0
    %1912 = vmatprep.subr.mxu0 0.0
    %1913 = vmatpush1.msra.mxu0 0.0
    %1914 = vmatprep.mubr.f32.mxu0 0.0
    %1915 = vmatmul.mubr.f32.gmra.mrb[0].mxu0 %v1848
    %v1916 = vpop.f32.mrb[0].mxu0
    %v1917 = vadd.f32 %v1839, %v1916
    %v1918 = vpop.f32.mrb[0].mxu0
    %v1919 = vadd.f32 %v1843, %v1918
    %1920 = vdwg.mxu0
    %1921 = vst [vmem:[#allocation2] sm:$0xff] %v1917
    %1922 = vst [vmem:[#allocation3] sm:$0xff] %v1919
    %v1923 = vld [vmem:[#allocation2] sm:$0x1]
    %1924 = vmatprep.subr.mxu0 0.0
    %1925 = vmatpush1.msra.mxu0 %v1803
    %1926 = vmatprep.subr.mxu0 0.0
    %1927 = vmatpush1.msra.mxu0 %v1804
    %1928 = vmatprep.subr.mxu0 0.0
    %1929 = vmatpush1.msra.mxu0 %v1805
    %1930 = vmatprep.subr.mxu0 0.0
    %1931 = vmatpush1.msra.mxu0 %v1806
    %1932 = vmatprep.subr.mxu0 0.0
    %1933 = vmatpush1.msra.mxu0 0.0
    %1934 = vmatprep.subr.mxu0 0.0
    %1935 = vmatpush1.msra.mxu0 0.0
    %1936 = vmatprep.subr.mxu0 0.0
    %1937 = vmatpush1.msra.mxu0 0.0
    %1938 = vmatprep.subr.mxu0 0.0
    %1939 = vmatpush1.msra.mxu0 0.0
    %1940 = vmatprep.subr.mxu0 0.0
    %1941 = vmatpush1.msra.mxu0 0.0
    %1942 = vmatprep.subr.mxu0 0.0
    %1943 = vmatpush1.msra.mxu0 0.0
    %1944 = vmatprep.subr.mxu0 0.0
    %1945 = vmatpush1.msra.mxu0 0.0
    %1946 = vmatprep.subr.mxu0 0.0
    %1947 = vmatpush1.msra.mxu0 0.0
    %1948 = vmatprep.subr.mxu0 0.0
    %1949 = vmatpush1.msra.mxu0 0.0
    %1950 = vmatprep.subr.mxu0 0.0
    %1951 = vmatpush1.msra.mxu0 0.0
    %1952 = vmatprep.subr.mxu0 0.0
    %1953 = vmatpush1.msra.mxu0 0.0
    %1954 = vmatprep.subr.mxu0 0.0
    %1955 = vmatpush1.msra.mxu0 0.0
    %1956 = vmatprep.subr.mxu0 0.0
    %1957 = vmatpush1.msra.mxu0 0.0
    %1958 = vmatprep.subr.mxu0 0.0
    %1959 = vmatpush1.msra.mxu0 0.0
    %1960 = vmatprep.subr.mxu0 0.0
    %1961 = vmatpush1.msra.mxu0 0.0
    %1962 = vmatprep.subr.mxu0 0.0
    %1963 = vmatpush1.msra.mxu0 0.0
    %1964 = vmatprep.subr.mxu0 0.0
    %1965 = vmatpush1.msra.mxu0 0.0
    %1966 = vmatprep.subr.mxu0 0.0
    %1967 = vmatpush1.msra.mxu0 0.0
    %1968 = vmatprep.subr.mxu0 0.0
    %1969 = vmatpush1.msra.mxu0 0.0
    %1970 = vmatprep.subr.mxu0 0.0
    %1971 = vmatpush1.msra.mxu0 0.0
    %1972 = vmatprep.subr.mxu0 0.0
    %1973 = vmatpush1.msra.mxu0 0.0
    %1974 = vmatprep.subr.mxu0 0.0
    %1975 = vmatpush1.msra.mxu0 0.0
    %1976 = vmatprep.subr.mxu0 0.0
    %1977 = vmatpush1.msra.mxu0 0.0
    %1978 = vmatprep.subr.mxu0 0.0
    %1979 = vmatpush1.msra.mxu0 0.0
    %1980 = vmatprep.subr.mxu0 0.0
    %1981 = vmatpush1.msra.mxu0 0.0
    %1982 = vmatprep.subr.mxu0 0.0
    %1983 = vmatpush1.msra.mxu0 0.0
    %1984 = vmatprep.subr.mxu0 0.0
    %1985 = vmatpush1.msra.mxu0 0.0
    %1986 = vmatprep.subr.mxu0 0.0
    %1987 = vmatpush1.msra.mxu0 0.0
    %1988 = vmatprep.mubr.f32.mxu0 0.0
    %1989 = vmatmul.mubr.f32.gmra.mrb[0].mxu0 %v145
    %v1990 = vpop.f32.mrb[0].mxu0
    %v1991 = vadd.f32 0.0, %v1990
    %v1992 = vpop.f32.mrb[0].mxu0
    %1993 = vdwg.mxu0
    %v1994 = vadd.f32 %v1923, %v1991
    %v1995 = vld [vmem:[#allocation3 + $0x7] sm:$0x1]
    %1996 = vmatprep.subr.mxu0 0.0
    %1997 = vmatpush1.msra.mxu0 %v1807
    %1998 = vmatprep.subr.mxu0 0.0
    %1999 = vmatpush1.msra.mxu0 %v1808
    %2000 = vmatprep.subr.mxu0 0.0
    %2001 = vmatpush1.msra.mxu0 %v1809
    %2002 = vmatprep.subr.mxu0 0.0
    %2003 = vmatpush1.msra.mxu0 %v1810
    %2004 = vmatprep.subr.mxu0 0.0
    %2005 = vmatpush1.msra.mxu0 0.0
    %2006 = vmatprep.subr.mxu0 0.0
    %2007 = vmatpush1.msra.mxu0 0.0
    %2008 = vmatprep.subr.mxu0 0.0
    %2009 = vmatpush1.msra.mxu0 0.0
    %2010 = vmatprep.subr.mxu0 0.0
    %2011 = vmatpush1.msra.mxu0 0.0
    %2012 = vmatprep.subr.mxu0 0.0
    %2013 = vmatpush1.msra.mxu0 0.0
    %2014 = vmatprep.subr.mxu0 0.0
    %2015 = vmatpush1.msra.mxu0 0.0
    %2016 = vmatprep.subr.mxu0 0.0
    %2017 = vmatpush1.msra.mxu0 0.0
    %2018 = vmatprep.subr.mxu0 0.0
    %2019 = vmatpush1.msra.mxu0 0.0
    %2020 = vmatprep.subr.mxu0 0.0
    %2021 = vmatpush1.msra.mxu0 0.0
    %2022 = vmatprep.subr.mxu0 0.0
    %2023 = vmatpush1.msra.mxu0 0.0
    %2024 = vmatprep.subr.mxu0 0.0
    %2025 = vmatpush1.msra.mxu0 0.0
    %2026 = vmatprep.subr.mxu0 0.0
    %2027 = vmatpush1.msra.mxu0 0.0
    %2028 = vmatprep.subr.mxu0 0.0
    %2029 = vmatpush1.msra.mxu0 0.0
    %2030 = vmatprep.subr.mxu0 0.0
    %2031 = vmatpush1.msra.mxu0 0.0
    %2032 = vmatprep.subr.mxu0 0.0
    %2033 = vmatpush1.msra.mxu0 0.0
    %2034 = vmatprep.subr.mxu0 0.0
    %2035 = vmatpush1.msra.mxu0 0.0
    %2036 = vmatprep.subr.mxu0 0.0
    %2037 = vmatpush1.msra.mxu0 0.0
    %2038 = vmatprep.subr.mxu0 0.0
    %2039 = vmatpush1.msra.mxu0 0.0
    %2040 = vmatprep.subr.mxu0 0.0
    %2041 = vmatpush1.msra.mxu0 0.0
    %2042 = vmatprep.subr.mxu0 0.0
    %2043 = vmatpush1.msra.mxu0 0.0
    %2044 = vmatprep.subr.mxu0 0.0
    %2045 = vmatpush1.msra.mxu0 0.0
    %2046 = vmatprep.subr.mxu0 0.0
    %2047 = vmatpush1.msra.mxu0 0.0
    %2048 = vmatprep.subr.mxu0 0.0
    %2049 = vmatpush1.msra.mxu0 0.0
    %2050 = vmatprep.subr.mxu0 0.0
    %2051 = vmatpush1.msra.mxu0 0.0
    %2052 = vmatprep.subr.mxu0 0.0
    %2053 = vmatpush1.msra.mxu0 0.0
    %2054 = vmatprep.subr.mxu0 0.0
    %2055 = vmatpush1.msra.mxu0 0.0
    %2056 = vmatprep.subr.mxu0 0.0
    %2057 = vmatpush1.msra.mxu0 0.0
    %2058 = vmatprep.subr.mxu0 0.0
    %2059 = vmatpush1.msra.mxu0 0.0
    %2060 = vmatprep.mubr.f32.mxu0 0.0
    %2061 = vmatmul.mubr.f32.gmra.mrb[0].mxu0 %v145
    %v2062 = vpop.f32.mrb[0].mxu0
    %v2063 = vadd.f32 0.0, %v2062
    %v2064 = vpop.f32.mrb[0].mxu0
    %2065 = vdwg.mxu0
    %v2066 = vadd.f32 %v1995, %v2063
    %v2067 = vxor.u32 %v1994, 2147483648
    %v2068 = vmul.f32 %v2067, 1.442695
    %v2069 = vpow.pop %v2068
    %v2070 = vadd.f32 %v2069, 1.0
    %v2071 = vrcp.pop %v2070
    %v2072 = vmul.f32 1.0, %v2071
    %v2073 = vtanh.pop %v1994
    %v2074 = vmul.f32 %v2072, 0.0
    %2076 = vrot.lane.b32.xlu0 %v2073, 64
    %v2077 = vpop.permute.xlu0 %2076
    %v2079 = vmul.f32 %v2072, %v2077
    %2081 = vrot.lane.b32.xlu0 %v2079, 32
    %v2082 = vpop.permute.xlu0 %2081
    %v2084 = vadd.f32 %v2074, %v2082
    %v2085 = vtanh.pop %v2084
    %2087 = vrot.lane.b32.xlu0 %v2085, 64
    %v2088 = vpop.permute.xlu0 %2087
    %v2090 = vmul.f32 %v2072, %v2088
    %v2091 = vxor.u32 %v2066, 2147483648
    %v2092 = vmul.f32 %v2091, 1.442695
    %v2093 = vpow.pop %v2092
    %v2094 = vadd.f32 %v2093, 1.0
    %v2095 = vrcp.pop %v2094
    %v2096 = vmul.f32 1.0, %v2095
    %v2097 = vtanh.pop %v2066
    %v2098 = vmul.f32 %v2096, 0.0
    %2100 = vrot.lane.b32.xlu0 %v2097, 64
    %v2101 = vpop.permute.xlu0 %2100
    %v2103 = vmul.f32 %v2096, %v2101
    %2105 = vrot.lane.b32.xlu0 %v2103, 32
    %v2106 = vpop.permute.xlu0 %2105
    %v2108 = vadd.f32 %v2098, %v2106
    %v2109 = vtanh.pop %v2108
    %2111 = vrot.lane.b32.xlu0 %v2109, 64
    %v2112 = vpop.permute.xlu0 %2111
    %v2114 = vmul.f32 %v2096, %v2112
    %2116 = vrot.lane.b32.xlu0 %v2090, 32
    %v2117 = vpop.permute.xlu0 %2116
    %2119 = vst.msk [vmem:[#allocation4] sm:$0x1] %vm342, %v2117
    %2121 = vrot.lane.b32.xlu0 %v2114, 32
    %v2122 = vpop.permute.xlu0 %2121
    %2124 = vst.msk [vmem:[#allocation5 + $0x7] sm:$0x1] %vm342, %v2122
    %v2125 = vld [vmem:[#allocation2 + $0x1] sm:$0x1]
    %v2126 = vsel %vm66, %v2117, 0
    %2128 = vmatprep.subr.mxu0 0.0
    %2129 = vmatpush1.msra.mxu0 %v1803
    %2130 = vmatprep.subr.mxu0 0.0
    %2131 = vmatpush1.msra.mxu0 %v1804
    %2132 = vmatprep.subr.mxu0 0.0
    %2133 = vmatpush1.msra.mxu0 %v1805
    %2134 = vmatprep.subr.mxu0 0.0
    %2135 = vmatpush1.msra.mxu0 %v1806
    %2136 = vmatprep.subr.mxu0 0.0
    %2137 = vmatpush1.msra.mxu0 0.0
    %2138 = vmatprep.subr.mxu0 0.0
    %2139 = vmatpush1.msra.mxu0 0.0
    %2140 = vmatprep.subr.mxu0 0.0
    %2141 = vmatpush1.msra.mxu0 0.0
    %2142 = vmatprep.subr.mxu0 0.0
    %2143 = vmatpush1.msra.mxu0 0.0
    %2144 = vmatprep.subr.mxu0 0.0
    %2145 = vmatpush1.msra.mxu0 0.0
    %2146 = vmatprep.subr.mxu0 0.0
    %2147 = vmatpush1.msra.mxu0 0.0
    %2148 = vmatprep.subr.mxu0 0.0
    %2149 = vmatpush1.msra.mxu0 0.0
    %2150 = vmatprep.subr.mxu0 0.0
    %2151 = vmatpush1.msra.mxu0 0.0
    %2152 = vmatprep.subr.mxu0 0.0
    %2153 = vmatpush1.msra.mxu0 0.0
    %2154 = vmatprep.subr.mxu0 0.0
    %2155 = vmatpush1.msra.mxu0 0.0
    %2156 = vmatprep.subr.mxu0 0.0
    %2157 = vmatpush1.msra.mxu0 0.0
    %2158 = vmatprep.subr.mxu0 0.0
    %2159 = vmatpush1.msra.mxu0 0.0
    %2160 = vmatprep.subr.mxu0 0.0
    %2161 = vmatpush1.msra.mxu0 0.0
    %2162 = vmatprep.subr.mxu0 0.0
    %2163 = vmatpush1.msra.mxu0 0.0
    %2164 = vmatprep.subr.mxu0 0.0
    %2165 = vmatpush1.msra.mxu0 0.0
    %2166 = vmatprep.subr.mxu0 0.0
    %2167 = vmatpush1.msra.mxu0 0.0
    %2168 = vmatprep.subr.mxu0 0.0
    %2169 = vmatpush1.msra.mxu0 0.0
    %2170 = vmatprep.subr.mxu0 0.0
    %2171 = vmatpush1.msra.mxu0 0.0
    %2172 = vmatprep.subr.mxu0 0.0
    %2173 = vmatpush1.msra.mxu0 0.0
    %2174 = vmatprep.subr.mxu0 0.0
    %2175 = vmatpush1.msra.mxu0 0.0
    %2176 = vmatprep.subr.mxu0 0.0
    %2177 = vmatpush1.msra.mxu0 0.0
    %2178 = vmatprep.subr.mxu0 0.0
    %2179 = vmatpush1.msra.mxu0 0.0
    %2180 = vmatprep.subr.mxu0 0.0
    %2181 = vmatpush1.msra.mxu0 0.0
    %2182 = vmatprep.subr.mxu0 0.0
    %2183 = vmatpush1.msra.mxu0 0.0
    %2184 = vmatprep.subr.mxu0 0.0
    %2185 = vmatpush1.msra.mxu0 0.0
    %2186 = vmatprep.subr.mxu0 0.0
    %2187 = vmatpush1.msra.mxu0 0.0
    %2188 = vmatprep.subr.mxu0 0.0
    %2189 = vmatpush1.msra.mxu0 0.0
    %2190 = vmatprep.subr.mxu0 0.0
    %2191 = vmatpush1.msra.mxu0 0.0
    %2192 = vmatprep.mubr.f32.mxu0 0.0
    %2193 = vmatmul.mubr.f32.gmra.mrb[0].mxu0 %v2126
    %v2194 = vpop.f32.mrb[0].mxu0
    %v2195 = vadd.f32 0.0, %v2194
    %v2196 = vpop.f32.mrb[0].mxu0
    %2197 = vdwg.mxu0
    %v2198 = vadd.f32 %v2125, %v2195
    %v2199 = vld [vmem:[#allocation3 + $0x6] sm:$0x1]
    %v2200 = vsel %vm66, %v2122, 0
    %2202 = vmatprep.subr.mxu0 0.0
    %2203 = vmatpush1.msra.mxu0 %v1807
    %2204 = vmatprep.subr.mxu0 0.0
    %2205 = vmatpush1.msra.mxu0 %v1808
    %2206 = vmatprep.subr.mxu0 0.0
    %2207 = vmatpush1.msra.mxu0 %v1809
    %2208 = vmatprep.subr.mxu0 0.0
    %2209 = vmatpush1.msra.mxu0 %v1810
    %2210 = vmatprep.subr.mxu0 0.0
    %2211 = vmatpush1.msra.mxu0 0.0
    %2212 = vmatprep.subr.mxu0 0.0
    %2213 = vmatpush1.msra.mxu0 0.0
    %2214 = vmatprep.subr.mxu0 0.0
    %2215 = vmatpush1.msra.mxu0 0.0
    %2216 = vmatprep.subr.mxu0 0.0
    %2217 = vmatpush1.msra.mxu0 0.0
    %2218 = vmatprep.subr.mxu0 0.0
    %2219 = vmatpush1.msra.mxu0 0.0
    %2220 = vmatprep.subr.mxu0 0.0
    %2221 = vmatpush1.msra.mxu0 0.0
    %2222 = vmatprep.subr.mxu0 0.0
    %2223 = vmatpush1.msra.mxu0 0.0
    %2224 = vmatprep.subr.mxu0 0.0
    %2225 = vmatpush1.msra.mxu0 0.0
    %2226 = vmatprep.subr.mxu0 0.0
    %2227 = vmatpush1.msra.mxu0 0.0
    %2228 = vmatprep.subr.mxu0 0.0
    %2229 = vmatpush1.msra.mxu0 0.0
    %2230 = vmatprep.subr.mxu0 0.0
    %2231 = vmatpush1.msra.mxu0 0.0
    %2232 = vmatprep.subr.mxu0 0.0
    %2233 = vmatpush1.msra.mxu0 0.0
    %2234 = vmatprep.subr.mxu0 0.0
    %2235 = vmatpush1.msra.mxu0 0.0
    %2236 = vmatprep.subr.mxu0 0.0
    %2237 = vmatpush1.msra.mxu0 0.0
    %2238 = vmatprep.subr.mxu0 0.0
    %2239 = vmatpush1.msra.mxu0 0.0
    %2240 = vmatprep.subr.mxu0 0.0
    %2241 = vmatpush1.msra.mxu0 0.0
    %2242 = vmatprep.subr.mxu0 0.0
    %2243 = vmatpush1.msra.mxu0 0.0
    %2244 = vmatprep.subr.mxu0 0.0
    %2245 = vmatpush1.msra.mxu0 0.0
    %2246 = vmatprep.subr.mxu0 0.0
    %2247 = vmatpush1.msra.mxu0 0.0
    %2248 = vmatprep.subr.mxu0 0.0
    %2249 = vmatpush1.msra.mxu0 0.0
    %2250 = vmatprep.subr.mxu0 0.0
    %2251 = vmatpush1.msra.mxu0 0.0
    %2252 = vmatprep.subr.mxu0 0.0
    %2253 = vmatpush1.msra.mxu0 0.0
    %2254 = vmatprep.subr.mxu0 0.0
    %2255 = vmatpush1.msra.mxu0 0.0
    %2256 = vmatprep.subr.mxu0 0.0
    %2257 = vmatpush1.msra.mxu0 0.0
    %2258 = vmatprep.subr.mxu0 0.0
    %2259 = vmatpush1.msra.mxu0 0.0
    %2260 = vmatprep.subr.mxu0 0.0
    %2261 = vmatpush1.msra.mxu0 0.0
    %2262 = vmatprep.subr.mxu0 0.0
    %2263 = vmatpush1.msra.mxu0 0.0
    %2264 = vmatprep.subr.mxu0 0.0
    %2265 = vmatpush1.msra.mxu0 0.0
    %2266 = vmatprep.mubr.f32.mxu0 0.0
    %2267 = vmatmul.mubr.f32.gmra.mrb[0].mxu0 %v2200
    %v2268 = vpop.f32.mrb[0].mxu0
    %v2269 = vadd.f32 0.0, %v2268
    %v2270 = vpop.f32.mrb[0].mxu0
    %2271 = vdwg.mxu0
    %v2272 = vadd.f32 %v2199, %v2269
    %v2273 = vxor.u32 %v2198, 2147483648
    %v2274 = vmul.f32 %v2273, 1.442695
    %v2275 = vpow.pop %v2274
    %v2276 = vadd.f32 %v2275, 1.0
    %v2277 = vrcp.pop %v2276
    %v2278 = vmul.f32 1.0, %v2277
    %v2279 = vtanh.pop %v2198
    %v2280 = vmul.f32 %v2278, %v2084
    %2282 = vrot.lane.b32.xlu0 %v2279, 64
    %v2283 = vpop.permute.xlu0 %2282
    %v2285 = vmul.f32 %v2278, %v2283
    %2287 = vrot.lane.b32.xlu0 %v2285, 32
    %v2288 = vpop.permute.xlu0 %2287
    %v2290 = vadd.f32 %v2280, %v2288
    %v2291 = vtanh.pop %v2290
    %2293 = vrot.lane.b32.xlu0 %v2291, 64
    %v2294 = vpop.permute.xlu0 %2293
    %v2296 = vmul.f32 %v2278, %v2294
    %v2297 = vxor.u32 %v2272, 2147483648
    %v2298 = vmul.f32 %v2297, 1.442695
    %v2299 = vpow.pop %v2298
    %v2300 = vadd.f32 %v2299, 1.0
    %v2301 = vrcp.pop %v2300
    %v2302 = vmul.f32 1.0, %v2301
    %v2303 = vtanh.pop %v2272
    %v2304 = vmul.f32 %v2302, %v2108
    %2306 = vrot.lane.b32.xlu0 %v2303, 64
    %v2307 = vpop.permute.xlu0 %2306
    %v2309 = vmul.f32 %v2302, %v2307
    %2311 = vrot.lane.b32.xlu0 %v2309, 32
    %v2312 = vpop.permute.xlu0 %2311
    %v2314 = vadd.f32 %v2304, %v2312
    %v2315 = vtanh.pop %v2314
    %2317 = vrot.lane.b32.xlu0 %v2315, 64
    %v2318 = vpop.permute.xlu0 %2317
    %v2320 = vmul.f32 %v2302, %v2318
    %2322 = vrot.lane.b32.xlu0 %v2296, 32
    %v2323 = vpop.permute.xlu0 %2322
    %2325 = vst.msk [vmem:[#allocation4 + $0x1] sm:$0x1] %vm342, %v2323
    %2327 = vrot.lane.b32.xlu0 %v2320, 32
    %v2328 = vpop.permute.xlu0 %2327
    %2330 = vst.msk [vmem:[#allocation5 + $0x6] sm:$0x1] %vm342, %v2328
    %v2331 = vld [vmem:[#allocation2 + $0x2] sm:$0x1]
    %v2332 = vsel %vm66, %v2323, 0
    %2334 = vmatprep.subr.mxu0 0.0
    %2335 = vmatpush1.msra.mxu0 %v1803
    %2336 = vmatprep.subr.mxu0 0.0
    %2337 = vmatpush1.msra.mxu0 %v1804
    %2338 = vmatprep.subr.mxu0 0.0
    %2339 = vmatpush1.msra.mxu0 %v1805
    %2340 = vmatprep.subr.mxu0 0.0
    %2341 = vmatpush1.msra.mxu0 %v1806
    %2342 = vmatprep.subr.mxu0 0.0
    %2343 = vmatpush1.msra.mxu0 0.0
    %2344 = vmatprep.subr.mxu0 0.0
    %2345 = vmatpush1.msra.mxu0 0.0
    %2346 = vmatprep.subr.mxu0 0.0
    %2347 = vmatpush1.msra.mxu0 0.0
    %2348 = vmatprep.subr.mxu0 0.0
    %2349 = vmatpush1.msra.mxu0 0.0
    %2350 = vmatprep.subr.mxu0 0.0
    %2351 = vmatpush1.msra.mxu0 0.0
    %2352 = vmatprep.subr.mxu0 0.0
    %2353 = vmatpush1.msra.mxu0 0.0
    %2354 = vmatprep.subr.mxu0 0.0
    %2355 = vmatpush1.msra.mxu0 0.0
    %2356 = vmatprep.subr.mxu0 0.0
    %2357 = vmatpush1.msra.mxu0 0.0
    %2358 = vmatprep.subr.mxu0 0.0
    %2359 = vmatpush1.msra.mxu0 0.0
    %2360 = vmatprep.subr.mxu0 0.0
    %2361 = vmatpush1.msra.mxu0 0.0
    %2362 = vmatprep.subr.mxu0 0.0
    %2363 = vmatpush1.msra.mxu0 0.0
    %2364 = vmatprep.subr.mxu0 0.0
    %2365 = vmatpush1.msra.mxu0 0.0
    %2366 = vmatprep.subr.mxu0 0.0
    %2367 = vmatpush1.msra.mxu0 0.0
    %2368 = vmatprep.subr.mxu0 0.0
    %2369 = vmatpush1.msra.mxu0 0.0
    %2370 = vmatprep.subr.mxu0 0.0
    %2371 = vmatpush1.msra.mxu0 0.0
    %2372 = vmatprep.subr.mxu0 0.0
    %2373 = vmatpush1.msra.mxu0 0.0
    %2374 = vmatprep.subr.mxu0 0.0
    %2375 = vmatpush1.msra.mxu0 0.0
    %2376 = vmatprep.subr.mxu0 0.0
    %2377 = vmatpush1.msra.mxu0 0.0
    %2378 = vmatprep.subr.mxu0 0.0
    %2379 = vmatpush1.msra.mxu0 0.0
    %2380 = vmatprep.subr.mxu0 0.0
    %2381 = vmatpush1.msra.mxu0 0.0
    %2382 = vmatprep.subr.mxu0 0.0
    %2383 = vmatpush1.msra.mxu0 0.0
    %2384 = vmatprep.subr.mxu0 0.0
    %2385 = vmatpush1.msra.mxu0 0.0
    %2386 = vmatprep.subr.mxu0 0.0
    %2387 = vmatpush1.msra.mxu0 0.0
    %2388 = vmatprep.subr.mxu0 0.0
    %2389 = vmatpush1.msra.mxu0 0.0
    %2390 = vmatprep.subr.mxu0 0.0
    %2391 = vmatpush1.msra.mxu0 0.0
    %2392 = vmatprep.subr.mxu0 0.0
    %2393 = vmatpush1.msra.mxu0 0.0
    %2394 = vmatprep.subr.mxu0 0.0
    %2395 = vmatpush1.msra.mxu0 0.0
    %2396 = vmatprep.subr.mxu0 0.0
    %2397 = vmatpush1.msra.mxu0 0.0
    %2398 = vmatprep.mubr.f32.mxu0 0.0
    %2399 = vmatmul.mubr.f32.gmra.mrb[0].mxu0 %v2332
    %v2400 = vpop.f32.mrb[0].mxu0
    %v2401 = vadd.f32 0.0, %v2400
    %v2402 = vpop.f32.mrb[0].mxu0
    %2403 = vdwg.mxu0
    %v2404 = vadd.f32 %v2331, %v2401
    %v2405 = vld [vmem:[#allocation3 + $0x5] sm:$0x1]
    %v2406 = vsel %vm66, %v2328, 0
    %2408 = vmatprep.subr.mxu0 0.0
    %2409 = vmatpush1.msra.mxu0 %v1807
    %2410 = vmatprep.subr.mxu0 0.0
    %2411 = vmatpush1.msra.mxu0 %v1808
    %2412 = vmatprep.subr.mxu0 0.0
    %2413 = vmatpush1.msra.mxu0 %v1809
    %2414 = vmatprep.subr.mxu0 0.0
    %2415 = vmatpush1.msra.mxu0 %v1810
    %2416 = vmatprep.subr.mxu0 0.0
    %2417 = vmatpush1.msra.mxu0 0.0
    %2418 = vmatprep.subr.mxu0 0.0
    %2419 = vmatpush1.msra.mxu0 0.0
    %2420 = vmatprep.subr.mxu0 0.0
    %2421 = vmatpush1.msra.mxu0 0.0
    %2422 = vmatprep.subr.mxu0 0.0
    %2423 = vmatpush1.msra.mxu0 0.0
    %2424 = vmatprep.subr.mxu0 0.0
    %2425 = vmatpush1.msra.mxu0 0.0
    %2426 = vmatprep.subr.mxu0 0.0
    %2427 = vmatpush1.msra.mxu0 0.0
    %2428 = vmatprep.subr.mxu0 0.0
    %2429 = vmatpush1.msra.mxu0 0.0
    %2430 = vmatprep.subr.mxu0 0.0
    %2431 = vmatpush1.msra.mxu0 0.0
    %2432 = vmatprep.subr.mxu0 0.0
    %2433 = vmatpush1.msra.mxu0 0.0
    %2434 = vmatprep.subr.mxu0 0.0
    %2435 = vmatpush1.msra.mxu0 0.0
    %2436 = vmatprep.subr.mxu0 0.0
    %2437 = vmatpush1.msra.mxu0 0.0
    %2438 = vmatprep.subr.mxu0 0.0
    %2439 = vmatpush1.msra.mxu0 0.0
    %2440 = vmatprep.subr.mxu0 0.0
    %2441 = vmatpush1.msra.mxu0 0.0
    %2442 = vmatprep.subr.mxu0 0.0
    %2443 = vmatpush1.msra.mxu0 0.0
    %2444 = vmatprep.subr.mxu0 0.0
    %2445 = vmatpush1.msra.mxu0 0.0
    %2446 = vmatprep.subr.mxu0 0.0
    %2447 = vmatpush1.msra.mxu0 0.0
    %2448 = vmatprep.subr.mxu0 0.0
    %2449 = vmatpush1.msra.mxu0 0.0
    %2450 = vmatprep.subr.mxu0 0.0
    %2451 = vmatpush1.msra.mxu0 0.0
    %2452 = vmatprep.subr.mxu0 0.0
    %2453 = vmatpush1.msra.mxu0 0.0
    %2454 = vmatprep.subr.mxu0 0.0
    %2455 = vmatpush1.msra.mxu0 0.0
    %2456 = vmatprep.subr.mxu0 0.0
    %2457 = vmatpush1.msra.mxu0 0.0
    %2458 = vmatprep.subr.mxu0 0.0
    %2459 = vmatpush1.msra.mxu0 0.0
    %2460 = vmatprep.subr.mxu0 0.0
    %2461 = vmatpush1.msra.mxu0 0.0
    %2462 = vmatprep.subr.mxu0 0.0
    %2463 = vmatpush1.msra.mxu0 0.0
    %2464 = vmatprep.subr.mxu0 0.0
    %2465 = vmatpush1.msra.mxu0 0.0
    %2466 = vmatprep.subr.mxu0 0.0
    %2467 = vmatpush1.msra.mxu0 0.0
    %2468 = vmatprep.subr.mxu0 0.0
    %2469 = vmatpush1.msra.mxu0 0.0
    %2470 = vmatprep.subr.mxu0 0.0
    %2471 = vmatpush1.msra.mxu0 0.0
    %2472 = vmatprep.mubr.f32.mxu0 0.0
    %2473 = vmatmul.mubr.f32.gmra.mrb[0].mxu0 %v2406
    %v2474 = vpop.f32.mrb[0].mxu0
    %v2475 = vadd.f32 0.0, %v2474
    %v2476 = vpop.f32.mrb[0].mxu0
    %2477 = vdwg.mxu0
    %v2478 = vadd.f32 %v2405, %v2475
    %v2479 = vxor.u32 %v2404, 2147483648
    %v2480 = vmul.f32 %v2479, 1.442695
    %v2481 = vpow.pop %v2480
    %v2482 = vadd.f32 %v2481, 1.0
    %v2483 = vrcp.pop %v2482
    %v2484 = vmul.f32 1.0, %v2483
    %v2485 = vtanh.pop %v2404
    %v2486 = vmul.f32 %v2484, %v2290
    %2488 = vrot.lane.b32.xlu0 %v2485, 64
    %v2489 = vpop.permute.xlu0 %2488
    %v2491 = vmul.f32 %v2484, %v2489
    %2493 = vrot.lane.b32.xlu0 %v2491, 32
    %v2494 = vpop.permute.xlu0 %2493
    %v2496 = vadd.f32 %v2486, %v2494
    %v2497 = vtanh.pop %v2496
    %2499 = vrot.lane.b32.xlu0 %v2497, 64
    %v2500 = vpop.permute.xlu0 %2499
    %v2502 = vmul.f32 %v2484, %v2500
    %v2503 = vxor.u32 %v2478, 2147483648
    %v2504 = vmul.f32 %v2503, 1.442695
    %v2505 = vpow.pop %v2504
    %v2506 = vadd.f32 %v2505, 1.0
    %v2507 = vrcp.pop %v2506
    %v2508 = vmul.f32 1.0, %v2507
    %v2509 = vtanh.pop %v2478
    %v2510 = vmul.f32 %v2508, %v2314
    %2512 = vrot.lane.b32.xlu0 %v2509, 64
    %v2513 = vpop.permute.xlu0 %2512
    %v2515 = vmul.f32 %v2508, %v2513
    %2517 = vrot.lane.b32.xlu0 %v2515, 32
    %v2518 = vpop.permute.xlu0 %2517
    %v2520 = vadd.f32 %v2510, %v2518
    %v2521 = vtanh.pop %v2520
    %2523 = vrot.lane.b32.xlu0 %v2521, 64
    %v2524 = vpop.permute.xlu0 %2523
    %v2526 = vmul.f32 %v2508, %v2524
    %2528 = vrot.lane.b32.xlu0 %v2502, 32
    %v2529 = vpop.permute.xlu0 %2528
    %2531 = vst.msk [vmem:[#allocation4 + $0x2] sm:$0x1] %vm342, %v2529
    %2533 = vrot.lane.b32.xlu0 %v2526, 32
    %v2534 = vpop.permute.xlu0 %2533
    %2536 = vst.msk [vmem:[#allocation5 + $0x5] sm:$0x1] %vm342, %v2534
    %v2537 = vld [vmem:[#allocation2 + $0x3] sm:$0x1]
    %v2538 = vsel %vm66, %v2529, 0
    %2540 = vmatprep.subr.mxu0 0.0
    %2541 = vmatpush1.msra.mxu0 %v1803
    %2542 = vmatprep.subr.mxu0 0.0
    %2543 = vmatpush1.msra.mxu0 %v1804
    %2544 = vmatprep.subr.mxu0 0.0
    %2545 = vmatpush1.msra.mxu0 %v1805
    %2546 = vmatprep.subr.mxu0 0.0
    %2547 = vmatpush1.msra.mxu0 %v1806
    %2548 = vmatprep.subr.mxu0 0.0
    %2549 = vmatpush1.msra.mxu0 0.0
    %2550 = vmatprep.subr.mxu0 0.0
    %2551 = vmatpush1.msra.mxu0 0.0
    %2552 = vmatprep.subr.mxu0 0.0
    %2553 = vmatpush1.msra.mxu0 0.0
    %2554 = vmatprep.subr.mxu0 0.0
    %2555 = vmatpush1.msra.mxu0 0.0
    %2556 = vmatprep.subr.mxu0 0.0
    %2557 = vmatpush1.msra.mxu0 0.0
    %2558 = vmatprep.subr.mxu0 0.0
    %2559 = vmatpush1.msra.mxu0 0.0
    %2560 = vmatprep.subr.mxu0 0.0
    %2561 = vmatpush1.msra.mxu0 0.0
    %2562 = vmatprep.subr.mxu0 0.0
    %2563 = vmatpush1.msra.mxu0 0.0
    %2564 = vmatprep.subr.mxu0 0.0
    %2565 = vmatpush1.msra.mxu0 0.0
    %2566 = vmatprep.subr.mxu0 0.0
    %2567 = vmatpush1.msra.mxu0 0.0
    %2568 = vmatprep.subr.mxu0 0.0
    %2569 = vmatpush1.msra.mxu0 0.0
    %2570 = vmatprep.subr.mxu0 0.0
    %2571 = vmatpush1.msra.mxu0 0.0
    %2572 = vmatprep.subr.mxu0 0.0
    %2573 = vmatpush1.msra.mxu0 0.0
    %2574 = vmatprep.subr.mxu0 0.0
    %2575 = vmatpush1.msra.mxu0 0.0
    %2576 = vmatprep.subr.mxu0 0.0
    %2577 = vmatpush1.msra.mxu0 0.0
    %2578 = vmatprep.subr.mxu0 0.0
    %2579 = vmatpush1.msra.mxu0 0.0
    %2580 = vmatprep.subr.mxu0 0.0
    %2581 = vmatpush1.msra.mxu0 0.0
    %2582 = vmatprep.subr.mxu0 0.0
    %2583 = vmatpush1.msra.mxu0 0.0
    %2584 = vmatprep.subr.mxu0 0.0
    %2585 = vmatpush1.msra.mxu0 0.0
    %2586 = vmatprep.subr.mxu0 0.0
    %2587 = vmatpush1.msra.mxu0 0.0
    %2588 = vmatprep.subr.mxu0 0.0
    %2589 = vmatpush1.msra.mxu0 0.0
    %2590 = vmatprep.subr.mxu0 0.0
    %2591 = vmatpush1.msra.mxu0 0.0
    %2592 = vmatprep.subr.mxu0 0.0
    %2593 = vmatpush1.msra.mxu0 0.0
    %2594 = vmatprep.subr.mxu0 0.0
    %2595 = vmatpush1.msra.mxu0 0.0
    %2596 = vmatprep.subr.mxu0 0.0
    %2597 = vmatpush1.msra.mxu0 0.0
    %2598 = vmatprep.subr.mxu0 0.0
    %2599 = vmatpush1.msra.mxu0 0.0
    %2600 = vmatprep.subr.mxu0 0.0
    %2601 = vmatpush1.msra.mxu0 0.0
    %2602 = vmatprep.subr.mxu0 0.0
    %2603 = vmatpush1.msra.mxu0 0.0
    %2604 = vmatprep.mubr.f32.mxu0 0.0
    %2605 = vmatmul.mubr.f32.gmra.mrb[0].mxu0 %v2538
    %v2606 = vpop.f32.mrb[0].mxu0
    %v2607 = vadd.f32 0.0, %v2606
    %v2608 = vpop.f32.mrb[0].mxu0
    %2609 = vdwg.mxu0
    %v2610 = vadd.f32 %v2537, %v2607
    %v2611 = vld [vmem:[#allocation3 + $0x4] sm:$0x1]
    %v2612 = vsel %vm66, %v2534, 0
    %2614 = vmatprep.subr.mxu0 0.0
    %2615 = vmatpush1.msra.mxu0 %v1807
    %2616 = vmatprep.subr.mxu0 0.0
    %2617 = vmatpush1.msra.mxu0 %v1808
    %2618 = vmatprep.subr.mxu0 0.0
    %2619 = vmatpush1.msra.mxu0 %v1809
    %2620 = vmatprep.subr.mxu0 0.0
    %2621 = vmatpush1.msra.mxu0 %v1810
    %2622 = vmatprep.subr.mxu0 0.0
    %2623 = vmatpush1.msra.mxu0 0.0
    %2624 = vmatprep.subr.mxu0 0.0
    %2625 = vmatpush1.msra.mxu0 0.0
    %2626 = vmatprep.subr.mxu0 0.0
    %2627 = vmatpush1.msra.mxu0 0.0
    %2628 = vmatprep.subr.mxu0 0.0
    %2629 = vmatpush1.msra.mxu0 0.0
    %2630 = vmatprep.subr.mxu0 0.0
    %2631 = vmatpush1.msra.mxu0 0.0
    %2632 = vmatprep.subr.mxu0 0.0
    %2633 = vmatpush1.msra.mxu0 0.0
    %2634 = vmatprep.subr.mxu0 0.0
    %2635 = vmatpush1.msra.mxu0 0.0
    %2636 = vmatprep.subr.mxu0 0.0
    %2637 = vmatpush1.msra.mxu0 0.0
    %2638 = vmatprep.subr.mxu0 0.0
    %2639 = vmatpush1.msra.mxu0 0.0
    %2640 = vmatprep.subr.mxu0 0.0
    %2641 = vmatpush1.msra.mxu0 0.0
    %2642 = vmatprep.subr.mxu0 0.0
    %2643 = vmatpush1.msra.mxu0 0.0
    %2644 = vmatprep.subr.mxu0 0.0
    %2645 = vmatpush1.msra.mxu0 0.0
    %2646 = vmatprep.subr.mxu0 0.0
    %2647 = vmatpush1.msra.mxu0 0.0
    %2648 = vmatprep.subr.mxu0 0.0
    %2649 = vmatpush1.msra.mxu0 0.0
    %2650 = vmatprep.subr.mxu0 0.0
    %2651 = vmatpush1.msra.mxu0 0.0
    %2652 = vmatprep.subr.mxu0 0.0
    %2653 = vmatpush1.msra.mxu0 0.0
    %2654 = vmatprep.subr.mxu0 0.0
    %2655 = vmatpush1.msra.mxu0 0.0
    %2656 = vmatprep.subr.mxu0 0.0
    %2657 = vmatpush1.msra.mxu0 0.0
    %2658 = vmatprep.subr.mxu0 0.0
    %2659 = vmatpush1.msra.mxu0 0.0
    %2660 = vmatprep.subr.mxu0 0.0
    %2661 = vmatpush1.msra.mxu0 0.0
    %2662 = vmatprep.subr.mxu0 0.0
    %2663 = vmatpush1.msra.mxu0 0.0
    %2664 = vmatprep.subr.mxu0 0.0
    %2665 = vmatpush1.msra.mxu0 0.0
    %2666 = vmatprep.subr.mxu0 0.0
    %2667 = vmatpush1.msra.mxu0 0.0
    %2668 = vmatprep.subr.mxu0 0.0
    %2669 = vmatpush1.msra.mxu0 0.0
    %2670 = vmatprep.subr.mxu0 0.0
    %2671 = vmatpush1.msra.mxu0 0.0
    %2672 = vmatprep.subr.mxu0 0.0
    %2673 = vmatpush1.msra.mxu0 0.0
    %2674 = vmatprep.subr.mxu0 0.0
    %2675 = vmatpush1.msra.mxu0 0.0
    %2676 = vmatprep.subr.mxu0 0.0
    %2677 = vmatpush1.msra.mxu0 0.0
    %2678 = vmatprep.mubr.f32.mxu0 0.0
    %2679 = vmatmul.mubr.f32.gmra.mrb[0].mxu0 %v2612
    %v2680 = vpop.f32.mrb[0].mxu0
    %v2681 = vadd.f32 0.0, %v2680
    %v2682 = vpop.f32.mrb[0].mxu0
    %2683 = vdwg.mxu0
    %v2684 = vadd.f32 %v2611, %v2681
    %v2685 = vxor.u32 %v2610, 2147483648
    %v2686 = vmul.f32 %v2685, 1.442695
    %v2687 = vpow.pop %v2686
    %v2688 = vadd.f32 %v2687, 1.0
    %v2689 = vrcp.pop %v2688
    %v2690 = vmul.f32 1.0, %v2689
    %v2691 = vtanh.pop %v2610
    %v2692 = vmul.f32 %v2690, %v2496
    %2694 = vrot.lane.b32.xlu0 %v2691, 64
    %v2695 = vpop.permute.xlu0 %2694
    %v2697 = vmul.f32 %v2690, %v2695
    %2699 = vrot.lane.b32.xlu0 %v2697, 32
    %v2700 = vpop.permute.xlu0 %2699
    %v2702 = vadd.f32 %v2692, %v2700
    %v2703 = vtanh.pop %v2702
    %2705 = vrot.lane.b32.xlu0 %v2703, 64
    %v2706 = vpop.permute.xlu0 %2705
    %v2708 = vmul.f32 %v2690, %v2706
    %v2709 = vxor.u32 %v2684, 2147483648
    %v2710 = vmul.f32 %v2709, 1.442695
    %v2711 = vpow.pop %v2710
    %v2712 = vadd.f32 %v2711, 1.0
    %v2713 = vrcp.pop %v2712
    %v2714 = vmul.f32 1.0, %v2713
    %v2715 = vtanh.pop %v2684
    %v2716 = vmul.f32 %v2714, %v2520
    %2718 = vrot.lane.b32.xlu0 %v2715, 64
    %v2719 = vpop.permute.xlu0 %2718
    %v2721 = vmul.f32 %v2714, %v2719
    %2723 = vrot.lane.b32.xlu0 %v2721, 32
    %v2724 = vpop.permute.xlu0 %2723
    %v2726 = vadd.f32 %v2716, %v2724
    %v2727 = vtanh.pop %v2726
    %2729 = vrot.lane.b32.xlu0 %v2727, 64
    %v2730 = vpop.permute.xlu0 %2729
    %v2732 = vmul.f32 %v2714, %v2730
    %2734 = vrot.lane.b32.xlu0 %v2708, 32
    %v2735 = vpop.permute.xlu0 %2734
    %2737 = vst.msk [vmem:[#allocation4 + $0x3] sm:$0x1] %vm342, %v2735
    %2739 = vrot.lane.b32.xlu0 %v2732, 32
    %v2740 = vpop.permute.xlu0 %2739
    %2742 = vst.msk [vmem:[#allocation5 + $0x4] sm:$0x1] %vm342, %v2740
    %v2743 = vld [vmem:[#allocation2 + $0x4] sm:$0x1]
    %v2744 = vsel %vm66, %v2735, 0
    %2746 = vmatprep.subr.mxu0 0.0
    %2747 = vmatpush1.msra.mxu0 %v1803
    %2748 = vmatprep.subr.mxu0 0.0
    %2749 = vmatpush1.msra.mxu0 %v1804
    %2750 = vmatprep.subr.mxu0 0.0
    %2751 = vmatpush1.msra.mxu0 %v1805
    %2752 = vmatprep.subr.mxu0 0.0
    %2753 = vmatpush1.msra.mxu0 %v1806
    %2754 = vmatprep.subr.mxu0 0.0
    %2755 = vmatpush1.msra.mxu0 0.0
    %2756 = vmatprep.subr.mxu0 0.0
    %2757 = vmatpush1.msra.mxu0 0.0
    %2758 = vmatprep.subr.mxu0 0.0
    %2759 = vmatpush1.msra.mxu0 0.0
    %2760 = vmatprep.subr.mxu0 0.0
    %2761 = vmatpush1.msra.mxu0 0.0
    %2762 = vmatprep.subr.mxu0 0.0
    %2763 = vmatpush1.msra.mxu0 0.0
    %2764 = vmatprep.subr.mxu0 0.0
    %2765 = vmatpush1.msra.mxu0 0.0
    %2766 = vmatprep.subr.mxu0 0.0
    %2767 = vmatpush1.msra.mxu0 0.0
    %2768 = vmatprep.subr.mxu0 0.0
    %2769 = vmatpush1.msra.mxu0 0.0
    %2770 = vmatprep.subr.mxu0 0.0
    %2771 = vmatpush1.msra.mxu0 0.0
    %2772 = vmatprep.subr.mxu0 0.0
    %2773 = vmatpush1.msra.mxu0 0.0
    %2774 = vmatprep.subr.mxu0 0.0
    %2775 = vmatpush1.msra.mxu0 0.0
    %2776 = vmatprep.subr.mxu0 0.0
    %2777 = vmatpush1.msra.mxu0 0.0
    %2778 = vmatprep.subr.mxu0 0.0
    %2779 = vmatpush1.msra.mxu0 0.0
    %2780 = vmatprep.subr.mxu0 0.0
    %2781 = vmatpush1.msra.mxu0 0.0
    %2782 = vmatprep.subr.mxu0 0.0
    %2783 = vmatpush1.msra.mxu0 0.0
    %2784 = vmatprep.subr.mxu0 0.0
    %2785 = vmatpush1.msra.mxu0 0.0
    %2786 = vmatprep.subr.mxu0 0.0
    %2787 = vmatpush1.msra.mxu0 0.0
    %2788 = vmatprep.subr.mxu0 0.0
    %2789 = vmatpush1.msra.mxu0 0.0
    %2790 = vmatprep.subr.mxu0 0.0
    %2791 = vmatpush1.msra.mxu0 0.0
    %2792 = vmatprep.subr.mxu0 0.0
    %2793 = vmatpush1.msra.mxu0 0.0
    %2794 = vmatprep.subr.mxu0 0.0
    %2795 = vmatpush1.msra.mxu0 0.0
    %2796 = vmatprep.subr.mxu0 0.0
    %2797 = vmatpush1.msra.mxu0 0.0
    %2798 = vmatprep.subr.mxu0 0.0
    %2799 = vmatpush1.msra.mxu0 0.0
    %2800 = vmatprep.subr.mxu0 0.0
    %2801 = vmatpush1.msra.mxu0 0.0
    %2802 = vmatprep.subr.mxu0 0.0
    %2803 = vmatpush1.msra.mxu0 0.0
    %2804 = vmatprep.subr.mxu0 0.0
    %2805 = vmatpush1.msra.mxu0 0.0
    %2806 = vmatprep.subr.mxu0 0.0
    %2807 = vmatpush1.msra.mxu0 0.0
    %2808 = vmatprep.subr.mxu0 0.0
    %2809 = vmatpush1.msra.mxu0 0.0
    %2810 = vmatprep.mubr.f32.mxu0 0.0
    %2811 = vmatmul.mubr.f32.gmra.mrb[0].mxu0 %v2744
    %v2812 = vpop.f32.mrb[0].mxu0
    %v2813 = vadd.f32 0.0, %v2812
    %v2814 = vpop.f32.mrb[0].mxu0
    %2815 = vdwg.mxu0
    %v2816 = vadd.f32 %v2743, %v2813
    %v2817 = vld [vmem:[#allocation3 + $0x3] sm:$0x1]
    %v2818 = vsel %vm66, %v2740, 0
    %2820 = vmatprep.subr.mxu0 0.0
    %2821 = vmatpush1.msra.mxu0 %v1807
    %2822 = vmatprep.subr.mxu0 0.0
    %2823 = vmatpush1.msra.mxu0 %v1808
    %2824 = vmatprep.subr.mxu0 0.0
    %2825 = vmatpush1.msra.mxu0 %v1809
    %2826 = vmatprep.subr.mxu0 0.0
    %2827 = vmatpush1.msra.mxu0 %v1810
    %2828 = vmatprep.subr.mxu0 0.0
    %2829 = vmatpush1.msra.mxu0 0.0
    %2830 = vmatprep.subr.mxu0 0.0
    %2831 = vmatpush1.msra.mxu0 0.0
    %2832 = vmatprep.subr.mxu0 0.0
    %2833 = vmatpush1.msra.mxu0 0.0
    %2834 = vmatprep.subr.mxu0 0.0
    %2835 = vmatpush1.msra.mxu0 0.0
    %2836 = vmatprep.subr.mxu0 0.0
    %2837 = vmatpush1.msra.mxu0 0.0
    %2838 = vmatprep.subr.mxu0 0.0
    %2839 = vmatpush1.msra.mxu0 0.0
    %2840 = vmatprep.subr.mxu0 0.0
    %2841 = vmatpush1.msra.mxu0 0.0
    %2842 = vmatprep.subr.mxu0 0.0
    %2843 = vmatpush1.msra.mxu0 0.0
    %2844 = vmatprep.subr.mxu0 0.0
    %2845 = vmatpush1.msra.mxu0 0.0
    %2846 = vmatprep.subr.mxu0 0.0
    %2847 = vmatpush1.msra.mxu0 0.0
    %2848 = vmatprep.subr.mxu0 0.0
    %2849 = vmatpush1.msra.mxu0 0.0
    %2850 = vmatprep.subr.mxu0 0.0
    %2851 = vmatpush1.msra.mxu0 0.0
    %2852 = vmatprep.subr.mxu0 0.0
    %2853 = vmatpush1.msra.mxu0 0.0
    %2854 = vmatprep.subr.mxu0 0.0
    %2855 = vmatpush1.msra.mxu0 0.0
    %2856 = vmatprep.subr.mxu0 0.0
    %2857 = vmatpush1.msra.mxu0 0.0
    %2858 = vmatprep.subr.mxu0 0.0
    %2859 = vmatpush1.msra.mxu0 0.0
    %2860 = vmatprep.subr.mxu0 0.0
    %2861 = vmatpush1.msra.mxu0 0.0
    %2862 = vmatprep.subr.mxu0 0.0
    %2863 = vmatpush1.msra.mxu0 0.0
    %2864 = vmatprep.subr.mxu0 0.0
    %2865 = vmatpush1.msra.mxu0 0.0
    %2866 = vmatprep.subr.mxu0 0.0
    %2867 = vmatpush1.msra.mxu0 0.0
    %2868 = vmatprep.subr.mxu0 0.0
    %2869 = vmatpush1.msra.mxu0 0.0
    %2870 = vmatprep.subr.mxu0 0.0
    %2871 = vmatpush1.msra.mxu0 0.0
    %2872 = vmatprep.subr.mxu0 0.0
    %2873 = vmatpush1.msra.mxu0 0.0
    %2874 = vmatprep.subr.mxu0 0.0
    %2875 = vmatpush1.msra.mxu0 0.0
    %2876 = vmatprep.subr.mxu0 0.0
    %2877 = vmatpush1.msra.mxu0 0.0
    %2878 = vmatprep.subr.mxu0 0.0
    %2879 = vmatpush1.msra.mxu0 0.0
    %2880 = vmatprep.subr.mxu0 0.0
    %2881 = vmatpush1.msra.mxu0 0.0
    %2882 = vmatprep.subr.mxu0 0.0
    %2883 = vmatpush1.msra.mxu0 0.0
    %2884 = vmatprep.mubr.f32.mxu0 0.0
    %2885 = vmatmul.mubr.f32.gmra.mrb[0].mxu0 %v2818
    %v2886 = vpop.f32.mrb[0].mxu0
    %v2887 = vadd.f32 0.0, %v2886
    %v2888 = vpop.f32.mrb[0].mxu0
    %2889 = vdwg.mxu0
    %v2890 = vadd.f32 %v2817, %v2887
    %v2891 = vxor.u32 %v2816, 2147483648
    %v2892 = vmul.f32 %v2891, 1.442695
    %v2893 = vpow.pop %v2892
    %v2894 = vadd.f32 %v2893, 1.0
    %v2895 = vrcp.pop %v2894
    %v2896 = vmul.f32 1.0, %v2895
    %v2897 = vtanh.pop %v2816
    %v2898 = vmul.f32 %v2896, %v2702
    %2900 = vrot.lane.b32.xlu0 %v2897, 64
    %v2901 = vpop.permute.xlu0 %2900
    %v2903 = vmul.f32 %v2896, %v2901
    %2905 = vrot.lane.b32.xlu0 %v2903, 32
    %v2906 = vpop.permute.xlu0 %2905
    %v2908 = vadd.f32 %v2898, %v2906
    %v2909 = vtanh.pop %v2908
    %2911 = vrot.lane.b32.xlu0 %v2909, 64
    %v2912 = vpop.permute.xlu0 %2911
    %v2914 = vmul.f32 %v2896, %v2912
    %v2915 = vxor.u32 %v2890, 2147483648
    %v2916 = vmul.f32 %v2915, 1.442695
    %v2917 = vpow.pop %v2916
    %v2918 = vadd.f32 %v2917, 1.0
    %v2919 = vrcp.pop %v2918
    %v2920 = vmul.f32 1.0, %v2919
    %v2921 = vtanh.pop %v2890
    %v2922 = vmul.f32 %v2920, %v2726
    %2924 = vrot.lane.b32.xlu0 %v2921, 64
    %v2925 = vpop.permute.xlu0 %2924
    %v2927 = vmul.f32 %v2920, %v2925
    %2929 = vrot.lane.b32.xlu0 %v2927, 32
    %v2930 = vpop.permute.xlu0 %2929
    %v2932 = vadd.f32 %v2922, %v2930
    %v2933 = vtanh.pop %v2932
    %2935 = vrot.lane.b32.xlu0 %v2933, 64
    %v2936 = vpop.permute.xlu0 %2935
    %v2938 = vmul.f32 %v2920, %v2936
    %2940 = vrot.lane.b32.xlu0 %v2914, 32
    %v2941 = vpop.permute.xlu0 %2940
    %2943 = vst.msk [vmem:[#allocation4 + $0x4] sm:$0x1] %vm342, %v2941
    %2945 = vrot.lane.b32.xlu0 %v2938, 32
    %v2946 = vpop.permute.xlu0 %2945
    %2948 = vst.msk [vmem:[#allocation5 + $0x3] sm:$0x1] %vm342, %v2946
    %v2949 = vld [vmem:[#allocation2 + $0x5] sm:$0x1]
    %v2950 = vsel %vm66, %v2941, 0
    %2952 = vmatprep.subr.mxu0 0.0
    %2953 = vmatpush1.msra.mxu0 %v1803
    %2954 = vmatprep.subr.mxu0 0.0
    %2955 = vmatpush1.msra.mxu0 %v1804
    %2956 = vmatprep.subr.mxu0 0.0
    %2957 = vmatpush1.msra.mxu0 %v1805
    %2958 = vmatprep.subr.mxu0 0.0
    %2959 = vmatpush1.msra.mxu0 %v1806
    %2960 = vmatprep.subr.mxu0 0.0
    %2961 = vmatpush1.msra.mxu0 0.0
    %2962 = vmatprep.subr.mxu0 0.0
    %2963 = vmatpush1.msra.mxu0 0.0
    %2964 = vmatprep.subr.mxu0 0.0
    %2965 = vmatpush1.msra.mxu0 0.0
    %2966 = vmatprep.subr.mxu0 0.0
    %2967 = vmatpush1.msra.mxu0 0.0
    %2968 = vmatprep.subr.mxu0 0.0
    %2969 = vmatpush1.msra.mxu0 0.0
    %2970 = vmatprep.subr.mxu0 0.0
    %2971 = vmatpush1.msra.mxu0 0.0
    %2972 = vmatprep.subr.mxu0 0.0
    %2973 = vmatpush1.msra.mxu0 0.0
    %2974 = vmatprep.subr.mxu0 0.0
    %2975 = vmatpush1.msra.mxu0 0.0
    %2976 = vmatprep.subr.mxu0 0.0
    %2977 = vmatpush1.msra.mxu0 0.0
    %2978 = vmatprep.subr.mxu0 0.0
    %2979 = vmatpush1.msra.mxu0 0.0
    %2980 = vmatprep.subr.mxu0 0.0
    %2981 = vmatpush1.msra.mxu0 0.0
    %2982 = vmatprep.subr.mxu0 0.0
    %2983 = vmatpush1.msra.mxu0 0.0
    %2984 = vmatprep.subr.mxu0 0.0
    %2985 = vmatpush1.msra.mxu0 0.0
    %2986 = vmatprep.subr.mxu0 0.0
    %2987 = vmatpush1.msra.mxu0 0.0
    %2988 = vmatprep.subr.mxu0 0.0
    %2989 = vmatpush1.msra.mxu0 0.0
    %2990 = vmatprep.subr.mxu0 0.0
    %2991 = vmatpush1.msra.mxu0 0.0
    %2992 = vmatprep.subr.mxu0 0.0
    %2993 = vmatpush1.msra.mxu0 0.0
    %2994 = vmatprep.subr.mxu0 0.0
    %2995 = vmatpush1.msra.mxu0 0.0
    %2996 = vmatprep.subr.mxu0 0.0
    %2997 = vmatpush1.msra.mxu0 0.0
    %2998 = vmatprep.subr.mxu0 0.0
    %2999 = vmatpush1.msra.mxu0 0.0
    %3000 = vmatprep.subr.mxu0 0.0
    %3001 = vmatpush1.msra.mxu0 0.0
    %3002 = vmatprep.subr.mxu0 0.0
    %3003 = vmatpush1.msra.mxu0 0.0
    %3004 = vmatprep.subr.mxu0 0.0
    %3005 = vmatpush1.msra.mxu0 0.0
    %3006 = vmatprep.subr.mxu0 0.0
    %3007 = vmatpush1.msra.mxu0 0.0
    %3008 = vmatprep.subr.mxu0 0.0
    %3009 = vmatpush1.msra.mxu0 0.0
    %3010 = vmatprep.subr.mxu0 0.0
    %3011 = vmatpush1.msra.mxu0 0.0
    %3012 = vmatprep.subr.mxu0 0.0
    %3013 = vmatpush1.msra.mxu0 0.0
    %3014 = vmatprep.subr.mxu0 0.0
    %3015 = vmatpush1.msra.mxu0 0.0
    %3016 = vmatprep.mubr.f32.mxu0 0.0
    %3017 = vmatmul.mubr.f32.gmra.mrb[0].mxu0 %v2950
    %v3018 = vpop.f32.mrb[0].mxu0
    %v3019 = vadd.f32 0.0, %v3018
    %v3020 = vpop.f32.mrb[0].mxu0
    %3021 = vdwg.mxu0
    %v3022 = vadd.f32 %v2949, %v3019
    %v3023 = vld [vmem:[#allocation3 + $0x2] sm:$0x1]
    %v3024 = vsel %vm66, %v2946, 0
    %3026 = vmatprep.subr.mxu0 0.0
    %3027 = vmatpush1.msra.mxu0 %v1807
    %3028 = vmatprep.subr.mxu0 0.0
    %3029 = vmatpush1.msra.mxu0 %v1808
    %3030 = vmatprep.subr.mxu0 0.0
    %3031 = vmatpush1.msra.mxu0 %v1809
    %3032 = vmatprep.subr.mxu0 0.0
    %3033 = vmatpush1.msra.mxu0 %v1810
    %3034 = vmatprep.subr.mxu0 0.0
    %3035 = vmatpush1.msra.mxu0 0.0
    %3036 = vmatprep.subr.mxu0 0.0
    %3037 = vmatpush1.msra.mxu0 0.0
    %3038 = vmatprep.subr.mxu0 0.0
    %3039 = vmatpush1.msra.mxu0 0.0
    %3040 = vmatprep.subr.mxu0 0.0
    %3041 = vmatpush1.msra.mxu0 0.0
    %3042 = vmatprep.subr.mxu0 0.0
    %3043 = vmatpush1.msra.mxu0 0.0
    %3044 = vmatprep.subr.mxu0 0.0
    %3045 = vmatpush1.msra.mxu0 0.0
    %3046 = vmatprep.subr.mxu0 0.0
    %3047 = vmatpush1.msra.mxu0 0.0
    %3048 = vmatprep.subr.mxu0 0.0
    %3049 = vmatpush1.msra.mxu0 0.0
    %3050 = vmatprep.subr.mxu0 0.0
    %3051 = vmatpush1.msra.mxu0 0.0
    %3052 = vmatprep.subr.mxu0 0.0
    %3053 = vmatpush1.msra.mxu0 0.0
    %3054 = vmatprep.subr.mxu0 0.0
    %3055 = vmatpush1.msra.mxu0 0.0
    %3056 = vmatprep.subr.mxu0 0.0
    %3057 = vmatpush1.msra.mxu0 0.0
    %3058 = vmatprep.subr.mxu0 0.0
    %3059 = vmatpush1.msra.mxu0 0.0
    %3060 = vmatprep.subr.mxu0 0.0
    %3061 = vmatpush1.msra.mxu0 0.0
    %3062 = vmatprep.subr.mxu0 0.0
    %3063 = vmatpush1.msra.mxu0 0.0
    %3064 = vmatprep.subr.mxu0 0.0
    %3065 = vmatpush1.msra.mxu0 0.0
    %3066 = vmatprep.subr.mxu0 0.0
    %3067 = vmatpush1.msra.mxu0 0.0
    %3068 = vmatprep.subr.mxu0 0.0
    %3069 = vmatpush1.msra.mxu0 0.0
    %3070 = vmatprep.subr.mxu0 0.0
    %3071 = vmatpush1.msra.mxu0 0.0
    %3072 = vmatprep.subr.mxu0 0.0
    %3073 = vmatpush1.msra.mxu0 0.0
    %3074 = vmatprep.subr.mxu0 0.0
    %3075 = vmatpush1.msra.mxu0 0.0
    %3076 = vmatprep.subr.mxu0 0.0
    %3077 = vmatpush1.msra.mxu0 0.0
    %3078 = vmatprep.subr.mxu0 0.0
    %3079 = vmatpush1.msra.mxu0 0.0
    %3080 = vmatprep.subr.mxu0 0.0
    %3081 = vmatpush1.msra.mxu0 0.0
    %3082 = vmatprep.subr.mxu0 0.0
    %3083 = vmatpush1.msra.mxu0 0.0
    %3084 = vmatprep.subr.mxu0 0.0
    %3085 = vmatpush1.msra.mxu0 0.0
    %3086 = vmatprep.subr.mxu0 0.0
    %3087 = vmatpush1.msra.mxu0 0.0
    %3088 = vmatprep.subr.mxu0 0.0
    %3089 = vmatpush1.msra.mxu0 0.0
    %3090 = vmatprep.mubr.f32.mxu0 0.0
    %3091 = vmatmul.mubr.f32.gmra.mrb[0].mxu0 %v3024
    %v3092 = vpop.f32.mrb[0].mxu0
    %v3093 = vadd.f32 0.0, %v3092
    %v3094 = vpop.f32.mrb[0].mxu0
    %3095 = vdwg.mxu0
    %v3096 = vadd.f32 %v3023, %v3093
    %v3097 = vxor.u32 %v3022, 2147483648
    %v3098 = vmul.f32 %v3097, 1.442695
    %v3099 = vpow.pop %v3098
    %v3100 = vadd.f32 %v3099, 1.0
    %v3101 = vrcp.pop %v3100
    %v3102 = vmul.f32 1.0, %v3101
    %v3103 = vtanh.pop %v3022
    %v3104 = vmul.f32 %v3102, %v2908
    %3106 = vrot.lane.b32.xlu0 %v3103, 64
    %v3107 = vpop.permute.xlu0 %3106
    %v3109 = vmul.f32 %v3102, %v3107
    %3111 = vrot.lane.b32.xlu0 %v3109, 32
    %v3112 = vpop.permute.xlu0 %3111
    %v3114 = vadd.f32 %v3104, %v3112
    %v3115 = vtanh.pop %v3114
    %3117 = vrot.lane.b32.xlu0 %v3115, 64
    %v3118 = vpop.permute.xlu0 %3117
    %v3120 = vmul.f32 %v3102, %v3118
    %v3121 = vxor.u32 %v3096, 2147483648
    %v3122 = vmul.f32 %v3121, 1.442695
    %v3123 = vpow.pop %v3122
    %v3124 = vadd.f32 %v3123, 1.0
    %v3125 = vrcp.pop %v3124
    %v3126 = vmul.f32 1.0, %v3125
    %v3127 = vtanh.pop %v3096
    %v3128 = vmul.f32 %v3126, %v2932
    %3130 = vrot.lane.b32.xlu0 %v3127, 64
    %v3131 = vpop.permute.xlu0 %3130
    %v3133 = vmul.f32 %v3126, %v3131
    %3135 = vrot.lane.b32.xlu0 %v3133, 32
    %v3136 = vpop.permute.xlu0 %3135
    %v3138 = vadd.f32 %v3128, %v3136
    %v3139 = vtanh.pop %v3138
    %3141 = vrot.lane.b32.xlu0 %v3139, 64
    %v3142 = vpop.permute.xlu0 %3141
    %v3144 = vmul.f32 %v3126, %v3142
    %3146 = vrot.lane.b32.xlu0 %v3120, 32
    %v3147 = vpop.permute.xlu0 %3146
    %3149 = vst.msk [vmem:[#allocation4 + $0x5] sm:$0x1] %vm342, %v3147
    %3151 = vrot.lane.b32.xlu0 %v3144, 32
    %v3152 = vpop.permute.xlu0 %3151
    %3154 = vst.msk [vmem:[#allocation5 + $0x2] sm:$0x1] %vm342, %v3152
    %v3155 = vld [vmem:[#allocation2 + $0x6] sm:$0x1]
    %v3156 = vsel %vm66, %v3147, 0
    %3158 = vmatprep.subr.mxu0 0.0
    %3159 = vmatpush1.msra.mxu0 %v1803
    %3160 = vmatprep.subr.mxu0 0.0
    %3161 = vmatpush1.msra.mxu0 %v1804
    %3162 = vmatprep.subr.mxu0 0.0
    %3163 = vmatpush1.msra.mxu0 %v1805
    %3164 = vmatprep.subr.mxu0 0.0
    %3165 = vmatpush1.msra.mxu0 %v1806
    %3166 = vmatprep.subr.mxu0 0.0
    %3167 = vmatpush1.msra.mxu0 0.0
    %3168 = vmatprep.subr.mxu0 0.0
    %3169 = vmatpush1.msra.mxu0 0.0
    %3170 = vmatprep.subr.mxu0 0.0
    %3171 = vmatpush1.msra.mxu0 0.0
    %3172 = vmatprep.subr.mxu0 0.0
    %3173 = vmatpush1.msra.mxu0 0.0
    %3174 = vmatprep.subr.mxu0 0.0
    %3175 = vmatpush1.msra.mxu0 0.0
    %3176 = vmatprep.subr.mxu0 0.0
    %3177 = vmatpush1.msra.mxu0 0.0
    %3178 = vmatprep.subr.mxu0 0.0
    %3179 = vmatpush1.msra.mxu0 0.0
    %3180 = vmatprep.subr.mxu0 0.0
    %3181 = vmatpush1.msra.mxu0 0.0
    %3182 = vmatprep.subr.mxu0 0.0
    %3183 = vmatpush1.msra.mxu0 0.0
    %3184 = vmatprep.subr.mxu0 0.0
    %3185 = vmatpush1.msra.mxu0 0.0
    %3186 = vmatprep.subr.mxu0 0.0
    %3187 = vmatpush1.msra.mxu0 0.0
    %3188 = vmatprep.subr.mxu0 0.0
    %3189 = vmatpush1.msra.mxu0 0.0
    %3190 = vmatprep.subr.mxu0 0.0
    %3191 = vmatpush1.msra.mxu0 0.0
    %3192 = vmatprep.subr.mxu0 0.0
    %3193 = vmatpush1.msra.mxu0 0.0
    %3194 = vmatprep.subr.mxu0 0.0
    %3195 = vmatpush1.msra.mxu0 0.0
    %3196 = vmatprep.subr.mxu0 0.0
    %3197 = vmatpush1.msra.mxu0 0.0
    %3198 = vmatprep.subr.mxu0 0.0
    %3199 = vmatpush1.msra.mxu0 0.0
    %3200 = vmatprep.subr.mxu0 0.0
    %3201 = vmatpush1.msra.mxu0 0.0
    %3202 = vmatprep.subr.mxu0 0.0
    %3203 = vmatpush1.msra.mxu0 0.0
    %3204 = vmatprep.subr.mxu0 0.0
    %3205 = vmatpush1.msra.mxu0 0.0
    %3206 = vmatprep.subr.mxu0 0.0
    %3207 = vmatpush1.msra.mxu0 0.0
    %3208 = vmatprep.subr.mxu0 0.0
    %3209 = vmatpush1.msra.mxu0 0.0
    %3210 = vmatprep.subr.mxu0 0.0
    %3211 = vmatpush1.msra.mxu0 0.0
    %3212 = vmatprep.subr.mxu0 0.0
    %3213 = vmatpush1.msra.mxu0 0.0
    %3214 = vmatprep.subr.mxu0 0.0
    %3215 = vmatpush1.msra.mxu0 0.0
    %3216 = vmatprep.subr.mxu0 0.0
    %3217 = vmatpush1.msra.mxu0 0.0
    %3218 = vmatprep.subr.mxu0 0.0
    %3219 = vmatpush1.msra.mxu0 0.0
    %3220 = vmatprep.subr.mxu0 0.0
    %3221 = vmatpush1.msra.mxu0 0.0
    %3222 = vmatprep.mubr.f32.mxu0 0.0
    %3223 = vmatmul.mubr.f32.gmra.mrb[0].mxu0 %v3156
    %v3224 = vpop.f32.mrb[0].mxu0
    %v3225 = vadd.f32 0.0, %v3224
    %v3226 = vpop.f32.mrb[0].mxu0
    %3227 = vdwg.mxu0
    %v3228 = vadd.f32 %v3155, %v3225
    %v3229 = vld [vmem:[#allocation3 + $0x1] sm:$0x1]
    %v3230 = vsel %vm66, %v3152, 0
    %3232 = vmatprep.subr.mxu0 0.0
    %3233 = vmatpush1.msra.mxu0 %v1807
    %3234 = vmatprep.subr.mxu0 0.0
    %3235 = vmatpush1.msra.mxu0 %v1808
    %3236 = vmatprep.subr.mxu0 0.0
    %3237 = vmatpush1.msra.mxu0 %v1809
    %3238 = vmatprep.subr.mxu0 0.0
    %3239 = vmatpush1.msra.mxu0 %v1810
    %3240 = vmatprep.subr.mxu0 0.0
    %3241 = vmatpush1.msra.mxu0 0.0
    %3242 = vmatprep.subr.mxu0 0.0
    %3243 = vmatpush1.msra.mxu0 0.0
    %3244 = vmatprep.subr.mxu0 0.0
    %3245 = vmatpush1.msra.mxu0 0.0
    %3246 = vmatprep.subr.mxu0 0.0
    %3247 = vmatpush1.msra.mxu0 0.0
    %3248 = vmatprep.subr.mxu0 0.0
    %3249 = vmatpush1.msra.mxu0 0.0
    %3250 = vmatprep.subr.mxu0 0.0
    %3251 = vmatpush1.msra.mxu0 0.0
    %3252 = vmatprep.subr.mxu0 0.0
    %3253 = vmatpush1.msra.mxu0 0.0
    %3254 = vmatprep.subr.mxu0 0.0
    %3255 = vmatpush1.msra.mxu0 0.0
    %3256 = vmatprep.subr.mxu0 0.0
    %3257 = vmatpush1.msra.mxu0 0.0
    %3258 = vmatprep.subr.mxu0 0.0
    %3259 = vmatpush1.msra.mxu0 0.0
    %3260 = vmatprep.subr.mxu0 0.0
    %3261 = vmatpush1.msra.mxu0 0.0
    %3262 = vmatprep.subr.mxu0 0.0
    %3263 = vmatpush1.msra.mxu0 0.0
    %3264 = vmatprep.subr.mxu0 0.0
    %3265 = vmatpush1.msra.mxu0 0.0
    %3266 = vmatprep.subr.mxu0 0.0
    %3267 = vmatpush1.msra.mxu0 0.0
    %3268 = vmatprep.subr.mxu0 0.0
    %3269 = vmatpush1.msra.mxu0 0.0
    %3270 = vmatprep.subr.mxu0 0.0
    %3271 = vmatpush1.msra.mxu0 0.0
    %3272 = vmatprep.subr.mxu0 0.0
    %3273 = vmatpush1.msra.mxu0 0.0
    %3274 = vmatprep.subr.mxu0 0.0
    %3275 = vmatpush1.msra.mxu0 0.0
    %3276 = vmatprep.subr.mxu0 0.0
    %3277 = vmatpush1.msra.mxu0 0.0
    %3278 = vmatprep.subr.mxu0 0.0
    %3279 = vmatpush1.msra.mxu0 0.0
    %3280 = vmatprep.subr.mxu0 0.0
    %3281 = vmatpush1.msra.mxu0 0.0
    %3282 = vmatprep.subr.mxu0 0.0
    %3283 = vmatpush1.msra.mxu0 0.0
    %3284 = vmatprep.subr.mxu0 0.0
    %3285 = vmatpush1.msra.mxu0 0.0
    %3286 = vmatprep.subr.mxu0 0.0
    %3287 = vmatpush1.msra.mxu0 0.0
    %3288 = vmatprep.subr.mxu0 0.0
    %3289 = vmatpush1.msra.mxu0 0.0
    %3290 = vmatprep.subr.mxu0 0.0
    %3291 = vmatpush1.msra.mxu0 0.0
    %3292 = vmatprep.subr.mxu0 0.0
    %3293 = vmatpush1.msra.mxu0 0.0
    %3294 = vmatprep.subr.mxu0 0.0
    %3295 = vmatpush1.msra.mxu0 0.0
    %3296 = vmatprep.mubr.f32.mxu0 0.0
    %3297 = vmatmul.mubr.f32.gmra.mrb[0].mxu0 %v3230
    %v3298 = vpop.f32.mrb[0].mxu0
    %v3299 = vadd.f32 0.0, %v3298
    %v3300 = vpop.f32.mrb[0].mxu0
    %3301 = vdwg.mxu0
    %v3302 = vadd.f32 %v3229, %v3299
    %v3303 = vxor.u32 %v3228, 2147483648
    %v3304 = vmul.f32 %v3303, 1.442695
    %v3305 = vpow.pop %v3304
    %v3306 = vadd.f32 %v3305, 1.0
    %v3307 = vrcp.pop %v3306
    %v3308 = vmul.f32 1.0, %v3307
    %v3309 = vtanh.pop %v3228
    %v3310 = vmul.f32 %v3308, %v3114
    %3312 = vrot.lane.b32.xlu0 %v3309, 64
    %v3313 = vpop.permute.xlu0 %3312
    %v3315 = vmul.f32 %v3308, %v3313
    %3317 = vrot.lane.b32.xlu0 %v3315, 32
    %v3318 = vpop.permute.xlu0 %3317
    %v3320 = vadd.f32 %v3310, %v3318
    %v3321 = vtanh.pop %v3320
    %3323 = vrot.lane.b32.xlu0 %v3321, 64
    %v3324 = vpop.permute.xlu0 %3323
    %v3326 = vmul.f32 %v3308, %v3324
    %v3327 = vxor.u32 %v3302, 2147483648
    %v3328 = vmul.f32 %v3327, 1.442695
    %v3329 = vpow.pop %v3328
    %v3330 = vadd.f32 %v3329, 1.0
    %v3331 = vrcp.pop %v3330
    %v3332 = vmul.f32 1.0, %v3331
    %v3333 = vtanh.pop %v3302
    %v3334 = vmul.f32 %v3332, %v3138
    %3336 = vrot.lane.b32.xlu0 %v3333, 64
    %v3337 = vpop.permute.xlu0 %3336
    %v3339 = vmul.f32 %v3332, %v3337
    %3341 = vrot.lane.b32.xlu0 %v3339, 32
    %v3342 = vpop.permute.xlu0 %3341
    %v3344 = vadd.f32 %v3334, %v3342
    %v3345 = vtanh.pop %v3344
    %3347 = vrot.lane.b32.xlu0 %v3345, 64
    %v3348 = vpop.permute.xlu0 %3347
    %v3350 = vmul.f32 %v3332, %v3348
    %3352 = vrot.lane.b32.xlu0 %v3326, 32
    %v3353 = vpop.permute.xlu0 %3352
    %3355 = vst.msk [vmem:[#allocation4 + $0x6] sm:$0x1] %vm342, %v3353
    %3357 = vrot.lane.b32.xlu0 %v3350, 32
    %v3358 = vpop.permute.xlu0 %3357
    %3360 = vst.msk [vmem:[#allocation5 + $0x1] sm:$0x1] %vm342, %v3358
    %v3361 = vld [vmem:[#allocation2 + $0x7] sm:$0x1]
    %v3362 = vsel %vm66, %v3353, 0
    %3364 = vmatprep.subr.mxu0 0.0
    %3365 = vmatpush1.msra.mxu0 %v1803
    %3366 = vmatprep.subr.mxu0 0.0
    %3367 = vmatpush1.msra.mxu0 %v1804
    %3368 = vmatprep.subr.mxu0 0.0
    %3369 = vmatpush1.msra.mxu0 %v1805
    %3370 = vmatprep.subr.mxu0 0.0
    %3371 = vmatpush1.msra.mxu0 %v1806
    %3372 = vmatprep.subr.mxu0 0.0
    %3373 = vmatpush1.msra.mxu0 0.0
    %3374 = vmatprep.subr.mxu0 0.0
    %3375 = vmatpush1.msra.mxu0 0.0
    %3376 = vmatprep.subr.mxu0 0.0
    %3377 = vmatpush1.msra.mxu0 0.0
    %3378 = vmatprep.subr.mxu0 0.0
    %3379 = vmatpush1.msra.mxu0 0.0
    %3380 = vmatprep.subr.mxu0 0.0
    %3381 = vmatpush1.msra.mxu0 0.0
    %3382 = vmatprep.subr.mxu0 0.0
    %3383 = vmatpush1.msra.mxu0 0.0
    %3384 = vmatprep.subr.mxu0 0.0
    %3385 = vmatpush1.msra.mxu0 0.0
    %3386 = vmatprep.subr.mxu0 0.0
    %3387 = vmatpush1.msra.mxu0 0.0
    %3388 = vmatprep.subr.mxu0 0.0
    %3389 = vmatpush1.msra.mxu0 0.0
    %3390 = vmatprep.subr.mxu0 0.0
    %3391 = vmatpush1.msra.mxu0 0.0
    %3392 = vmatprep.subr.mxu0 0.0
    %3393 = vmatpush1.msra.mxu0 0.0
    %3394 = vmatprep.subr.mxu0 0.0
    %3395 = vmatpush1.msra.mxu0 0.0
    %3396 = vmatprep.subr.mxu0 0.0
    %3397 = vmatpush1.msra.mxu0 0.0
    %3398 = vmatprep.subr.mxu0 0.0
    %3399 = vmatpush1.msra.mxu0 0.0
    %3400 = vmatprep.subr.mxu0 0.0
    %3401 = vmatpush1.msra.mxu0 0.0
    %3402 = vmatprep.subr.mxu0 0.0
    %3403 = vmatpush1.msra.mxu0 0.0
    %3404 = vmatprep.subr.mxu0 0.0
    %3405 = vmatpush1.msra.mxu0 0.0
    %3406 = vmatprep.subr.mxu0 0.0
    %3407 = vmatpush1.msra.mxu0 0.0
    %3408 = vmatprep.subr.mxu0 0.0
    %3409 = vmatpush1.msra.mxu0 0.0
    %3410 = vmatprep.subr.mxu0 0.0
    %3411 = vmatpush1.msra.mxu0 0.0
    %3412 = vmatprep.subr.mxu0 0.0
    %3413 = vmatpush1.msra.mxu0 0.0
    %3414 = vmatprep.subr.mxu0 0.0
    %3415 = vmatpush1.msra.mxu0 0.0
    %3416 = vmatprep.subr.mxu0 0.0
    %3417 = vmatpush1.msra.mxu0 0.0
    %3418 = vmatprep.subr.mxu0 0.0
    %3419 = vmatpush1.msra.mxu0 0.0
    %3420 = vmatprep.subr.mxu0 0.0
    %3421 = vmatpush1.msra.mxu0 0.0
    %3422 = vmatprep.subr.mxu0 0.0
    %3423 = vmatpush1.msra.mxu0 0.0
    %3424 = vmatprep.subr.mxu0 0.0
    %3425 = vmatpush1.msra.mxu0 0.0
    %3426 = vmatprep.subr.mxu0 0.0
    %3427 = vmatpush1.msra.mxu0 0.0
    %3428 = vmatprep.mubr.f32.mxu0 0.0
    %3429 = vmatmul.mubr.f32.gmra.mrb[0].mxu0 %v3362
    %v3430 = vpop.f32.mrb[0].mxu0
    %v3431 = vadd.f32 0.0, %v3430
    %v3432 = vpop.f32.mrb[0].mxu0
    %3433 = vdwg.mxu0
    %v3434 = vadd.f32 %v3361, %v3431
    %v3435 = vld [vmem:[#allocation3] sm:$0x1]
    %v3436 = vsel %vm66, %v3358, 0
    %3438 = vmatprep.subr.mxu0 0.0
    %3439 = vmatpush1.msra.mxu0 %v1807
    %3440 = vmatprep.subr.mxu0 0.0
    %3441 = vmatpush1.msra.mxu0 %v1808
    %3442 = vmatprep.subr.mxu0 0.0
    %3443 = vmatpush1.msra.mxu0 %v1809
    %3444 = vmatprep.subr.mxu0 0.0
    %3445 = vmatpush1.msra.mxu0 %v1810
    %3446 = vmatprep.subr.mxu0 0.0
    %3447 = vmatpush1.msra.mxu0 0.0
    %3448 = vmatprep.subr.mxu0 0.0
    %3449 = vmatpush1.msra.mxu0 0.0
    %3450 = vmatprep.subr.mxu0 0.0
    %3451 = vmatpush1.msra.mxu0 0.0
    %3452 = vmatprep.subr.mxu0 0.0
    %3453 = vmatpush1.msra.mxu0 0.0
    %3454 = vmatprep.subr.mxu0 0.0
    %3455 = vmatpush1.msra.mxu0 0.0
    %3456 = vmatprep.subr.mxu0 0.0
    %3457 = vmatpush1.msra.mxu0 0.0
    %3458 = vmatprep.subr.mxu0 0.0
    %3459 = vmatpush1.msra.mxu0 0.0
    %3460 = vmatprep.subr.mxu0 0.0
    %3461 = vmatpush1.msra.mxu0 0.0
    %3462 = vmatprep.subr.mxu0 0.0
    %3463 = vmatpush1.msra.mxu0 0.0
    %3464 = vmatprep.subr.mxu0 0.0
    %3465 = vmatpush1.msra.mxu0 0.0
    %3466 = vmatprep.subr.mxu0 0.0
    %3467 = vmatpush1.msra.mxu0 0.0
    %3468 = vmatprep.subr.mxu0 0.0
    %3469 = vmatpush1.msra.mxu0 0.0
    %3470 = vmatprep.subr.mxu0 0.0
    %3471 = vmatpush1.msra.mxu0 0.0
    %3472 = vmatprep.subr.mxu0 0.0
    %3473 = vmatpush1.msra.mxu0 0.0
    %3474 = vmatprep.subr.mxu0 0.0
    %3475 = vmatpush1.msra.mxu0 0.0
    %3476 = vmatprep.subr.mxu0 0.0
    %3477 = vmatpush1.msra.mxu0 0.0
    %3478 = vmatprep.subr.mxu0 0.0
    %3479 = vmatpush1.msra.mxu0 0.0
    %3480 = vmatprep.subr.mxu0 0.0
    %3481 = vmatpush1.msra.mxu0 0.0
    %3482 = vmatprep.subr.mxu0 0.0
    %3483 = vmatpush1.msra.mxu0 0.0
    %3484 = vmatprep.subr.mxu0 0.0
    %3485 = vmatpush1.msra.mxu0 0.0
    %3486 = vmatprep.subr.mxu0 0.0
    %3487 = vmatpush1.msra.mxu0 0.0
    %3488 = vmatprep.subr.mxu0 0.0
    %3489 = vmatpush1.msra.mxu0 0.0
    %3490 = vmatprep.subr.mxu0 0.0
    %3491 = vmatpush1.msra.mxu0 0.0
    %3492 = vmatprep.subr.mxu0 0.0
    %3493 = vmatpush1.msra.mxu0 0.0
    %3494 = vmatprep.subr.mxu0 0.0
    %3495 = vmatpush1.msra.mxu0 0.0
    %3496 = vmatprep.subr.mxu0 0.0
    %3497 = vmatpush1.msra.mxu0 0.0
    %3498 = vmatprep.subr.mxu0 0.0
    %3499 = vmatpush1.msra.mxu0 0.0
    %3500 = vmatprep.subr.mxu0 0.0
    %3501 = vmatpush1.msra.mxu0 0.0
    %3502 = vmatprep.mubr.f32.mxu0 0.0
    %3503 = vmatmul.mubr.f32.gmra.mrb[0].mxu0 %v3436
    %v3504 = vpop.f32.mrb[0].mxu0
    %v3505 = vadd.f32 0.0, %v3504
    %v3506 = vpop.f32.mrb[0].mxu0
    %3507 = vdwg.mxu0
    %v3508 = vadd.f32 %v3435, %v3505
    %v3509 = vxor.u32 %v3434, 2147483648
    %v3510 = vmul.f32 %v3509, 1.442695
    %v3511 = vpow.pop %v3510
    %v3512 = vadd.f32 %v3511, 1.0
    %v3513 = vrcp.pop %v3512
    %v3514 = vmul.f32 1.0, %v3513
    %v3515 = vtanh.pop %v3434
    %v3516 = vmul.f32 %v3514, %v3320
    %3518 = vrot.lane.b32.xlu0 %v3515, 64
    %v3519 = vpop.permute.xlu0 %3518
    %v3521 = vmul.f32 %v3514, %v3519
    %3523 = vrot.lane.b32.xlu0 %v3521, 32
    %v3524 = vpop.permute.xlu0 %3523
    %v3526 = vadd.f32 %v3516, %v3524
    %v3527 = vtanh.pop %v3526
    %3529 = vrot.lane.b32.xlu0 %v3527, 64
    %v3530 = vpop.permute.xlu0 %3529
    %v3532 = vmul.f32 %v3514, %v3530
    %v3533 = vxor.u32 %v3508, 2147483648
    %v3534 = vmul.f32 %v3533, 1.442695
    %v3535 = vpow.pop %v3534
    %v3536 = vadd.f32 %v3535, 1.0
    %v3537 = vrcp.pop %v3536
    %v3538 = vmul.f32 1.0, %v3537
    %v3539 = vtanh.pop %v3508
    %v3540 = vmul.f32 %v3538, %v3344
    %3542 = vrot.lane.b32.xlu0 %v3539, 64
    %v3543 = vpop.permute.xlu0 %3542
    %v3545 = vmul.f32 %v3538, %v3543
    %3547 = vrot.lane.b32.xlu0 %v3545, 32
    %v3548 = vpop.permute.xlu0 %3547
    %v3550 = vadd.f32 %v3540, %v3548
    %v3551 = vtanh.pop %v3550
    %3553 = vrot.lane.b32.xlu0 %v3551, 64
    %v3554 = vpop.permute.xlu0 %3553
    %v3556 = vmul.f32 %v3538, %v3554
    %3558 = vrot.lane.b32.xlu0 %v3532, 32
    %v3559 = vpop.permute.xlu0 %3558
    %3561 = vst.msk [vmem:[#allocation4 + $0x7] sm:$0x1] %vm342, %v3559
    %3563 = vrot.lane.b32.xlu0 %v3556, 32
    %v3564 = vpop.permute.xlu0 %3563
    %3566 = vst.msk [vmem:[#allocation5] sm:$0x1] %vm342, %v3564
    %3567 = vst.msk [vmem:[#allocation8 + $0x2] sm:$0x1] %vm342, %v3559
    %3568 = vst.msk [vmem:[#allocation8 + $0x3] sm:$0x1] %vm342, %v3564
    %3570 = vrot.lane.b32.xlu0 %v3526, 96
    %v3571 = vpop.permute.xlu0 %3570
    %3573 = vst.msk [vmem:[#allocation10 + $0x2] sm:$0x1] %vm342, %v3571
    %3575 = vrot.lane.b32.xlu0 %v3550, 96
    %v3576 = vpop.permute.xlu0 %3575
    %3578 = vst.msk [vmem:[#allocation10 + $0x3] sm:$0x1] %vm342, %v3576
    %v3579 = vld [vmem:[#allocation4] sm:$0xff]
    %v3580 = vld [vmem:[#allocation5] sm:$0xff]
    %v3581 = vadd.f32 %v3579, %v3580
    %v3582 = vld [vmem:[%s0] sm:$0xff]
    %v3583 = vadd.f32 %v3581, %v3582
    %3584 = vst.msk [vmem:[#allocation6] sm:$0xff] %vm66, %v3583
    // Predicated region
    $region38: #{bidirectional_lstm_forward.1} parent=1 // pred_check
      _
    $region39: #{bidirectional_lstm_forward.1} parent=1 // pred_check_branch
      %3586 = sbr.rel (0) target = $region41
    $region40: #{bidirectional_lstm_forward.1} parent=1 // pred_region
      %s3588 = ssub.s32 128, 128
      %3589 = vsyncadd [#allocation7], %s3588
      %s3591 = sshll.u32 [#allocation6], 4
      %s3592 = int_to_ptr.vmem [resolvable:$true] %s3591
      %3594 = dma.vmem_to_hbm [thread:$0]  %s3592, 128, %s9, [#allocation7]
    $region41: #{bidirectional_lstm_forward.1} parent=1 // pred_fallthru
      _
    // Predicated region
    $region42: #{bidirectional_lstm_forward.1} parent=1 // pred_check
      _
    $region43: #{bidirectional_lstm_forward.1} parent=1 // pred_check_branch
      %3596 = sbr.rel (0) target = $region45
    $region44: #{bidirectional_lstm_forward.1} parent=1 // pred_region
      %s3598 = ssub.s32 64, 64
      %3599 = vsyncadd [#allocation9], %s3598
      %s3601 = sshll.u32 [#allocation8], 4
      %s3602 = int_to_ptr.vmem [resolvable:$true] %s3601
      %3604 = dma.vmem_to_hbm [thread:$0]  %s3602, 64, %s10, [#allocation9]
    $region45: #{bidirectional_lstm_forward.1} parent=1 // pred_fallthru
      _
    // Predicated region
    $region46: #{bidirectional_lstm_forward.1} parent=1 // pred_check
      _
    $region47: #{bidirectional_lstm_forward.1} parent=1 // pred_check_branch
      %3606 = sbr.rel (0) target = $region49
    $region48: #{bidirectional_lstm_forward.1} parent=1 // pred_region
      %s3608 = ssub.s32 64, 64
      %3609 = vsyncadd [#allocation9], %s3608
      %s3611 = sshll.u32 [#allocation10], 4
      %s3612 = int_to_ptr.vmem [resolvable:$true] %s3611
      %3614 = dma.vmem_to_hbm [thread:$0]  %s3612, 64, %s11, [#allocation9]
    $region49: #{bidirectional_lstm_forward.1} parent=1 // pred_fallthru
      _
    // Predicated region
    $region50: #{bidirectional_lstm_forward.1} parent=1 // pred_check
      _
    $region51: #{bidirectional_lstm_forward.1} parent=1 // pred_check_branch
      %3616 = sbr.rel (0) target = $region53
    $region52: #{bidirectional_lstm_forward.1} parent=1 // pred_region
      %3617 = dma.done [#allocation7], 128
    $region53: #{bidirectional_lstm_forward.1} parent=1 // pred_fallthru
      _
    // Predicated region
    $region54: #{bidirectional_lstm_forward.1} parent=1 // pred_check
      _
    $region55: #{bidirectional_lstm_forward.1} parent=1 // pred_check_branch
      %3619 = sbr.rel (0) target = $region57
    $region56: #{bidirectional_lstm_forward.1} parent=1 // pred_region
      %3620 = dma.done [#allocation9], 64
    $region57: #{bidirectional_lstm_forward.1} parent=1 // pred_fallthru
      _
    // Predicated region
    $region58: #{bidirectional_lstm_forward.1} parent=1 // pred_check
      _
    $region59: #{bidirectional_lstm_forward.1} parent=1 // pred_check_branch
      %3622 = sbr.rel (0) target = $region61
    $region60: #{bidirectional_lstm_forward.1} parent=1 // pred_region
      %3623 = dma.done [#allocation9], 64
    $region61: #{bidirectional_lstm_forward.1} parent=1 // pred_fallthru
      _
    %3624 = vsyncpa [#allocation7], 1
    %3625 = vsyncpa [#allocation9], 1

</llo_original>
